<compile_context>
chip_gen: v7x
topology: tpu7x:2x2x1
jax: 0.10.0
libtpu: 0.0.40
codegen_flags: <defaults>
</compile_context>

<pallas_src>
import math

import jax
import jax.numpy as jnp
import numpy as np
from jax.experimental import pallas as pl
from jax.experimental.pallas import tpu as pltpu

# ---- module config ---------------------------------------------------------
N_AGENTS = 4            # args.n_agents
N_ENTITIES = 8          # ne
ENTITY_DIM = 16         # input_shape (per-entity feature dim)
ATTN_EMBED_DIM = 32     # args.attn_embed_dim
N_HEADS = 2             # args.attn_n_heads
HEAD_DIM = ATTN_EMBED_DIM // N_HEADS
RNN_HIDDEN_DIM = 32     # args.rnn_hidden_dim
BS, TS = 2, 3           # batch, timesteps
BT_TARGET = 512         # (bs*ts) slices per grid step (multiple of 8)


# ---------------------------------------------------------------------------
# Pallas kernel: full forward for a block of Bt (bs*ts) slices.
# ---------------------------------------------------------------------------
def entity_base_kernel(ent_ref, keep_ref, agk_ref,
                       w1_ref, b1_ref, wq_ref, wk_ref, wv_ref,
                       wo_ref, bo_ref, w2_ref, b2_ref, out_ref):
    bt = ent_ref.shape[0]
    scale = 1.0 / math.sqrt(HEAD_DIM)

    # fc1 + ReLU: one (bt, 128) @ (128, 256) block-diagonal GEMM over entities.
    x1 = jnp.dot(ent_ref[...], w1_ref[...],
                 preferred_element_type=jnp.float32) + b1_ref[...]
    x1 = jnp.maximum(x1, 0.0)                                 # (bt, ne*D)

    # q/k/v projections.  Fused weights emit head-major lane layouts directly:
    #   q lane = h*na*hd + a*hd + d,   k/v lane = h*ne*hd + e*hd + d.
    q = jnp.dot(x1[:, :N_AGENTS * ATTN_EMBED_DIM], wq_ref[...],
                preferred_element_type=jnp.float32)           # (bt, 128)
    k = jnp.dot(x1, wk_ref[...], preferred_element_type=jnp.float32)  # (bt, 256)
    v = jnp.dot(x1, wv_ref[...], preferred_element_type=jnp.float32)  # (bt, 256)

    q3 = q.reshape(bt, N_HEADS * N_AGENTS, HEAD_DIM)          # (bt, 8, 16)
    k3 = k.reshape(bt, N_HEADS * N_ENTITIES, HEAD_DIM)        # (bt, 16, 16)
    v3 = v.reshape(bt, N_HEADS * N_ENTITIES, HEAD_DIM)        # (bt, 16, 16)
    keep = keep_ref[...].reshape(
        bt, N_HEADS * N_AGENTS, N_HEADS * N_ENTITIES)         # 1 = may attend

    # Both heads in one batched matmul; cross-head pairs are masked via `keep`.
    logits = jax.lax.dot_general(
        q3, k3, (((2,), (2,)), ((0,), (0,))),
        preferred_element_type=jnp.float32) * scale           # (bt, 8, 16)
    logits = logits + (keep - 1.0) * 1e30                     # masked -> -1e30
    m = jnp.max(logits, axis=-1, keepdims=True)
    p = jnp.exp(logits - m) * keep                            # fully-masked row -> 0
    s = jnp.sum(p, axis=-1, keepdims=True)
    attw = p / jnp.where(s > 0.0, s, 1.0)                     # NaN->0 scrub equivalent
    attn = jax.lax.dot_general(
        attw, v3, (((2,), (1,)), ((0,), (0,))),
        preferred_element_type=jnp.float32)                   # (bt, 8, 16)

    # out_trans (fused weight restores agent-major lane order) + post-mask.
    attn = attn.reshape(bt, N_HEADS * N_AGENTS * HEAD_DIM)    # (bt, 128), head-major
    attn = jnp.dot(attn, wo_ref[...],
                   preferred_element_type=jnp.float32) + bo_ref[...]
    attn = attn * agk_ref[...]                                # zero inactive agents
    attn = jnp.maximum(attn, 0.0)

    # fc2 + ReLU (block-diagonal over agents), lane-dense (bt, na*H=128) store.
    y = jnp.dot(attn, w2_ref[...],
                preferred_element_type=jnp.float32) + b2_ref[...]
    out_ref[...] = jnp.maximum(y, 0.0)


# ---------------------------------------------------------------------------
# Fused block-diagonal weights (built once, outside the kernel).
# ---------------------------------------------------------------------------
def build_fused_weights(p):
    D, hd, nh = ATTN_EMBED_DIM, HEAD_DIM, N_HEADS
    ne, na = N_ENTITIES, N_AGENTS

    def block_diag(w, n):
        a, b = w.shape
        eye = jnp.eye(n, dtype=w.dtype)
        return (eye[:, None, :, None] * w[None, :, None, :]).reshape(n * a, n * b)

    def head_major(w, n):
        # w: (D, nh*hd) -> (n*D, nh*n*hd) with
        #   out[e*D + i, h*n*hd + e*hd + d] = w[i, h*hd + d]
        wr = w.reshape(D, nh, hd)
        eye = jnp.eye(n, dtype=w.dtype)
        blk = eye[:, None, None, :, None] * wr[None, :, :, None, :]  # (n,D,nh,n,hd)
        return blk.reshape(n * D, nh * n * hd)

    # out_trans consumes the head-major attention output and restores
    # agent-major order:  wo[h*na*hd + a*hd + d, a*D + j] = wout[h*hd + d, j]
    wout_r = p["wout"].reshape(nh, hd, D)
    eye_a = jnp.eye(na, dtype=p["wout"].dtype)
    wo = (eye_a[None, :, None, :, None] * wout_r[:, None, :, None, :]
          ).reshape(nh * na * hd, na * D)

    return dict(
        w1=block_diag(p["w1"], ne),                    # (ne*ed, ne*D)   = (128, 256)
        b1=jnp.tile(p["b1"][None, :], (1, ne)),        # (1, ne*D)
        wq=head_major(p["wq"], na),                    # (na*D, nh*na*hd) = (128, 128)
        wk=head_major(p["wk"], ne),                    # (ne*D, nh*ne*hd) = (256, 256)
        wv=head_major(p["wv"], ne),                    # (256, 256)
        wo=wo,                                         # (nh*na*hd, na*D) = (128, 128)
        bo=jnp.tile(p["bout"][None, :], (1, na)),      # (1, na*D)
        w2=block_diag(p["w2"], na),                    # (na*D, na*H)    = (128, 128)
        b2=jnp.tile(p["b2"][None, :], (1, na)),        # (1, na*H)
    )


# ---------------------------------------------------------------------------
# Wrapper: lane-dense layout plumbing + pallas_call.
# ---------------------------------------------------------------------------
def entity_base_forward(entities, obs_mask, entity_mask, params,
                        bt_target=BT_TARGET):
    bs, ts, ne, ed = entities.shape
    assert ne == N_ENTITIES and ed == ENTITY_DIM
    B = bs * ts
    D, H, na, nh = ATTN_EMBED_DIM, RNN_HIDDEN_DIM, N_AGENTS, N_HEADS

    # Lane-dense inputs (ne*ed == na*D == na*H == 128 lanes).
    ents = entities.reshape(B, ne * ed).astype(jnp.float32)

    obs_m = obs_mask.reshape(B, ne, ne)[:, :na, :].astype(jnp.float32)
    # keep[b, (h,a), (h',e)] = 1 iff h == h' and entity e is visible to agent a.
    keep = (jnp.eye(nh, dtype=jnp.float32)[None, :, None, :, None]
            * (1.0 - obs_m)[:, None, :, None, :]).reshape(B, nh * na * nh * ne)

    ag_m = entity_mask.reshape(B, ne)[:, :na].astype(jnp.float32)
    ag_keep = jnp.repeat(1.0 - ag_m, D, axis=-1)               # (B, na*D) = (B, 128)

    wf = build_fused_weights(params)

    bt = min(bt_target, ((B + 7) // 8) * 8)                    # multiple of 8
    n_blocks = (B + bt - 1) // bt
    B_pad = n_blocks * bt
    if B_pad != B:
        padw = ((0, B_pad - B), (0, 0))
        ents = jnp.pad(ents, padw)
        keep = jnp.pad(keep, padw)      # padded rows: fully masked -> exact zeros
        ag_keep = jnp.pad(ag_keep, padw)

    row_spec = lambda width: pl.BlockSpec((bt, width), lambda b: (b, 0))
    full_spec = lambda shp: pl.BlockSpec(shp, lambda b: (0,) * len(shp))

    flops = 2 * B_pad * (128 * 256 + 128 * 128 + 2 * (256 * 256)
                         + 2 * (8 * 16 * 16) + 128 * 128 + 128 * 128)
    bytes_accessed = 4 * (4 * B_pad * 128 + sum(int(w.size) for w in wf.values()))

    out = pl.pallas_call(
        entity_base_kernel,
        out_shape=jax.ShapeDtypeStruct((B_pad, na * H), jnp.float32),
        grid_spec=pltpu.PrefetchScalarGridSpec(
            num_scalar_prefetch=0,
            grid=(n_blocks,),
            in_specs=[
                row_spec(ne * ed),           # entities        (B_pad, 128)
                row_spec(nh * na * nh * ne),  # attention keep  (B_pad, 128)
                row_spec(na * D),            # agent keep      (B_pad, 128)
                full_spec(wf["w1"].shape), full_spec(wf["b1"].shape),
                full_spec(wf["wq"].shape), full_spec(wf["wk"].shape),
                full_spec(wf["wv"].shape),
                full_spec(wf["wo"].shape), full_spec(wf["bo"].shape),
                full_spec(wf["w2"].shape), full_spec(wf["b2"].shape),
            ],
            out_specs=pl.BlockSpec((bt, na * H), lambda b: (b, 0)),
        ),
        compiler_params=pltpu.CompilerParams(
            dimension_semantics=("parallel",)),
        cost_estimate=pl.CostEstimate(
            flops=flops,
            transcendentals=B_pad * nh * na * nh * ne,
            bytes_accessed=bytes_accessed),
    )(ents, keep, ag_keep,
      wf["w1"], wf["b1"], wf["wq"], wf["wk"], wf["wv"],
      wf["wo"], wf["bo"], wf["w2"], wf["b2"])

    return out[:B].reshape(bs, ts, na, H)


# ---------------------------------------------------------------------------
# Pure-JAX reference (mirrors the PyTorch forward exactly) for validation.
# ---------------------------------------------------------------------------
def ref_forward(entities, obs_mask, entity_mask, p):
    bs, ts, ne, ed = entities.shape
    B = bs * ts
    e = entities.reshape(B, ne, ed)
    om = obs_mask.reshape(B, ne, ne)
    am = entity_mask.reshape(B, ne)[:, :N_AGENTS]

    x1 = jnp.maximum(e @ p["w1"] + p["b1"], 0.0)              # (B, ne, D)
    q = x1[:, :N_AGENTS] @ p["wq"]
    k = x1 @ p["wk"]
    v = x1 @ p["wv"]
    qh = q.reshape(B, N_AGENTS, N_HEADS, HEAD_DIM)
    kh = k.reshape(B, ne, N_HEADS, HEAD_DIM)
    vh = v.reshape(B, ne, N_HEADS, HEAD_DIM)
    logits = jnp.einsum("bahd,behd->bhae", qh, kh) / math.sqrt(HEAD_DIM)
    mask = (om[:, :N_AGENTS, :] > 0.5)[:, None, :, :]
    logits = jnp.where(mask, -jnp.inf, logits)
    w = jax.nn.softmax(logits, axis=-1)
    w = jnp.nan_to_num(w, nan=0.0)                            # NaN -> 0 scrub
    attn = jnp.einsum("bhae,behd->bahd", w, vh).reshape(B, N_AGENTS, ATTN_EMBED_DIM)
    attn = attn @ p["wout"] + p["bout"]
    attn = jnp.where(am[..., None] > 0.5, 0.0, attn)          # post_mask
    y = jnp.maximum(jnp.maximum(attn, 0.0) @ p["w2"] + p["b2"], 0.0)
    return y.reshape(bs, ts, N_AGENTS, RNN_HIDDEN_DIM)


def init_params(key):
    D, H, E = ATTN_EMBED_DIM, RNN_HIDDEN_DIM, ENTITY_DIM
    ks = jax.random.split(key, 9)
    u = lambda k, shape, fan_in: jax.random.uniform(
        k, shape, jnp.float32, -1.0 / math.sqrt(fan_in), 1.0 / math.sqrt(fan_in))
    return {
        # nn.Linear(input_shape, D): stored transposed (in, out)
        "w1": u(ks[0], (E, D), E), "b1": u(ks[1], (D,), E),
        # in_trans: nn.Linear(D, 3D, bias=False) split into q/k/v blocks
        "wq": u(ks[2], (D, D), D), "wk": u(ks[3], (D, D), D), "wv": u(ks[4], (D, D), D),
        # out_trans: nn.Linear(D, D)
        "wout": u(ks[5], (D, D), D), "bout": u(ks[6], (D,), D),
        # fc2: nn.Linear(D, H)
        "w2": u(ks[7], (D, H), D), "b2": u(ks[8], (H,), D),
    }


if __name__ == "__main__":
    key = jax.random.PRNGKey(0)
    k_e, k_o, k_m, k_p = jax.random.split(key, 4)

    entities = jax.random.normal(
        k_e, (BS, TS, N_ENTITIES, ENTITY_DIM), jnp.float32)
    obs_mask = jax.random.bernoulli(
        k_o, 0.3, (BS, TS, N_ENTITIES, N_ENTITIES)).astype(jnp.float32)
    # make one agent fully masked to exercise the NaN->0 softmax path
    obs_mask = obs_mask.at[0, 0, 0, :].set(1.0)
    entity_mask = jax.random.bernoulli(
        k_m, 0.25, (BS, TS, N_ENTITIES)).astype(jnp.float32)

    params = init_params(k_p)
    # TODO(synk): optional 'task_embeds' input branch is not exercised here.

    out = jax.block_until_ready(
        entity_base_forward(entities, obs_mask, entity_mask, params))

    ref = ref_forward(entities, obs_mask, entity_mask, params)
    np.testing.assert_allclose(np.asarray(out), np.asarray(ref),
                               rtol=1e-4, atol=1e-5)
    assert out.shape == (BS, TS, N_AGENTS, RNN_HIDDEN_DIM)
    print("KERNEL_OK")
</pallas_src>

<mosaic_0001>
module attributes {stable_mosaic.version = 11 : i64} {
  func.func @entity_base_kernel(%arg0: i32, %arg1: memref<8x128xf32, #tpu.memory_space<vmem>>, %arg2: memref<8x128xf32, #tpu.memory_space<vmem>>, %arg3: memref<8x128xf32, #tpu.memory_space<vmem>>, %arg4: memref<128x256xf32, #tpu.memory_space<vmem>>, %arg5: memref<1x256xf32, #tpu.memory_space<vmem>>, %arg6: memref<128x128xf32, #tpu.memory_space<vmem>>, %arg7: memref<256x256xf32, #tpu.memory_space<vmem>>, %arg8: memref<256x256xf32, #tpu.memory_space<vmem>>, %arg9: memref<128x128xf32, #tpu.memory_space<vmem>>, %arg10: memref<1x128xf32, #tpu.memory_space<vmem>>, %arg11: memref<128x128xf32, #tpu.memory_space<vmem>>, %arg12: memref<1x128xf32, #tpu.memory_space<vmem>>, %arg13: memref<8x128xf32, #tpu.memory_space<vmem>>) attributes {dimension_semantics = [#tpu.dimension_semantics<parallel>], iteration_bounds = array<i64: 1>, scalar_prefetch = 0 : i64, scratch_operands = 0 : i64, tpu.core_type = #tpu.core_type<tc>, window_params = [{transform_indices = @transform_0, window_bounds = array<i64: 8, 128>}, {transform_indices = @transform_1, window_bounds = array<i64: 8, 128>}, {transform_indices = @transform_2, window_bounds = array<i64: 8, 128>}, {pipeline_mode = #tpu.pipeline_mode<synchronous>, transform_indices = @transform_3, window_bounds = array<i64: 128, 256>}, {pipeline_mode = #tpu.pipeline_mode<synchronous>, transform_indices = @transform_4, window_bounds = array<i64: 1, 256>}, {pipeline_mode = #tpu.pipeline_mode<synchronous>, transform_indices = @transform_5, window_bounds = array<i64: 128, 128>}, {pipeline_mode = #tpu.pipeline_mode<synchronous>, transform_indices = @transform_6, window_bounds = array<i64: 256, 256>}, {pipeline_mode = #tpu.pipeline_mode<synchronous>, transform_indices = @transform_7, window_bounds = array<i64: 256, 256>}, {pipeline_mode = #tpu.pipeline_mode<synchronous>, transform_indices = @transform_8, window_bounds = array<i64: 128, 128>}, {pipeline_mode = #tpu.pipeline_mode<synchronous>, transform_indices = @transform_9, window_bounds = array<i64: 1, 128>}, {pipeline_mode = #tpu.pipeline_mode<synchronous>, transform_indices = @transform_10, window_bounds = array<i64: 128, 128>}, {pipeline_mode = #tpu.pipeline_mode<synchronous>, transform_indices = @transform_11, window_bounds = array<i64: 1, 128>}, {transform_indices = @transform_12, window_bounds = array<i64: 8, 128>}]} {
    %c0 = arith.constant 0 : index
    %c0_0 = arith.constant 0 : index
    %0 = vector.load %arg1[%c0, %c0_0] : memref<8x128xf32, #tpu.memory_space<vmem>>, vector<8x128xf32>
    %c0_1 = arith.constant 0 : index
    %c0_2 = arith.constant 0 : index
    %1 = vector.load %arg4[%c0_1, %c0_2] : memref<128x256xf32, #tpu.memory_space<vmem>>, vector<128x256xf32>
    %cst = arith.constant dense<0.000000e+00> : vector<8x256xf32>
    %2 = tpu.matmul %0, %1, %cst {dimension_numbers = #tpu.dot_dimension_numbers<[1], [0], [0], [1], [0, 0, 1, 1], [], []>} : vector<8x128xf32>, vector<128x256xf32>, vector<8x256xf32> -> vector<8x256xf32>
    %c0_3 = arith.constant 0 : index
    %c0_4 = arith.constant 0 : index
    %3 = vector.load %arg5[%c0_3, %c0_4] : memref<1x256xf32, #tpu.memory_space<vmem>>, vector<1x256xf32>
    %4 = vector.broadcast %3 : vector<1x256xf32> to vector<8x256xf32>
    %5 = arith.addf %2, %4 : vector<8x256xf32>
    %cst_5 = arith.constant 0.000000e+00 : f32
    %6 = vector.broadcast %cst_5 : f32 to vector<8x256xf32>
    %7 = arith.maximumf %5, %6 : vector<8x256xf32>
    %8 = vector.extract_strided_slice %7 {offsets = [0, 0], sizes = [8, 128], strides = [1, 1]} : vector<8x256xf32> to vector<8x128xf32>
    %c0_6 = arith.constant 0 : index
    %c0_7 = arith.constant 0 : index
    %9 = vector.load %arg6[%c0_6, %c0_7] : memref<128x128xf32, #tpu.memory_space<vmem>>, vector<128x128xf32>
    %cst_8 = arith.constant dense<0.000000e+00> : vector<8x128xf32>
    %10 = tpu.matmul %8, %9, %cst_8 {dimension_numbers = #tpu.dot_dimension_numbers<[1], [0], [0], [1], [0, 0, 1, 1], [], []>} : vector<8x128xf32>, vector<128x128xf32>, vector<8x128xf32> -> vector<8x128xf32>
    %c0_9 = arith.constant 0 : index
    %c0_10 = arith.constant 0 : index
    %11 = vector.load %arg7[%c0_9, %c0_10] : memref<256x256xf32, #tpu.memory_space<vmem>>, vector<256x256xf32>
    %cst_11 = arith.constant dense<0.000000e+00> : vector<8x256xf32>
    %12 = tpu.matmul %7, %11, %cst_11 {dimension_numbers = #tpu.dot_dimension_numbers<[1], [0], [0], [1], [0, 0, 1, 1], [], []>} : vector<8x256xf32>, vector<256x256xf32>, vector<8x256xf32> -> vector<8x256xf32>
    %c0_12 = arith.constant 0 : index
    %c0_13 = arith.constant 0 : index
    %13 = vector.load %arg8[%c0_12, %c0_13] : memref<256x256xf32, #tpu.memory_space<vmem>>, vector<256x256xf32>
    %cst_14 = arith.constant dense<0.000000e+00> : vector<8x256xf32>
    %14 = tpu.matmul %7, %13, %cst_14 {dimension_numbers = #tpu.dot_dimension_numbers<[1], [0], [0], [1], [0, 0, 1, 1], [], []>} : vector<8x256xf32>, vector<256x256xf32>, vector<8x256xf32> -> vector<8x256xf32>
    %15 = vector.shape_cast %10 : vector<8x128xf32> to vector<8x8x16xf32>
    %16 = vector.shape_cast %12 : vector<8x256xf32> to vector<8x16x16xf32>
    %17 = vector.shape_cast %14 : vector<8x256xf32> to vector<8x16x16xf32>
    %c0_15 = arith.constant 0 : index
    %c0_16 = arith.constant 0 : index
    %18 = vector.load %arg2[%c0_15, %c0_16] : memref<8x128xf32, #tpu.memory_space<vmem>>, vector<8x128xf32>
    %19 = vector.shape_cast %18 : vector<8x128xf32> to vector<8x8x16xf32>
    %cst_17 = arith.constant dense<0.000000e+00> : vector<8x8x16xf32>
    %20 = tpu.matmul %15, %16, %cst_17 {dimension_numbers = #tpu.dot_dimension_numbers<[2], [2], [1], [1], [0, 0, 0, 1, 1, 1], [0], [0]>} : vector<8x8x16xf32>, vector<8x16x16xf32>, vector<8x8x16xf32> -> vector<8x8x16xf32>
    %cst_18 = arith.constant 2.500000e-01 : f32
    %21 = vector.broadcast %cst_18 : f32 to vector<8x8x16xf32>
    %22 = arith.mulf %20, %21 : vector<8x8x16xf32>
    %cst_19 = arith.constant 1.000000e+00 : f32
    %23 = vector.broadcast %cst_19 : f32 to vector<8x8x16xf32>
    %24 = arith.subf %19, %23 : vector<8x8x16xf32>
    %cst_20 = arith.constant 1.000000e+30 : f32
    %25 = vector.broadcast %cst_20 : f32 to vector<8x8x16xf32>
    %26 = arith.mulf %24, %25 : vector<8x8x16xf32>
    %27 = arith.addf %22, %26 : vector<8x8x16xf32>
    %cst_21 = arith.constant dense<0xFF800000> : vector<8x8xf32>
    %28 = vector.multi_reduction <maximumf>, %27, %cst_21 [2] : vector<8x8x16xf32> to vector<8x8xf32>
    %29 = vector.shape_cast %28 : vector<8x8xf32> to vector<8x8x1xf32>
    %30 = vector.broadcast %29 : vector<8x8x1xf32> to vector<8x8x16xf32>
    %31 = arith.subf %27, %30 : vector<8x8x16xf32>
    %32 = math.exp %31 : vector<8x8x16xf32>
    %33 = arith.mulf %32, %19 : vector<8x8x16xf32>
    %cst_22 = arith.constant dense<0.000000e+00> : vector<8x8xf32>
    %34 = vector.multi_reduction <add>, %33, %cst_22 [2] : vector<8x8x16xf32> to vector<8x8xf32>
    %35 = vector.shape_cast %34 : vector<8x8xf32> to vector<8x8x1xf32>
    %cst_23 = arith.constant 0.000000e+00 : f32
    %36 = vector.broadcast %cst_23 : f32 to vector<8x8x1xf32>
    %37 = arith.cmpf ogt, %35, %36 : vector<8x8x1xf32>
    %cst_24 = arith.constant 1.000000e+00 : f32
    %38 = vector.broadcast %cst_24 : f32 to vector<8x8x1xf32>
    %39 = arith.select %37, %35, %38 : vector<8x8x1xi1>, vector<8x8x1xf32>
    %40 = vector.broadcast %39 : vector<8x8x1xf32> to vector<8x8x16xf32>
    %41 = arith.divf %33, %40 : vector<8x8x16xf32>
    %cst_25 = arith.constant dense<0.000000e+00> : vector<8x8x16xf32>
    %42 = tpu.matmul %41, %17, %cst_25 {dimension_numbers = #tpu.dot_dimension_numbers<[2], [1], [1], [2], [0, 0, 0, 1, 1, 2], [0], [0]>} : vector<8x8x16xf32>, vector<8x16x16xf32>, vector<8x8x16xf32> -> vector<8x8x16xf32>
    %43 = vector.shape_cast %42 : vector<8x8x16xf32> to vector<8x128xf32>
    %c0_26 = arith.constant 0 : index
    %c0_27 = arith.constant 0 : index
    %44 = vector.load %arg9[%c0_26, %c0_27] : memref<128x128xf32, #tpu.memory_space<vmem>>, vector<128x128xf32>
    %cst_28 = arith.constant dense<0.000000e+00> : vector<8x128xf32>
    %45 = tpu.matmul %43, %44, %cst_28 {dimension_numbers = #tpu.dot_dimension_numbers<[1], [0], [0], [1], [0, 0, 1, 1], [], []>} : vector<8x128xf32>, vector<128x128xf32>, vector<8x128xf32> -> vector<8x128xf32>
    %c0_29 = arith.constant 0 : index
    %c0_30 = arith.constant 0 : index
    %46 = vector.load %arg10[%c0_29, %c0_30] : memref<1x128xf32, #tpu.memory_space<vmem>>, vector<1x128xf32>
    %47 = vector.broadcast %46 : vector<1x128xf32> to vector<8x128xf32>
    %48 = arith.addf %45, %47 : vector<8x128xf32>
    %c0_31 = arith.constant 0 : index
    %c0_32 = arith.constant 0 : index
    %49 = vector.load %arg3[%c0_31, %c0_32] : memref<8x128xf32, #tpu.memory_space<vmem>>, vector<8x128xf32>
    %50 = arith.mulf %48, %49 : vector<8x128xf32>
    %cst_33 = arith.constant 0.000000e+00 : f32
    %51 = vector.broadcast %cst_33 : f32 to vector<8x128xf32>
    %52 = arith.maximumf %50, %51 : vector<8x128xf32>
    %c0_34 = arith.constant 0 : index
    %c0_35 = arith.constant 0 : index
    %53 = vector.load %arg11[%c0_34, %c0_35] : memref<128x128xf32, #tpu.memory_space<vmem>>, vector<128x128xf32>
    %cst_36 = arith.constant dense<0.000000e+00> : vector<8x128xf32>
    %54 = tpu.matmul %52, %53, %cst_36 {dimension_numbers = #tpu.dot_dimension_numbers<[1], [0], [0], [1], [0, 0, 1, 1], [], []>} : vector<8x128xf32>, vector<128x128xf32>, vector<8x128xf32> -> vector<8x128xf32>
    %c0_37 = arith.constant 0 : index
    %c0_38 = arith.constant 0 : index
    %55 = vector.load %arg12[%c0_37, %c0_38] : memref<1x128xf32, #tpu.memory_space<vmem>>, vector<1x128xf32>
    %56 = vector.broadcast %55 : vector<1x128xf32> to vector<8x128xf32>
    %57 = arith.addf %54, %56 : vector<8x128xf32>
    %cst_39 = arith.constant 0.000000e+00 : f32
    %58 = vector.broadcast %cst_39 : f32 to vector<8x128xf32>
    %59 = arith.maximumf %57, %58 : vector<8x128xf32>
    %c0_40 = arith.constant 0 : index
    %c0_41 = arith.constant 0 : index
    %60 = vector.load %arg13[%c0_40, %c0_41] : memref<8x128xf32, #tpu.memory_space<vmem>>, vector<8x128xf32>
    tpu.vector_store %arg13[%c0_40, %c0_41], %59 {strides = array<i32>} : memref<8x128xf32, #tpu.memory_space<vmem>>, vector<8x128xf32>,
    return
  }
  func.func @transform_0(%arg0: i32) -> (i32, i32) {
    %c0_i32 = arith.constant 0 : i32
    %c0_i32_0 = arith.constant 0 : i32
    return %arg0, %c0_i32 : i32, i32
  }
  func.func @transform_1(%arg0: i32) -> (i32, i32) {
    %c0_i32 = arith.constant 0 : i32
    %c0_i32_0 = arith.constant 0 : i32
    return %arg0, %c0_i32 : i32, i32
  }
  func.func @transform_2(%arg0: i32) -> (i32, i32) {
    %c0_i32 = arith.constant 0 : i32
    %c0_i32_0 = arith.constant 0 : i32
    return %arg0, %c0_i32 : i32, i32
  }
  func.func @transform_3(%arg0: i32) -> (i32, i32) {
    %c0_i32 = arith.constant 0 : i32
    %c0_i32_0 = arith.constant 0 : i32
    %c0_i32_1 = arith.constant 0 : i32
    return %c0_i32, %c0_i32_0 : i32, i32
  }
  func.func @transform_4(%arg0: i32) -> (i32, i32) {
    %c0_i32 = arith.constant 0 : i32
    %c0_i32_0 = arith.constant 0 : i32
    %c0_i32_1 = arith.constant 0 : i32
    return %c0_i32, %c0_i32_0 : i32, i32
  }
  func.func @transform_5(%arg0: i32) -> (i32, i32) {
    %c0_i32 = arith.constant 0 : i32
    %c0_i32_0 = arith.constant 0 : i32
    %c0_i32_1 = arith.constant 0 : i32
    return %c0_i32, %c0_i32_0 : i32, i32
  }
  func.func @transform_6(%arg0: i32) -> (i32, i32) {
    %c0_i32 = arith.constant 0 : i32
    %c0_i32_0 = arith.constant 0 : i32
    %c0_i32_1 = arith.constant 0 : i32
    return %c0_i32, %c0_i32_0 : i32, i32
  }
  func.func @transform_7(%arg0: i32) -> (i32, i32) {
    %c0_i32 = arith.constant 0 : i32
    %c0_i32_0 = arith.constant 0 : i32
    %c0_i32_1 = arith.constant 0 : i32
    return %c0_i32, %c0_i32_0 : i32, i32
  }
  func.func @transform_8(%arg0: i32) -> (i32, i32) {
    %c0_i32 = arith.constant 0 : i32
    %c0_i32_0 = arith.constant 0 : i32
    %c0_i32_1 = arith.constant 0 : i32
    return %c0_i32, %c0_i32_0 : i32, i32
  }
  func.func @transform_9(%arg0: i32) -> (i32, i32) {
    %c0_i32 = arith.constant 0 : i32
    %c0_i32_0 = arith.constant 0 : i32
    %c0_i32_1 = arith.constant 0 : i32
    return %c0_i32, %c0_i32_0 : i32, i32
  }
  func.func @transform_10(%arg0: i32) -> (i32, i32) {
    %c0_i32 = arith.constant 0 : i32
    %c0_i32_0 = arith.constant 0 : i32
    %c0_i32_1 = arith.constant 0 : i32
    return %c0_i32, %c0_i32_0 : i32, i32
  }
  func.func @transform_11(%arg0: i32) -> (i32, i32) {
    %c0_i32 = arith.constant 0 : i32
    %c0_i32_0 = arith.constant 0 : i32
    %c0_i32_1 = arith.constant 0 : i32
    return %c0_i32, %c0_i32_0 : i32, i32
  }
  func.func @transform_12(%arg0: i32) -> (i32, i32) {
    %c0_i32 = arith.constant 0 : i32
    %c0_i32_0 = arith.constant 0 : i32
    return %arg0, %c0_i32 : i32, i32
  }
}

</mosaic_0001>

<llo_original>
// kernel: tpu_custom_call.1
$region0: #{tpu_custom_call.1}
  #allocation0 [shape = 'u32[]', space=smem, size = 0x4, offset = 0x4, fixed_abs, tag = 'smem constant byte address 0x4 - core index']
  #allocation1 [shape = 'u32[144,128]{1,0:T(1,128)}', space=vmem, size = 0x12000, scoped, tag = 'internal scratch']
  %s0 = inlined_call_operand.hbm [shape: f32[8,128], index: 0, kind: input, shape index: {}]
  %s1 = inlined_call_operand.hbm [shape: f32[8,128], index: 1, kind: input, shape index: {}]
  %s2 = inlined_call_operand.hbm [shape: f32[8,128], index: 2, kind: input, shape index: {}]
  %s3 = inlined_call_operand.hbm [shape: f32[128,256], index: 3, kind: input, shape index: {}]
  %s4 = inlined_call_operand.vmem [shape: f32[1,256], index: 4, kind: input, shape index: {}]
  %s5 = inlined_call_operand.hbm [shape: f32[128,128], index: 5, kind: input, shape index: {}]
  %s6 = inlined_call_operand.hbm [shape: f32[256,256], index: 6, kind: input, shape index: {}]
  %s7 = inlined_call_operand.hbm [shape: f32[256,256], index: 7, kind: input, shape index: {}]
  %s8 = inlined_call_operand.hbm [shape: f32[128,128], index: 8, kind: input, shape index: {}]
  %s9 = inlined_call_operand.vmem [shape: f32[1,128], index: 9, kind: input, shape index: {}]
  %s10 = inlined_call_operand.hbm [shape: f32[128,128], index: 10, kind: input, shape index: {}]
  %s11 = inlined_call_operand.vmem [shape: f32[1,128], index: 11, kind: input, shape index: {}]
  %s12 = inlined_call_operand.hbm [shape: f32[8,128], index: 12, kind: output, shape index: {}]
  %s13 = sld [smem:[#allocation0]]
  $region94: #{tpu_custom_call.1} parent=0
    _
  %s15 = ssub.s32 1, %s13
  %s16 = scalar_select 0, %s15, %s13
  $region1: #{tpu_custom_call.1} parent=0
    #allocation2 [shape = 'u8[4096]{0}', space=vmem, size = 0x1000, scoped, tag = 'input window, operand 0, single buffered']
    #allocation3 [shape = 's32[1]{0}', space=sflag, size = 0x4, scoped, tag = 'scoped memory for tpu_custom_call.1']
    #allocation4 [shape = 's32[1]{0}', space=sflag, size = 0x4, scoped, tag = 'scoped memory for tpu_custom_call.1']
    #allocation5 [shape = 'u8[4096]{0}', space=vmem, size = 0x1000, scoped, tag = 'input window, operand 1, single buffered']
    #allocation6 [shape = 's32[1]{0}', space=sflag, size = 0x4, scoped, tag = 'scoped memory for tpu_custom_call.1']
    #allocation7 [shape = 'u8[4096]{0}', space=vmem, size = 0x1000, scoped, tag = 'input window, operand 2, single buffered']
    #allocation8 [shape = 'u8[131072]{0}', space=vmem, size = 0x20000, scoped, tag = 'input window, operand 3, single buffered']
    #allocation9 [shape = 's32[1]{0}', space=sflag, size = 0x4, scoped, tag = 'scoped memory for tpu_custom_call.1']
    #allocation10 [shape = 'u8[65536]{0}', space=vmem, size = 0x10000, scoped, tag = 'input window, operand 5, single buffered']
    #allocation11 [shape = 'u8[262144]{0}', space=vmem, size = 0x40000, scoped, tag = 'input window, operand 6, single buffered']
    #allocation12 [shape = 's32[1]{0}', space=sflag, size = 0x4, scoped, tag = 'scoped memory for tpu_custom_call.1']
    #allocation13 [shape = 'u8[262144]{0}', space=vmem, size = 0x40000, scoped, tag = 'input window, operand 7, single buffered']
    #allocation14 [shape = 'u8[65536]{0}', space=vmem, size = 0x10000, scoped, tag = 'input window, operand 8, single buffered']
    #allocation15 [shape = 's32[1]{0}', space=sflag, size = 0x4, scoped, tag = 'scoped memory for tpu_custom_call.1']
    #allocation16 [shape = 'u8[65536]{0}', space=vmem, size = 0x10000, scoped, tag = 'input window, operand 10, single buffered']
    #allocation17 [shape = 'u8[4096]{0}', space=vmem, size = 0x1000, scoped, tag = 'output window, operand 0, single buffered']
    %17 = vsyncpa [#allocation3], 0
    %18 = vsyncpa [#allocation6], 0
    %19 = vsyncpa [#allocation9], 0
    %20 = vsyncpa [#allocation12], 0
    %21 = vsyncpa [#allocation15], 0
    %22 = vsyncpa [#allocation4], 0
    // Predicated region
    $region2: #{tpu_custom_call.1} parent=1 // pred_check
      _
    $region3: #{tpu_custom_call.1} parent=1 // pred_check_branch
      %24 = sbr.rel (0) target = $region5
    $region4: #{tpu_custom_call.1} parent=1 // pred_region
      %s26 = ssub.s32 128, 128
      %27 = vsyncadd [#allocation3], %s26
      %s29 = sshll.u32 [#allocation2], 4
      %s30 = int_to_ptr.vmem [resolvable:$true] %s29
      %32 = dma.hbm_to_vmem [thread:$0]  %s0, 128, %s30, [#allocation3]
    $region5: #{tpu_custom_call.1} parent=1 // pred_fallthru
      _
    // Predicated region
    $region6: #{tpu_custom_call.1} parent=1 // pred_check
      _
    $region7: #{tpu_custom_call.1} parent=1 // pred_check_branch
      %34 = sbr.rel (0) target = $region9
    $region8: #{tpu_custom_call.1} parent=1 // pred_region
      %s36 = ssub.s32 128, 128
      %37 = vsyncadd [#allocation6], %s36
      %s39 = sshll.u32 [#allocation5], 4
      %s40 = int_to_ptr.vmem [resolvable:$true] %s39
      %42 = dma.hbm_to_vmem [thread:$0]  %s1, 128, %s40, [#allocation6]
    $region9: #{tpu_custom_call.1} parent=1 // pred_fallthru
      _
    // Predicated region
    $region10: #{tpu_custom_call.1} parent=1 // pred_check
      _
    $region11: #{tpu_custom_call.1} parent=1 // pred_check_branch
      %44 = sbr.rel (0) target = $region13
    $region12: #{tpu_custom_call.1} parent=1 // pred_region
      %s46 = ssub.s32 128, 128
      %47 = vsyncadd [#allocation6], %s46
      %s49 = sshll.u32 [#allocation7], 4
      %s50 = int_to_ptr.vmem [resolvable:$true] %s49
      %52 = dma.hbm_to_vmem [thread:$0]  %s2, 128, %s50, [#allocation6]
    $region13: #{tpu_custom_call.1} parent=1 // pred_fallthru
      _
    // Predicated region
    $region14: #{tpu_custom_call.1} parent=1 // pred_check
      _
    $region15: #{tpu_custom_call.1} parent=1 // pred_check_branch
      %54 = sbr.rel (0) target = $region17
    $region16: #{tpu_custom_call.1} parent=1 // pred_region
      %s56 = ssub.s32 4096, 4096
      %57 = vsyncadd [#allocation9], %s56
      %s58 = sshll.u32 [#allocation8], 4
      %s59 = int_to_ptr.vmem [resolvable:$true] %s58
      %64 = dma.hbm_to_vmem [thread:$0]  %s3, 4096, %s59, [#allocation9], 256, 256, 16
    $region17: #{tpu_custom_call.1} parent=1 // pred_fallthru
      _
    // Predicated region
    $region18: #{tpu_custom_call.1} parent=1 // pred_check
      _
    $region19: #{tpu_custom_call.1} parent=1 // pred_check_branch
      %66 = sbr.rel (0) target = $region21
    $region20: #{tpu_custom_call.1} parent=1 // pred_region
      _
    $region21: #{tpu_custom_call.1} parent=1 // pred_fallthru
      _
    // Predicated region
    $region22: #{tpu_custom_call.1} parent=1 // pred_check
      _
    $region23: #{tpu_custom_call.1} parent=1 // pred_check_branch
      %68 = sbr.rel (0) target = $region25
    $region24: #{tpu_custom_call.1} parent=1 // pred_region
      %s70 = ssub.s32 2048, 2048
      %71 = vsyncadd [#allocation9], %s70
      %s72 = sshll.u32 [#allocation10], 4
      %s73 = int_to_ptr.vmem [resolvable:$true] %s72
      %78 = dma.hbm_to_vmem [thread:$0]  %s5, 2048, %s73, [#allocation9], 128, 128, 8
    $region25: #{tpu_custom_call.1} parent=1 // pred_fallthru
      _
    // Predicated region
    $region26: #{tpu_custom_call.1} parent=1 // pred_check
      _
    $region27: #{tpu_custom_call.1} parent=1 // pred_check_branch
      %80 = sbr.rel (0) target = $region29
    $region28: #{tpu_custom_call.1} parent=1 // pred_region
      %s82 = ssub.s32 8192, 8192
      %83 = vsyncadd [#allocation12], %s82
      %s84 = sshll.u32 [#allocation11], 4
      %s85 = int_to_ptr.vmem [resolvable:$true] %s84
      %90 = dma.hbm_to_vmem [thread:$0]  %s6, 8192, %s85, [#allocation12], 256, 256, 16
    $region29: #{tpu_custom_call.1} parent=1 // pred_fallthru
      _
    // Predicated region
    $region30: #{tpu_custom_call.1} parent=1 // pred_check
      _
    $region31: #{tpu_custom_call.1} parent=1 // pred_check_branch
      %92 = sbr.rel (0) target = $region33
    $region32: #{tpu_custom_call.1} parent=1 // pred_region
      %s94 = ssub.s32 8192, 8192
      %95 = vsyncadd [#allocation12], %s94
      %s96 = sshll.u32 [#allocation13], 4
      %s97 = int_to_ptr.vmem [resolvable:$true] %s96
      %102 = dma.hbm_to_vmem [thread:$0]  %s7, 8192, %s97, [#allocation12], 256, 256, 16
    $region33: #{tpu_custom_call.1} parent=1 // pred_fallthru
      _
    // Predicated region
    $region34: #{tpu_custom_call.1} parent=1 // pred_check
      _
    $region35: #{tpu_custom_call.1} parent=1 // pred_check_branch
      %104 = sbr.rel (0) target = $region37
    $region36: #{tpu_custom_call.1} parent=1 // pred_region
      %s106 = ssub.s32 2048, 2048
      %107 = vsyncadd [#allocation15], %s106
      %s108 = sshll.u32 [#allocation14], 4
      %s109 = int_to_ptr.vmem [resolvable:$true] %s108
      %114 = dma.hbm_to_vmem [thread:$0]  %s8, 2048, %s109, [#allocation15], 128, 128, 8
    $region37: #{tpu_custom_call.1} parent=1 // pred_fallthru
      _
    // Predicated region
    $region38: #{tpu_custom_call.1} parent=1 // pred_check
      _
    $region39: #{tpu_custom_call.1} parent=1 // pred_check_branch
      %116 = sbr.rel (0) target = $region41
    $region40: #{tpu_custom_call.1} parent=1 // pred_region
      _
    $region41: #{tpu_custom_call.1} parent=1 // pred_fallthru
      _
    // Predicated region
    $region42: #{tpu_custom_call.1} parent=1 // pred_check
      _
    $region43: #{tpu_custom_call.1} parent=1 // pred_check_branch
      %118 = sbr.rel (0) target = $region45
    $region44: #{tpu_custom_call.1} parent=1 // pred_region
      %s120 = ssub.s32 2048, 2048
      %121 = vsyncadd [#allocation15], %s120
      %s122 = sshll.u32 [#allocation16], 4
      %s123 = int_to_ptr.vmem [resolvable:$true] %s122
      %128 = dma.hbm_to_vmem [thread:$0]  %s10, 2048, %s123, [#allocation15], 128, 128, 8
    $region45: #{tpu_custom_call.1} parent=1 // pred_fallthru
      _
    // Predicated region
    $region46: #{tpu_custom_call.1} parent=1 // pred_check
      _
    $region47: #{tpu_custom_call.1} parent=1 // pred_check_branch
      %130 = sbr.rel (0) target = $region49
    $region48: #{tpu_custom_call.1} parent=1 // pred_region
      _
    $region49: #{tpu_custom_call.1} parent=1 // pred_fallthru
      _
    // Predicated region
    $region50: #{tpu_custom_call.1} parent=1 // pred_check
      _
    $region51: #{tpu_custom_call.1} parent=1 // pred_check_branch
      %132 = sbr.rel (0) target = $region53
    $region52: #{tpu_custom_call.1} parent=1 // pred_region
      %133 = dma.done [#allocation3], 128
    $region53: #{tpu_custom_call.1} parent=1 // pred_fallthru
      _
    // Predicated region
    $region54: #{tpu_custom_call.1} parent=1 // pred_check
      _
    $region55: #{tpu_custom_call.1} parent=1 // pred_check_branch
      %135 = sbr.rel (0) target = $region57
    $region56: #{tpu_custom_call.1} parent=1 // pred_region
      %136 = dma.done [#allocation6], 128
    $region57: #{tpu_custom_call.1} parent=1 // pred_fallthru
      _
    // Predicated region
    $region58: #{tpu_custom_call.1} parent=1 // pred_check
      _
    $region59: #{tpu_custom_call.1} parent=1 // pred_check_branch
      %138 = sbr.rel (0) target = $region61
    $region60: #{tpu_custom_call.1} parent=1 // pred_region
      %139 = dma.done [#allocation6], 128
    $region61: #{tpu_custom_call.1} parent=1 // pred_fallthru
      _
    // Predicated region
    $region62: #{tpu_custom_call.1} parent=1 // pred_check
      _
    $region63: #{tpu_custom_call.1} parent=1 // pred_check_branch
      %141 = sbr.rel (0) target = $region65
    $region64: #{tpu_custom_call.1} parent=1 // pred_region
      %142 = dma.done [#allocation9], 4096
    $region65: #{tpu_custom_call.1} parent=1 // pred_fallthru
      _
    // Predicated region
    $region66: #{tpu_custom_call.1} parent=1 // pred_check
      _
    $region67: #{tpu_custom_call.1} parent=1 // pred_check_branch
      %144 = sbr.rel (0) target = $region69
    $region68: #{tpu_custom_call.1} parent=1 // pred_region
      %145 = dma.done [#allocation9], 2048
    $region69: #{tpu_custom_call.1} parent=1 // pred_fallthru
      _
    // Predicated region
    $region70: #{tpu_custom_call.1} parent=1 // pred_check
      _
    $region71: #{tpu_custom_call.1} parent=1 // pred_check_branch
      %147 = sbr.rel (0) target = $region73
    $region72: #{tpu_custom_call.1} parent=1 // pred_region
      %148 = dma.done [#allocation12], 8192
    $region73: #{tpu_custom_call.1} parent=1 // pred_fallthru
      _
    // Predicated region
    $region74: #{tpu_custom_call.1} parent=1 // pred_check
      _
    $region75: #{tpu_custom_call.1} parent=1 // pred_check_branch
      %150 = sbr.rel (0) target = $region77
    $region76: #{tpu_custom_call.1} parent=1 // pred_region
      %151 = dma.done [#allocation12], 8192
    $region77: #{tpu_custom_call.1} parent=1 // pred_fallthru
      _
    // Predicated region
    $region78: #{tpu_custom_call.1} parent=1 // pred_check
      _
    $region79: #{tpu_custom_call.1} parent=1 // pred_check_branch
      %153 = sbr.rel (0) target = $region81
    $region80: #{tpu_custom_call.1} parent=1 // pred_region
      %154 = dma.done [#allocation15], 2048
    $region81: #{tpu_custom_call.1} parent=1 // pred_fallthru
      _
    // Predicated region
    $region82: #{tpu_custom_call.1} parent=1 // pred_check
      _
    $region83: #{tpu_custom_call.1} parent=1 // pred_check_branch
      %156 = sbr.rel (0) target = $region85
    $region84: #{tpu_custom_call.1} parent=1 // pred_region
      %157 = dma.done [#allocation15], 2048
    $region85: #{tpu_custom_call.1} parent=1 // pred_fallthru
      _
    %v158 = vld [vmem:[#allocation2] sm:$0xff]
    %v159 = vld [vmem:[#allocation8] sm:$0xff]
    %v160 = vld [vmem:[#allocation8 + $0x8] sm:$0xff]
    %v161 = vld [vmem:[#allocation8 + $0x10] sm:$0xff]
    %v162 = vld [vmem:[#allocation8 + $0x18] sm:$0xff]
    %v163 = vld [vmem:[#allocation8 + $0x20] sm:$0xff]
    %v164 = vld [vmem:[#allocation8 + $0x28] sm:$0xff]
    %v165 = vld [vmem:[#allocation8 + $0x30] sm:$0xff]
    %v166 = vld [vmem:[#allocation8 + $0x38] sm:$0xff]
    %v167 = vld [vmem:[#allocation8 + $0x40] sm:$0xff]
    %v168 = vld [vmem:[#allocation8 + $0x48] sm:$0xff]
    %v169 = vld [vmem:[#allocation8 + $0x50] sm:$0xff]
    %v170 = vld [vmem:[#allocation8 + $0x58] sm:$0xff]
    %v171 = vld [vmem:[#allocation8 + $0x60] sm:$0xff]
    %v172 = vld [vmem:[#allocation8 + $0x68] sm:$0xff]
    %v173 = vld [vmem:[#allocation8 + $0x70] sm:$0xff]
    %v174 = vld [vmem:[#allocation8 + $0x78] sm:$0xff]
    %v175 = vld [vmem:[#allocation8 + $0x80] sm:$0xff]
    %v176 = vld [vmem:[#allocation8 + $0x88] sm:$0xff]
    %v177 = vld [vmem:[#allocation8 + $0x90] sm:$0xff]
    %v178 = vld [vmem:[#allocation8 + $0x98] sm:$0xff]
    %v179 = vld [vmem:[#allocation8 + $0xa0] sm:$0xff]
    %v180 = vld [vmem:[#allocation8 + $0xa8] sm:$0xff]
    %v181 = vld [vmem:[#allocation8 + $0xb0] sm:$0xff]
    %v182 = vld [vmem:[#allocation8 + $0xb8] sm:$0xff]
    %v183 = vld [vmem:[#allocation8 + $0xc0] sm:$0xff]
    %v184 = vld [vmem:[#allocation8 + $0xc8] sm:$0xff]
    %v185 = vld [vmem:[#allocation8 + $0xd0] sm:$0xff]
    %v186 = vld [vmem:[#allocation8 + $0xd8] sm:$0xff]
    %v187 = vld [vmem:[#allocation8 + $0xe0] sm:$0xff]
    %v188 = vld [vmem:[#allocation8 + $0xe8] sm:$0xff]
    %v189 = vld [vmem:[#allocation8 + $0xf0] sm:$0xff]
    %v190 = vld [vmem:[#allocation8 + $0xf8] sm:$0xff]
    %v191 = vld [vmem:[%s4] sm:$0x3]
    %v193 = vlaneseq
    %v194 = vshrl.u32 %v193, 7
    %v195 = vsub.s32 0, %v194
    %v196 = vrot.slane %v191, %v195
    %v197 = vlaneseq
    %v198 = vshrl.u32 %v197, 7
    %v199 = vsub.s32 1, %v198
    %v200 = vrot.slane %v191, %v199
    %203 = vmatprep.subr.mxu0 %v160
    %204 = vmatpush1.msra.mxu0 %v159
    %205 = vmatprep.subr.mxu0 %v162
    %206 = vmatpush1.msra.mxu0 %v161
    %207 = vmatprep.subr.mxu0 %v164
    %208 = vmatpush1.msra.mxu0 %v163
    %209 = vmatprep.subr.mxu0 %v166
    %210 = vmatpush1.msra.mxu0 %v165
    %211 = vmatprep.subr.mxu0 %v168
    %212 = vmatpush1.msra.mxu0 %v167
    %213 = vmatprep.subr.mxu0 %v170
    %214 = vmatpush1.msra.mxu0 %v169
    %215 = vmatprep.subr.mxu0 %v172
    %216 = vmatpush1.msra.mxu0 %v171
    %217 = vmatprep.subr.mxu0 %v174
    %218 = vmatpush1.msra.mxu0 %v173
    %219 = vmatprep.subr.mxu0 %v176
    %220 = vmatpush1.msra.mxu0 %v175
    %221 = vmatprep.subr.mxu0 %v178
    %222 = vmatpush1.msra.mxu0 %v177
    %223 = vmatprep.subr.mxu0 %v180
    %224 = vmatpush1.msra.mxu0 %v179
    %225 = vmatprep.subr.mxu0 %v182
    %226 = vmatpush1.msra.mxu0 %v181
    %227 = vmatprep.subr.mxu0 %v184
    %228 = vmatpush1.msra.mxu0 %v183
    %229 = vmatprep.subr.mxu0 %v186
    %230 = vmatpush1.msra.mxu0 %v185
    %231 = vmatprep.subr.mxu0 %v188
    %232 = vmatpush1.msra.mxu0 %v187
    %233 = vmatprep.subr.mxu0 %v190
    %234 = vmatpush1.msra.mxu0 %v189
    %235 = vmatprep.subr.mxu0 0.0
    %236 = vmatpush1.msra.mxu0 0.0
    %237 = vmatprep.subr.mxu0 0.0
    %238 = vmatpush1.msra.mxu0 0.0
    %239 = vmatprep.subr.mxu0 0.0
    %240 = vmatpush1.msra.mxu0 0.0
    %241 = vmatprep.subr.mxu0 0.0
    %242 = vmatpush1.msra.mxu0 0.0
    %243 = vmatprep.subr.mxu0 0.0
    %244 = vmatpush1.msra.mxu0 0.0
    %245 = vmatprep.subr.mxu0 0.0
    %246 = vmatpush1.msra.mxu0 0.0
    %247 = vmatprep.subr.mxu0 0.0
    %248 = vmatpush1.msra.mxu0 0.0
    %249 = vmatprep.subr.mxu0 0.0
    %250 = vmatpush1.msra.mxu0 0.0
    %251 = vmatprep.subr.mxu0 0.0
    %252 = vmatpush1.msra.mxu0 0.0
    %253 = vmatprep.subr.mxu0 0.0
    %254 = vmatpush1.msra.mxu0 0.0
    %255 = vmatprep.subr.mxu0 0.0
    %256 = vmatpush1.msra.mxu0 0.0
    %257 = vmatprep.subr.mxu0 0.0
    %258 = vmatpush1.msra.mxu0 0.0
    %259 = vmatprep.subr.mxu0 0.0
    %260 = vmatpush1.msra.mxu0 0.0
    %261 = vmatprep.subr.mxu0 0.0
    %262 = vmatpush1.msra.mxu0 0.0
    %263 = vmatprep.subr.mxu0 0.0
    %264 = vmatpush1.msra.mxu0 0.0
    %265 = vmatprep.subr.mxu0 0.0
    %266 = vmatpush1.msra.mxu0 0.0
    %267 = vmatprep.mubr.f32.mxu0 0.0
    %268 = vmatmul.mubr.f32.gmra.mrb[0].mxu0 %v158
    %v269 = vpop.f32.mrb[0].mxu0
    %v270 = vadd.f32 %v196, %v269
    %v271 = vpop.f32.mrb[0].mxu0
    %v272 = vadd.f32 %v200, %v271
    %273 = vdwg.mxu0
    %v274 = vmax.f32 %v270, 0.0
    %v275 = vmax.f32 %v272, 0.0
    %v276 = vld [vmem:[#allocation10] sm:$0xff]
    %v277 = vld [vmem:[#allocation10 + $0x8] sm:$0xff]
    %v278 = vld [vmem:[#allocation10 + $0x10] sm:$0xff]
    %v279 = vld [vmem:[#allocation10 + $0x18] sm:$0xff]
    %v280 = vld [vmem:[#allocation10 + $0x20] sm:$0xff]
    %v281 = vld [vmem:[#allocation10 + $0x28] sm:$0xff]
    %v282 = vld [vmem:[#allocation10 + $0x30] sm:$0xff]
    %v283 = vld [vmem:[#allocation10 + $0x38] sm:$0xff]
    %v284 = vld [vmem:[#allocation10 + $0x40] sm:$0xff]
    %v285 = vld [vmem:[#allocation10 + $0x48] sm:$0xff]
    %v286 = vld [vmem:[#allocation10 + $0x50] sm:$0xff]
    %v287 = vld [vmem:[#allocation10 + $0x58] sm:$0xff]
    %v288 = vld [vmem:[#allocation10 + $0x60] sm:$0xff]
    %v289 = vld [vmem:[#allocation10 + $0x68] sm:$0xff]
    %v290 = vld [vmem:[#allocation10 + $0x70] sm:$0xff]
    %v291 = vld [vmem:[#allocation10 + $0x78] sm:$0xff]
    %292 = vmatprep.subr.mxu0 0.0
    %293 = vmatpush1.msra.mxu0 %v276
    %294 = vmatprep.subr.mxu0 0.0
    %295 = vmatpush1.msra.mxu0 %v277
    %296 = vmatprep.subr.mxu0 0.0
    %297 = vmatpush1.msra.mxu0 %v278
    %298 = vmatprep.subr.mxu0 0.0
    %299 = vmatpush1.msra.mxu0 %v279
    %300 = vmatprep.subr.mxu0 0.0
    %301 = vmatpush1.msra.mxu0 %v280
    %302 = vmatprep.subr.mxu0 0.0
    %303 = vmatpush1.msra.mxu0 %v281
    %304 = vmatprep.subr.mxu0 0.0
    %305 = vmatpush1.msra.mxu0 %v282
    %306 = vmatprep.subr.mxu0 0.0
    %307 = vmatpush1.msra.mxu0 %v283
    %308 = vmatprep.subr.mxu0 0.0
    %309 = vmatpush1.msra.mxu0 %v284
    %310 = vmatprep.subr.mxu0 0.0
    %311 = vmatpush1.msra.mxu0 %v285
    %312 = vmatprep.subr.mxu0 0.0
    %313 = vmatpush1.msra.mxu0 %v286
    %314 = vmatprep.subr.mxu0 0.0
    %315 = vmatpush1.msra.mxu0 %v287
    %316 = vmatprep.subr.mxu0 0.0
    %317 = vmatpush1.msra.mxu0 %v288
    %318 = vmatprep.subr.mxu0 0.0
    %319 = vmatpush1.msra.mxu0 %v289
    %320 = vmatprep.subr.mxu0 0.0
    %321 = vmatpush1.msra.mxu0 %v290
    %322 = vmatprep.subr.mxu0 0.0
    %323 = vmatpush1.msra.mxu0 %v291
    %324 = vmatprep.subr.mxu0 0.0
    %325 = vmatpush1.msra.mxu0 0.0
    %326 = vmatprep.subr.mxu0 0.0
    %327 = vmatpush1.msra.mxu0 0.0
    %328 = vmatprep.subr.mxu0 0.0
    %329 = vmatpush1.msra.mxu0 0.0
    %330 = vmatprep.subr.mxu0 0.0
    %331 = vmatpush1.msra.mxu0 0.0
    %332 = vmatprep.subr.mxu0 0.0
    %333 = vmatpush1.msra.mxu0 0.0
    %334 = vmatprep.subr.mxu0 0.0
    %335 = vmatpush1.msra.mxu0 0.0
    %336 = vmatprep.subr.mxu0 0.0
    %337 = vmatpush1.msra.mxu0 0.0
    %338 = vmatprep.subr.mxu0 0.0
    %339 = vmatpush1.msra.mxu0 0.0
    %340 = vmatprep.subr.mxu0 0.0
    %341 = vmatpush1.msra.mxu0 0.0
    %342 = vmatprep.subr.mxu0 0.0
    %343 = vmatpush1.msra.mxu0 0.0
    %344 = vmatprep.subr.mxu0 0.0
    %345 = vmatpush1.msra.mxu0 0.0
    %346 = vmatprep.subr.mxu0 0.0
    %347 = vmatpush1.msra.mxu0 0.0
    %348 = vmatprep.subr.mxu0 0.0
    %349 = vmatpush1.msra.mxu0 0.0
    %350 = vmatprep.subr.mxu0 0.0
    %351 = vmatpush1.msra.mxu0 0.0
    %352 = vmatprep.subr.mxu0 0.0
    %353 = vmatpush1.msra.mxu0 0.0
    %354 = vmatprep.subr.mxu0 0.0
    %355 = vmatpush1.msra.mxu0 0.0
    %356 = vmatprep.mubr.f32.mxu0 0.0
    %357 = vmatmul.mubr.f32.gmra.mrb[0].mxu0 %v274
    %v358 = vpop.f32.mrb[0].mxu0
    %v359 = vadd.f32 0.0, %v358
    %v360 = vpop.f32.mrb[0].mxu0
    %361 = vdwg.mxu0
    %v362 = vld [vmem:[#allocation11] sm:$0xff]
    %v363 = vld [vmem:[#allocation11 + $0x8] sm:$0xff]
    %v364 = vld [vmem:[#allocation11 + $0x10] sm:$0xff]
    %v365 = vld [vmem:[#allocation11 + $0x18] sm:$0xff]
    %v366 = vld [vmem:[#allocation11 + $0x20] sm:$0xff]
    %v367 = vld [vmem:[#allocation11 + $0x28] sm:$0xff]
    %v368 = vld [vmem:[#allocation11 + $0x30] sm:$0xff]
    %v369 = vld [vmem:[#allocation11 + $0x38] sm:$0xff]
    %v370 = vld [vmem:[#allocation11 + $0x40] sm:$0xff]
    %v371 = vld [vmem:[#allocation11 + $0x48] sm:$0xff]
    %v372 = vld [vmem:[#allocation11 + $0x50] sm:$0xff]
    %v373 = vld [vmem:[#allocation11 + $0x58] sm:$0xff]
    %v374 = vld [vmem:[#allocation11 + $0x60] sm:$0xff]
    %v375 = vld [vmem:[#allocation11 + $0x68] sm:$0xff]
    %v376 = vld [vmem:[#allocation11 + $0x70] sm:$0xff]
    %v377 = vld [vmem:[#allocation11 + $0x78] sm:$0xff]
    %v378 = vld [vmem:[#allocation11 + $0x80] sm:$0xff]
    %v379 = vld [vmem:[#allocation11 + $0x88] sm:$0xff]
    %v380 = vld [vmem:[#allocation11 + $0x90] sm:$0xff]
    %v381 = vld [vmem:[#allocation11 + $0x98] sm:$0xff]
    %v382 = vld [vmem:[#allocation11 + $0xa0] sm:$0xff]
    %v383 = vld [vmem:[#allocation11 + $0xa8] sm:$0xff]
    %v384 = vld [vmem:[#allocation11 + $0xb0] sm:$0xff]
    %v385 = vld [vmem:[#allocation11 + $0xb8] sm:$0xff]
    %v386 = vld [vmem:[#allocation11 + $0xc0] sm:$0xff]
    %v387 = vld [vmem:[#allocation11 + $0xc8] sm:$0xff]
    %v388 = vld [vmem:[#allocation11 + $0xd0] sm:$0xff]
    %v389 = vld [vmem:[#allocation11 + $0xd8] sm:$0xff]
    %v390 = vld [vmem:[#allocation11 + $0xe0] sm:$0xff]
    %v391 = vld [vmem:[#allocation11 + $0xe8] sm:$0xff]
    %v392 = vld [vmem:[#allocation11 + $0xf0] sm:$0xff]
    %v393 = vld [vmem:[#allocation11 + $0xf8] sm:$0xff]
    %v394 = vld [vmem:[#allocation11 + $0x100] sm:$0xff]
    %v395 = vld [vmem:[#allocation11 + $0x108] sm:$0xff]
    %v396 = vld [vmem:[#allocation11 + $0x110] sm:$0xff]
    %v397 = vld [vmem:[#allocation11 + $0x118] sm:$0xff]
    %v398 = vld [vmem:[#allocation11 + $0x120] sm:$0xff]
    %v399 = vld [vmem:[#allocation11 + $0x128] sm:$0xff]
    %v400 = vld [vmem:[#allocation11 + $0x130] sm:$0xff]
    %v401 = vld [vmem:[#allocation11 + $0x138] sm:$0xff]
    %v402 = vld [vmem:[#allocation11 + $0x140] sm:$0xff]
    %v403 = vld [vmem:[#allocation11 + $0x148] sm:$0xff]
    %v404 = vld [vmem:[#allocation11 + $0x150] sm:$0xff]
    %v405 = vld [vmem:[#allocation11 + $0x158] sm:$0xff]
    %v406 = vld [vmem:[#allocation11 + $0x160] sm:$0xff]
    %v407 = vld [vmem:[#allocation11 + $0x168] sm:$0xff]
    %v408 = vld [vmem:[#allocation11 + $0x170] sm:$0xff]
    %v409 = vld [vmem:[#allocation11 + $0x178] sm:$0xff]
    %v410 = vld [vmem:[#allocation11 + $0x180] sm:$0xff]
    %v411 = vld [vmem:[#allocation11 + $0x188] sm:$0xff]
    %v412 = vld [vmem:[#allocation11 + $0x190] sm:$0xff]
    %v413 = vld [vmem:[#allocation11 + $0x198] sm:$0xff]
    %v414 = vld [vmem:[#allocation11 + $0x1a0] sm:$0xff]
    %v415 = vld [vmem:[#allocation11 + $0x1a8] sm:$0xff]
    %v416 = vld [vmem:[#allocation11 + $0x1b0] sm:$0xff]
    %v417 = vld [vmem:[#allocation11 + $0x1b8] sm:$0xff]
    %v418 = vld [vmem:[#allocation11 + $0x1c0] sm:$0xff]
    %v419 = vld [vmem:[#allocation11 + $0x1c8] sm:$0xff]
    %v420 = vld [vmem:[#allocation11 + $0x1d0] sm:$0xff]
    %v421 = vld [vmem:[#allocation11 + $0x1d8] sm:$0xff]
    %v422 = vld [vmem:[#allocation11 + $0x1e0] sm:$0xff]
    %v423 = vld [vmem:[#allocation11 + $0x1e8] sm:$0xff]
    %v424 = vld [vmem:[#allocation11 + $0x1f0] sm:$0xff]
    %v425 = vld [vmem:[#allocation11 + $0x1f8] sm:$0xff]
    %426 = vmatprep.subr.mxu0 %v363
    %427 = vmatpush1.msra.mxu0 %v362
    %428 = vmatprep.subr.mxu0 %v365
    %429 = vmatpush1.msra.mxu0 %v364
    %430 = vmatprep.subr.mxu0 %v367
    %431 = vmatpush1.msra.mxu0 %v366
    %432 = vmatprep.subr.mxu0 %v369
    %433 = vmatpush1.msra.mxu0 %v368
    %434 = vmatprep.subr.mxu0 %v371
    %435 = vmatpush1.msra.mxu0 %v370
    %436 = vmatprep.subr.mxu0 %v373
    %437 = vmatpush1.msra.mxu0 %v372
    %438 = vmatprep.subr.mxu0 %v375
    %439 = vmatpush1.msra.mxu0 %v374
    %440 = vmatprep.subr.mxu0 %v377
    %441 = vmatpush1.msra.mxu0 %v376
    %442 = vmatprep.subr.mxu0 %v379
    %443 = vmatpush1.msra.mxu0 %v378
    %444 = vmatprep.subr.mxu0 %v381
    %445 = vmatpush1.msra.mxu0 %v380
    %446 = vmatprep.subr.mxu0 %v383
    %447 = vmatpush1.msra.mxu0 %v382
    %448 = vmatprep.subr.mxu0 %v385
    %449 = vmatpush1.msra.mxu0 %v384
    %450 = vmatprep.subr.mxu0 %v387
    %451 = vmatpush1.msra.mxu0 %v386
    %452 = vmatprep.subr.mxu0 %v389
    %453 = vmatpush1.msra.mxu0 %v388
    %454 = vmatprep.subr.mxu0 %v391
    %455 = vmatpush1.msra.mxu0 %v390
    %456 = vmatprep.subr.mxu0 %v393
    %457 = vmatpush1.msra.mxu0 %v392
    %458 = vmatprep.subr.mxu0 %v395
    %459 = vmatpush1.msra.mxu0 %v394
    %460 = vmatprep.subr.mxu0 %v397
    %461 = vmatpush1.msra.mxu0 %v396
    %462 = vmatprep.subr.mxu0 %v399
    %463 = vmatpush1.msra.mxu0 %v398
    %464 = vmatprep.subr.mxu0 %v401
    %465 = vmatpush1.msra.mxu0 %v400
    %466 = vmatprep.subr.mxu0 %v403
    %467 = vmatpush1.msra.mxu0 %v402
    %468 = vmatprep.subr.mxu0 %v405
    %469 = vmatpush1.msra.mxu0 %v404
    %470 = vmatprep.subr.mxu0 %v407
    %471 = vmatpush1.msra.mxu0 %v406
    %472 = vmatprep.subr.mxu0 %v409
    %473 = vmatpush1.msra.mxu0 %v408
    %474 = vmatprep.subr.mxu0 %v411
    %475 = vmatpush1.msra.mxu0 %v410
    %476 = vmatprep.subr.mxu0 %v413
    %477 = vmatpush1.msra.mxu0 %v412
    %478 = vmatprep.subr.mxu0 %v415
    %479 = vmatpush1.msra.mxu0 %v414
    %480 = vmatprep.subr.mxu0 %v417
    %481 = vmatpush1.msra.mxu0 %v416
    %482 = vmatprep.subr.mxu0 %v419
    %483 = vmatpush1.msra.mxu0 %v418
    %484 = vmatprep.subr.mxu0 %v421
    %485 = vmatpush1.msra.mxu0 %v420
    %486 = vmatprep.subr.mxu0 %v423
    %487 = vmatpush1.msra.mxu0 %v422
    %488 = vmatprep.subr.mxu0 %v425
    %489 = vmatpush1.msra.mxu0 %v424
    %490 = vmatprep.mubr.f32.mxu0 %v275
    %491 = vmatmul.mubr.f32.gmra.mrb[0].mxu0 %v274
    %v492 = vpop.f32.mrb[0].mxu0
    %v493 = vadd.f32 0.0, %v492
    %v494 = vpop.f32.mrb[0].mxu0
    %v495 = vadd.f32 0.0, %v494
    %496 = vdwg.mxu0
    %v497 = vld [vmem:[#allocation13] sm:$0xff]
    %v498 = vld [vmem:[#allocation13 + $0x8] sm:$0xff]
    %v499 = vld [vmem:[#allocation13 + $0x10] sm:$0xff]
    %v500 = vld [vmem:[#allocation13 + $0x18] sm:$0xff]
    %v501 = vld [vmem:[#allocation13 + $0x20] sm:$0xff]
    %v502 = vld [vmem:[#allocation13 + $0x28] sm:$0xff]
    %v503 = vld [vmem:[#allocation13 + $0x30] sm:$0xff]
    %v504 = vld [vmem:[#allocation13 + $0x38] sm:$0xff]
    %v505 = vld [vmem:[#allocation13 + $0x40] sm:$0xff]
    %v506 = vld [vmem:[#allocation13 + $0x48] sm:$0xff]
    %v507 = vld [vmem:[#allocation13 + $0x50] sm:$0xff]
    %v508 = vld [vmem:[#allocation13 + $0x58] sm:$0xff]
    %v509 = vld [vmem:[#allocation13 + $0x60] sm:$0xff]
    %v510 = vld [vmem:[#allocation13 + $0x68] sm:$0xff]
    %v511 = vld [vmem:[#allocation13 + $0x70] sm:$0xff]
    %v512 = vld [vmem:[#allocation13 + $0x78] sm:$0xff]
    %v513 = vld [vmem:[#allocation13 + $0x80] sm:$0xff]
    %v514 = vld [vmem:[#allocation13 + $0x88] sm:$0xff]
    %v515 = vld [vmem:[#allocation13 + $0x90] sm:$0xff]
    %v516 = vld [vmem:[#allocation13 + $0x98] sm:$0xff]
    %v517 = vld [vmem:[#allocation13 + $0xa0] sm:$0xff]
    %v518 = vld [vmem:[#allocation13 + $0xa8] sm:$0xff]
    %v519 = vld [vmem:[#allocation13 + $0xb0] sm:$0xff]
    %v520 = vld [vmem:[#allocation13 + $0xb8] sm:$0xff]
    %v521 = vld [vmem:[#allocation13 + $0xc0] sm:$0xff]
    %v522 = vld [vmem:[#allocation13 + $0xc8] sm:$0xff]
    %v523 = vld [vmem:[#allocation13 + $0xd0] sm:$0xff]
    %v524 = vld [vmem:[#allocation13 + $0xd8] sm:$0xff]
    %v525 = vld [vmem:[#allocation13 + $0xe0] sm:$0xff]
    %v526 = vld [vmem:[#allocation13 + $0xe8] sm:$0xff]
    %v527 = vld [vmem:[#allocation13 + $0xf0] sm:$0xff]
    %v528 = vld [vmem:[#allocation13 + $0xf8] sm:$0xff]
    %v529 = vld [vmem:[#allocation13 + $0x100] sm:$0xff]
    %v530 = vld [vmem:[#allocation13 + $0x108] sm:$0xff]
    %v531 = vld [vmem:[#allocation13 + $0x110] sm:$0xff]
    %v532 = vld [vmem:[#allocation13 + $0x118] sm:$0xff]
    %v533 = vld [vmem:[#allocation13 + $0x120] sm:$0xff]
    %v534 = vld [vmem:[#allocation13 + $0x128] sm:$0xff]
    %v535 = vld [vmem:[#allocation13 + $0x130] sm:$0xff]
    %v536 = vld [vmem:[#allocation13 + $0x138] sm:$0xff]
    %v537 = vld [vmem:[#allocation13 + $0x140] sm:$0xff]
    %v538 = vld [vmem:[#allocation13 + $0x148] sm:$0xff]
    %v539 = vld [vmem:[#allocation13 + $0x150] sm:$0xff]
    %v540 = vld [vmem:[#allocation13 + $0x158] sm:$0xff]
    %v541 = vld [vmem:[#allocation13 + $0x160] sm:$0xff]
    %v542 = vld [vmem:[#allocation13 + $0x168] sm:$0xff]
    %v543 = vld [vmem:[#allocation13 + $0x170] sm:$0xff]
    %v544 = vld [vmem:[#allocation13 + $0x178] sm:$0xff]
    %v545 = vld [vmem:[#allocation13 + $0x180] sm:$0xff]
    %v546 = vld [vmem:[#allocation13 + $0x188] sm:$0xff]
    %v547 = vld [vmem:[#allocation13 + $0x190] sm:$0xff]
    %v548 = vld [vmem:[#allocation13 + $0x198] sm:$0xff]
    %v549 = vld [vmem:[#allocation13 + $0x1a0] sm:$0xff]
    %v550 = vld [vmem:[#allocation13 + $0x1a8] sm:$0xff]
    %v551 = vld [vmem:[#allocation13 + $0x1b0] sm:$0xff]
    %v552 = vld [vmem:[#allocation13 + $0x1b8] sm:$0xff]
    %v553 = vld [vmem:[#allocation13 + $0x1c0] sm:$0xff]
    %v554 = vld [vmem:[#allocation13 + $0x1c8] sm:$0xff]
    %v555 = vld [vmem:[#allocation13 + $0x1d0] sm:$0xff]
    %v556 = vld [vmem:[#allocation13 + $0x1d8] sm:$0xff]
    %v557 = vld [vmem:[#allocation13 + $0x1e0] sm:$0xff]
    %v558 = vld [vmem:[#allocation13 + $0x1e8] sm:$0xff]
    %v559 = vld [vmem:[#allocation13 + $0x1f0] sm:$0xff]
    %v560 = vld [vmem:[#allocation13 + $0x1f8] sm:$0xff]
    %561 = vmatprep.subr.mxu0 %v498
    %562 = vmatpush1.msra.mxu0 %v497
    %563 = vmatprep.subr.mxu0 %v500
    %564 = vmatpush1.msra.mxu0 %v499
    %565 = vmatprep.subr.mxu0 %v502
    %566 = vmatpush1.msra.mxu0 %v501
    %567 = vmatprep.subr.mxu0 %v504
    %568 = vmatpush1.msra.mxu0 %v503
    %569 = vmatprep.subr.mxu0 %v506
    %570 = vmatpush1.msra.mxu0 %v505
    %571 = vmatprep.subr.mxu0 %v508
    %572 = vmatpush1.msra.mxu0 %v507
    %573 = vmatprep.subr.mxu0 %v510
    %574 = vmatpush1.msra.mxu0 %v509
    %575 = vmatprep.subr.mxu0 %v512
    %576 = vmatpush1.msra.mxu0 %v511
    %577 = vmatprep.subr.mxu0 %v514
    %578 = vmatpush1.msra.mxu0 %v513
    %579 = vmatprep.subr.mxu0 %v516
    %580 = vmatpush1.msra.mxu0 %v515
    %581 = vmatprep.subr.mxu0 %v518
    %582 = vmatpush1.msra.mxu0 %v517
    %583 = vmatprep.subr.mxu0 %v520
    %584 = vmatpush1.msra.mxu0 %v519
    %585 = vmatprep.subr.mxu0 %v522
    %586 = vmatpush1.msra.mxu0 %v521
    %587 = vmatprep.subr.mxu0 %v524
    %588 = vmatpush1.msra.mxu0 %v523
    %589 = vmatprep.subr.mxu0 %v526
    %590 = vmatpush1.msra.mxu0 %v525
    %591 = vmatprep.subr.mxu0 %v528
    %592 = vmatpush1.msra.mxu0 %v527
    %593 = vmatprep.subr.mxu0 %v530
    %594 = vmatpush1.msra.mxu0 %v529
    %595 = vmatprep.subr.mxu0 %v532
    %596 = vmatpush1.msra.mxu0 %v531
    %597 = vmatprep.subr.mxu0 %v534
    %598 = vmatpush1.msra.mxu0 %v533
    %599 = vmatprep.subr.mxu0 %v536
    %600 = vmatpush1.msra.mxu0 %v535
    %601 = vmatprep.subr.mxu0 %v538
    %602 = vmatpush1.msra.mxu0 %v537
    %603 = vmatprep.subr.mxu0 %v540
    %604 = vmatpush1.msra.mxu0 %v539
    %605 = vmatprep.subr.mxu0 %v542
    %606 = vmatpush1.msra.mxu0 %v541
    %607 = vmatprep.subr.mxu0 %v544
    %608 = vmatpush1.msra.mxu0 %v543
    %609 = vmatprep.subr.mxu0 %v546
    %610 = vmatpush1.msra.mxu0 %v545
    %611 = vmatprep.subr.mxu0 %v548
    %612 = vmatpush1.msra.mxu0 %v547
    %613 = vmatprep.subr.mxu0 %v550
    %614 = vmatpush1.msra.mxu0 %v549
    %615 = vmatprep.subr.mxu0 %v552
    %616 = vmatpush1.msra.mxu0 %v551
    %617 = vmatprep.subr.mxu0 %v554
    %618 = vmatpush1.msra.mxu0 %v553
    %619 = vmatprep.subr.mxu0 %v556
    %620 = vmatpush1.msra.mxu0 %v555
    %621 = vmatprep.subr.mxu0 %v558
    %622 = vmatpush1.msra.mxu0 %v557
    %623 = vmatprep.subr.mxu0 %v560
    %624 = vmatpush1.msra.mxu0 %v559
    %625 = vmatprep.mubr.f32.mxu0 %v275
    %626 = vmatmul.mubr.f32.gmra.mrb[0].mxu0 %v274
    %v627 = vpop.f32.mrb[0].mxu0
    %v628 = vadd.f32 0.0, %v627
    %v629 = vpop.f32.mrb[0].mxu0
    %v630 = vadd.f32 0.0, %v629
    %631 = vdwg.mxu0
    %633 = vrot.lane.b32.xlu0 %v359, 112
    %v634 = vpop.permute.xlu0 %633
    %636 = vrot.lane.b32.xlu0 %v359, 96
    %v637 = vpop.permute.xlu0 %636
    %639 = vrot.lane.b32.xlu0 %v359, 80
    %v640 = vpop.permute.xlu0 %639
    %642 = vrot.lane.b32.xlu0 %v359, 64
    %v643 = vpop.permute.xlu0 %642
    %645 = vrot.lane.b32.xlu0 %v359, 48
    %v646 = vpop.permute.xlu0 %645
    %648 = vrot.lane.b32.xlu0 %v359, 32
    %v649 = vpop.permute.xlu0 %648
    %651 = vrot.lane.b32.xlu0 %v359, 16
    %v652 = vpop.permute.xlu0 %651
    %v654 = vcombine.low %v359, %v637
    %v655 = vcombine.high %v359, %v637
    %v657 = vunpack.c.l.s4 1983009808
    %v658 = vunpack.c.0.s8 %v657
    %v659 = vlaneseq
    %v660 = vshrl.u32 %v659, 7
    %v661 = vsub.s32 %v658, %v660
    %v662 = vrot.slane %v654, %v661
    %v664 = vunpack.c.l.s4 1983009808
    %v665 = vunpack.c.0.s8 %v664
    %v666 = vlaneseq
    %v667 = vshrl.u32 %v666, 7
    %v668 = vsub.s32 %v665, %v667
    %v669 = vrot.slane %v655, %v668
    %v670 = vcombine.low %v634, %v640
    %v671 = vcombine.high %v634, %v640
    %v673 = vunpack.c.l.s4 1983009808
    %v674 = vunpack.c.0.s8 %v673
    %v675 = vlaneseq
    %v676 = vshrl.u32 %v675, 7
    %v677 = vsub.s32 %v674, %v676
    %v678 = vrot.slane %v670, %v677
    %v680 = vunpack.c.l.s4 1983009808
    %v681 = vunpack.c.0.s8 %v680
    %v682 = vlaneseq
    %v683 = vshrl.u32 %v682, 7
    %v684 = vsub.s32 %v681, %v683
    %v685 = vrot.slane %v671, %v684
    %v686 = vcombine.low %v643, %v649
    %v687 = vcombine.high %v643, %v649
    %v689 = vunpack.c.l.s4 1983009808
    %v690 = vunpack.c.0.s8 %v689
    %v691 = vlaneseq
    %v692 = vshrl.u32 %v691, 7
    %v693 = vsub.s32 %v690, %v692
    %v694 = vrot.slane %v686, %v693
    %v696 = vunpack.c.l.s4 1983009808
    %v697 = vunpack.c.0.s8 %v696
    %v698 = vlaneseq
    %v699 = vshrl.u32 %v698, 7
    %v700 = vsub.s32 %v697, %v699
    %v701 = vrot.slane %v687, %v700
    %v702 = vcombine.low %v646, %v652
    %v703 = vcombine.high %v646, %v652
    %v705 = vunpack.c.l.s4 1983009808
    %v706 = vunpack.c.0.s8 %v705
    %v707 = vlaneseq
    %v708 = vshrl.u32 %v707, 7
    %v709 = vsub.s32 %v706, %v708
    %v710 = vrot.slane %v702, %v709
    %v712 = vunpack.c.l.s4 1983009808
    %v713 = vunpack.c.0.s8 %v712
    %v714 = vlaneseq
    %v715 = vshrl.u32 %v714, 7
    %v716 = vsub.s32 %v713, %v715
    %v717 = vrot.slane %v703, %v716
    %v718 = vcombine.low %v662, %v678
    %v719 = vcombine.high %v662, %v678
    %v721 = vunpack.c.l.s4 1934713408
    %v722 = vunpack.c.0.s8 %v721
    %v723 = vlaneseq
    %v724 = vshrl.u32 %v723, 7
    %v725 = vsub.s32 %v722, %v724
    %v726 = vrot.slane %v718, %v725
    %v728 = vunpack.c.l.s4 1934713408
    %v729 = vunpack.c.0.s8 %v728
    %v730 = vlaneseq
    %v731 = vshrl.u32 %v730, 7
    %v732 = vsub.s32 %v729, %v731
    %v733 = vrot.slane %v719, %v732
    %v734 = vcombine.low %v669, %v685
    %v735 = vcombine.high %v669, %v685
    %v737 = vunpack.c.l.s4 1934713408
    %v738 = vunpack.c.0.s8 %v737
    %v739 = vlaneseq
    %v740 = vshrl.u32 %v739, 7
    %v741 = vsub.s32 %v738, %v740
    %v742 = vrot.slane %v734, %v741
    %v744 = vunpack.c.l.s4 1934713408
    %v745 = vunpack.c.0.s8 %v744
    %v746 = vlaneseq
    %v747 = vshrl.u32 %v746, 7
    %v748 = vsub.s32 %v745, %v747
    %v749 = vrot.slane %v735, %v748
    %v750 = vcombine.low %v694, %v710
    %v751 = vcombine.high %v694, %v710
    %v753 = vunpack.c.l.s4 1934713408
    %v754 = vunpack.c.0.s8 %v753
    %v755 = vlaneseq
    %v756 = vshrl.u32 %v755, 7
    %v757 = vsub.s32 %v754, %v756
    %v758 = vrot.slane %v750, %v757
    %v760 = vunpack.c.l.s4 1934713408
    %v761 = vunpack.c.0.s8 %v760
    %v762 = vlaneseq
    %v763 = vshrl.u32 %v762, 7
    %v764 = vsub.s32 %v761, %v763
    %v765 = vrot.slane %v751, %v764
    %v766 = vcombine.low %v701, %v717
    %v767 = vcombine.high %v701, %v717
    %v769 = vunpack.c.l.s4 1934713408
    %v770 = vunpack.c.0.s8 %v769
    %v771 = vlaneseq
    %v772 = vshrl.u32 %v771, 7
    %v773 = vsub.s32 %v770, %v772
    %v774 = vrot.slane %v766, %v773
    %v776 = vunpack.c.l.s4 1934713408
    %v777 = vunpack.c.0.s8 %v776
    %v778 = vlaneseq
    %v779 = vshrl.u32 %v778, 7
    %v780 = vsub.s32 %v777, %v779
    %v781 = vrot.slane %v767, %v780
    %v782 = vcombine.low %v726, %v758
    %v783 = vcombine.high %v726, %v758
    %v784 = vcombine.low %v733, %v765
    %v785 = vcombine.high %v733, %v765
    %v786 = vcombine.low %v742, %v774
    %v787 = vcombine.high %v742, %v774
    %v788 = vcombine.low %v749, %v781
    %v789 = vcombine.high %v749, %v781
    %791 = vrot.lane.b32.xlu0 %v493, 112
    %v792 = vpop.permute.xlu0 %791
    %794 = vrot.lane.b32.xlu0 %v493, 96
    %v795 = vpop.permute.xlu0 %794
    %797 = vrot.lane.b32.xlu0 %v493, 80
    %v798 = vpop.permute.xlu0 %797
    %800 = vrot.lane.b32.xlu0 %v493, 64
    %v801 = vpop.permute.xlu0 %800
    %803 = vrot.lane.b32.xlu0 %v493, 48
    %v804 = vpop.permute.xlu0 %803
    %806 = vrot.lane.b32.xlu0 %v493, 32
    %v807 = vpop.permute.xlu0 %806
    %809 = vrot.lane.b32.xlu0 %v493, 16
    %v810 = vpop.permute.xlu0 %809
    %813 = vrot.lane.b32.xlu0 %v495, 112
    %v814 = vpop.permute.xlu0 %813
    %816 = vrot.lane.b32.xlu0 %v495, 96
    %v817 = vpop.permute.xlu0 %816
    %819 = vrot.lane.b32.xlu0 %v495, 80
    %v820 = vpop.permute.xlu0 %819
    %822 = vrot.lane.b32.xlu0 %v495, 64
    %v823 = vpop.permute.xlu0 %822
    %825 = vrot.lane.b32.xlu0 %v495, 48
    %v826 = vpop.permute.xlu0 %825
    %828 = vrot.lane.b32.xlu0 %v495, 32
    %v829 = vpop.permute.xlu0 %828
    %831 = vrot.lane.b32.xlu0 %v495, 16
    %v832 = vpop.permute.xlu0 %831
    %v834 = vcombine.low %v493, %v795
    %v835 = vcombine.high %v493, %v795
    %v837 = vunpack.c.l.s4 1983009808
    %v838 = vunpack.c.0.s8 %v837
    %v839 = vlaneseq
    %v840 = vshrl.u32 %v839, 7
    %v841 = vsub.s32 %v838, %v840
    %v842 = vrot.slane %v834, %v841
    %v844 = vunpack.c.l.s4 1983009808
    %v845 = vunpack.c.0.s8 %v844
    %v846 = vlaneseq
    %v847 = vshrl.u32 %v846, 7
    %v848 = vsub.s32 %v845, %v847
    %v849 = vrot.slane %v835, %v848
    %v850 = vcombine.low %v792, %v798
    %v851 = vcombine.high %v792, %v798
    %v853 = vunpack.c.l.s4 1983009808
    %v854 = vunpack.c.0.s8 %v853
    %v855 = vlaneseq
    %v856 = vshrl.u32 %v855, 7
    %v857 = vsub.s32 %v854, %v856
    %v858 = vrot.slane %v850, %v857
    %v860 = vunpack.c.l.s4 1983009808
    %v861 = vunpack.c.0.s8 %v860
    %v862 = vlaneseq
    %v863 = vshrl.u32 %v862, 7
    %v864 = vsub.s32 %v861, %v863
    %v865 = vrot.slane %v851, %v864
    %v866 = vcombine.low %v801, %v807
    %v867 = vcombine.high %v801, %v807
    %v869 = vunpack.c.l.s4 1983009808
    %v870 = vunpack.c.0.s8 %v869
    %v871 = vlaneseq
    %v872 = vshrl.u32 %v871, 7
    %v873 = vsub.s32 %v870, %v872
    %v874 = vrot.slane %v866, %v873
    %v876 = vunpack.c.l.s4 1983009808
    %v877 = vunpack.c.0.s8 %v876
    %v878 = vlaneseq
    %v879 = vshrl.u32 %v878, 7
    %v880 = vsub.s32 %v877, %v879
    %v881 = vrot.slane %v867, %v880
    %v882 = vcombine.low %v804, %v810
    %v883 = vcombine.high %v804, %v810
    %v885 = vunpack.c.l.s4 1983009808
    %v886 = vunpack.c.0.s8 %v885
    %v887 = vlaneseq
    %v888 = vshrl.u32 %v887, 7
    %v889 = vsub.s32 %v886, %v888
    %v890 = vrot.slane %v882, %v889
    %v892 = vunpack.c.l.s4 1983009808
    %v893 = vunpack.c.0.s8 %v892
    %v894 = vlaneseq
    %v895 = vshrl.u32 %v894, 7
    %v896 = vsub.s32 %v893, %v895
    %v897 = vrot.slane %v883, %v896
    %v898 = vcombine.low %v842, %v858
    %v899 = vcombine.high %v842, %v858
    %v901 = vunpack.c.l.s4 1934713408
    %v902 = vunpack.c.0.s8 %v901
    %v903 = vlaneseq
    %v904 = vshrl.u32 %v903, 7
    %v905 = vsub.s32 %v902, %v904
    %v906 = vrot.slane %v898, %v905
    %v908 = vunpack.c.l.s4 1934713408
    %v909 = vunpack.c.0.s8 %v908
    %v910 = vlaneseq
    %v911 = vshrl.u32 %v910, 7
    %v912 = vsub.s32 %v909, %v911
    %v913 = vrot.slane %v899, %v912
    %v914 = vcombine.low %v849, %v865
    %v915 = vcombine.high %v849, %v865
    %v917 = vunpack.c.l.s4 1934713408
    %v918 = vunpack.c.0.s8 %v917
    %v919 = vlaneseq
    %v920 = vshrl.u32 %v919, 7
    %v921 = vsub.s32 %v918, %v920
    %v922 = vrot.slane %v914, %v921
    %v924 = vunpack.c.l.s4 1934713408
    %v925 = vunpack.c.0.s8 %v924
    %v926 = vlaneseq
    %v927 = vshrl.u32 %v926, 7
    %v928 = vsub.s32 %v925, %v927
    %v929 = vrot.slane %v915, %v928
    %v930 = vcombine.low %v874, %v890
    %v931 = vcombine.high %v874, %v890
    %v933 = vunpack.c.l.s4 1934713408
    %v934 = vunpack.c.0.s8 %v933
    %v935 = vlaneseq
    %v936 = vshrl.u32 %v935, 7
    %v937 = vsub.s32 %v934, %v936
    %v938 = vrot.slane %v930, %v937
    %v940 = vunpack.c.l.s4 1934713408
    %v941 = vunpack.c.0.s8 %v940
    %v942 = vlaneseq
    %v943 = vshrl.u32 %v942, 7
    %v944 = vsub.s32 %v941, %v943
    %v945 = vrot.slane %v931, %v944
    %v946 = vcombine.low %v881, %v897
    %v947 = vcombine.high %v881, %v897
    %v949 = vunpack.c.l.s4 1934713408
    %v950 = vunpack.c.0.s8 %v949
    %v951 = vlaneseq
    %v952 = vshrl.u32 %v951, 7
    %v953 = vsub.s32 %v950, %v952
    %v954 = vrot.slane %v946, %v953
    %v956 = vunpack.c.l.s4 1934713408
    %v957 = vunpack.c.0.s8 %v956
    %v958 = vlaneseq
    %v959 = vshrl.u32 %v958, 7
    %v960 = vsub.s32 %v957, %v959
    %v961 = vrot.slane %v947, %v960
    %v962 = vcombine.low %v906, %v938
    %v963 = vcombine.high %v906, %v938
    %v964 = vcombine.low %v913, %v945
    %v965 = vcombine.high %v913, %v945
    %v966 = vcombine.low %v922, %v954
    %v967 = vcombine.high %v922, %v954
    %v968 = vcombine.low %v929, %v961
    %v969 = vcombine.high %v929, %v961
    %v970 = vcombine.low %v495, %v817
    %v971 = vcombine.high %v495, %v817
    %v973 = vunpack.c.l.s4 1983009808
    %v974 = vunpack.c.0.s8 %v973
    %v975 = vlaneseq
    %v976 = vshrl.u32 %v975, 7
    %v977 = vsub.s32 %v974, %v976
    %v978 = vrot.slane %v970, %v977
    %v980 = vunpack.c.l.s4 1983009808
    %v981 = vunpack.c.0.s8 %v980
    %v982 = vlaneseq
    %v983 = vshrl.u32 %v982, 7
    %v984 = vsub.s32 %v981, %v983
    %v985 = vrot.slane %v971, %v984
    %v986 = vcombine.low %v814, %v820
    %v987 = vcombine.high %v814, %v820
    %v989 = vunpack.c.l.s4 1983009808
    %v990 = vunpack.c.0.s8 %v989
    %v991 = vlaneseq
    %v992 = vshrl.u32 %v991, 7
    %v993 = vsub.s32 %v990, %v992
    %v994 = vrot.slane %v986, %v993
    %v996 = vunpack.c.l.s4 1983009808
    %v997 = vunpack.c.0.s8 %v996
    %v998 = vlaneseq
    %v999 = vshrl.u32 %v998, 7
    %v1000 = vsub.s32 %v997, %v999
    %v1001 = vrot.slane %v987, %v1000
    %v1002 = vcombine.low %v823, %v829
    %v1003 = vcombine.high %v823, %v829
    %v1005 = vunpack.c.l.s4 1983009808
    %v1006 = vunpack.c.0.s8 %v1005
    %v1007 = vlaneseq
    %v1008 = vshrl.u32 %v1007, 7
    %v1009 = vsub.s32 %v1006, %v1008
    %v1010 = vrot.slane %v1002, %v1009
    %v1012 = vunpack.c.l.s4 1983009808
    %v1013 = vunpack.c.0.s8 %v1012
    %v1014 = vlaneseq
    %v1015 = vshrl.u32 %v1014, 7
    %v1016 = vsub.s32 %v1013, %v1015
    %v1017 = vrot.slane %v1003, %v1016
    %v1018 = vcombine.low %v826, %v832
    %v1019 = vcombine.high %v826, %v832
    %v1021 = vunpack.c.l.s4 1983009808
    %v1022 = vunpack.c.0.s8 %v1021
    %v1023 = vlaneseq
    %v1024 = vshrl.u32 %v1023, 7
    %v1025 = vsub.s32 %v1022, %v1024
    %v1026 = vrot.slane %v1018, %v1025
    %v1028 = vunpack.c.l.s4 1983009808
    %v1029 = vunpack.c.0.s8 %v1028
    %v1030 = vlaneseq
    %v1031 = vshrl.u32 %v1030, 7
    %v1032 = vsub.s32 %v1029, %v1031
    %v1033 = vrot.slane %v1019, %v1032
    %v1034 = vcombine.low %v978, %v994
    %v1035 = vcombine.high %v978, %v994
    %v1037 = vunpack.c.l.s4 1934713408
    %v1038 = vunpack.c.0.s8 %v1037
    %v1039 = vlaneseq
    %v1040 = vshrl.u32 %v1039, 7
    %v1041 = vsub.s32 %v1038, %v1040
    %v1042 = vrot.slane %v1034, %v1041
    %v1044 = vunpack.c.l.s4 1934713408
    %v1045 = vunpack.c.0.s8 %v1044
    %v1046 = vlaneseq
    %v1047 = vshrl.u32 %v1046, 7
    %v1048 = vsub.s32 %v1045, %v1047
    %v1049 = vrot.slane %v1035, %v1048
    %v1050 = vcombine.low %v985, %v1001
    %v1051 = vcombine.high %v985, %v1001
    %v1053 = vunpack.c.l.s4 1934713408
    %v1054 = vunpack.c.0.s8 %v1053
    %v1055 = vlaneseq
    %v1056 = vshrl.u32 %v1055, 7
    %v1057 = vsub.s32 %v1054, %v1056
    %v1058 = vrot.slane %v1050, %v1057
    %v1060 = vunpack.c.l.s4 1934713408
    %v1061 = vunpack.c.0.s8 %v1060
    %v1062 = vlaneseq
    %v1063 = vshrl.u32 %v1062, 7
    %v1064 = vsub.s32 %v1061, %v1063
    %v1065 = vrot.slane %v1051, %v1064
    %v1066 = vcombine.low %v1010, %v1026
    %v1067 = vcombine.high %v1010, %v1026
    %v1069 = vunpack.c.l.s4 1934713408
    %v1070 = vunpack.c.0.s8 %v1069
    %v1071 = vlaneseq
    %v1072 = vshrl.u32 %v1071, 7
    %v1073 = vsub.s32 %v1070, %v1072
    %v1074 = vrot.slane %v1066, %v1073
    %v1076 = vunpack.c.l.s4 1934713408
    %v1077 = vunpack.c.0.s8 %v1076
    %v1078 = vlaneseq
    %v1079 = vshrl.u32 %v1078, 7
    %v1080 = vsub.s32 %v1077, %v1079
    %v1081 = vrot.slane %v1067, %v1080
    %v1082 = vcombine.low %v1017, %v1033
    %v1083 = vcombine.high %v1017, %v1033
    %v1085 = vunpack.c.l.s4 1934713408
    %v1086 = vunpack.c.0.s8 %v1085
    %v1087 = vlaneseq
    %v1088 = vshrl.u32 %v1087, 7
    %v1089 = vsub.s32 %v1086, %v1088
    %v1090 = vrot.slane %v1082, %v1089
    %v1092 = vunpack.c.l.s4 1934713408
    %v1093 = vunpack.c.0.s8 %v1092
    %v1094 = vlaneseq
    %v1095 = vshrl.u32 %v1094, 7
    %v1096 = vsub.s32 %v1093, %v1095
    %v1097 = vrot.slane %v1083, %v1096
    %v1098 = vcombine.low %v1042, %v1074
    %v1099 = vcombine.high %v1042, %v1074
    %v1100 = vcombine.low %v1049, %v1081
    %v1101 = vcombine.high %v1049, %v1081
    %v1102 = vcombine.low %v1058, %v1090
    %v1103 = vcombine.high %v1058, %v1090
    %v1104 = vcombine.low %v1065, %v1097
    %v1105 = vcombine.high %v1065, %v1097
    %1107 = vrot.lane.b32.xlu0 %v628, 112
    %v1108 = vpop.permute.xlu0 %1107
    %1110 = vrot.lane.b32.xlu0 %v628, 96
    %v1111 = vpop.permute.xlu0 %1110
    %1113 = vrot.lane.b32.xlu0 %v628, 80
    %v1114 = vpop.permute.xlu0 %1113
    %1116 = vrot.lane.b32.xlu0 %v628, 64
    %v1117 = vpop.permute.xlu0 %1116
    %1119 = vrot.lane.b32.xlu0 %v628, 48
    %v1120 = vpop.permute.xlu0 %1119
    %1122 = vrot.lane.b32.xlu0 %v628, 32
    %v1123 = vpop.permute.xlu0 %1122
    %1125 = vrot.lane.b32.xlu0 %v628, 16
    %v1126 = vpop.permute.xlu0 %1125
    %1129 = vrot.lane.b32.xlu0 %v630, 112
    %v1130 = vpop.permute.xlu0 %1129
    %1132 = vrot.lane.b32.xlu0 %v630, 96
    %v1133 = vpop.permute.xlu0 %1132
    %1135 = vrot.lane.b32.xlu0 %v630, 80
    %v1136 = vpop.permute.xlu0 %1135
    %1138 = vrot.lane.b32.xlu0 %v630, 64
    %v1139 = vpop.permute.xlu0 %1138
    %1141 = vrot.lane.b32.xlu0 %v630, 48
    %v1142 = vpop.permute.xlu0 %1141
    %1144 = vrot.lane.b32.xlu0 %v630, 32
    %v1145 = vpop.permute.xlu0 %1144
    %1147 = vrot.lane.b32.xlu0 %v630, 16
    %v1148 = vpop.permute.xlu0 %1147
    %v1150 = vcombine.low %v628, %v1111
    %v1151 = vcombine.high %v628, %v1111
    %v1153 = vunpack.c.l.s4 1983009808
    %v1154 = vunpack.c.0.s8 %v1153
    %v1155 = vlaneseq
    %v1156 = vshrl.u32 %v1155, 7
    %v1157 = vsub.s32 %v1154, %v1156
    %v1158 = vrot.slane %v1150, %v1157
    %v1160 = vunpack.c.l.s4 1983009808
    %v1161 = vunpack.c.0.s8 %v1160
    %v1162 = vlaneseq
    %v1163 = vshrl.u32 %v1162, 7
    %v1164 = vsub.s32 %v1161, %v1163
    %v1165 = vrot.slane %v1151, %v1164
    %v1166 = vcombine.low %v1108, %v1114
    %v1167 = vcombine.high %v1108, %v1114
    %v1169 = vunpack.c.l.s4 1983009808
    %v1170 = vunpack.c.0.s8 %v1169
    %v1171 = vlaneseq
    %v1172 = vshrl.u32 %v1171, 7
    %v1173 = vsub.s32 %v1170, %v1172
    %v1174 = vrot.slane %v1166, %v1173
    %v1176 = vunpack.c.l.s4 1983009808
    %v1177 = vunpack.c.0.s8 %v1176
    %v1178 = vlaneseq
    %v1179 = vshrl.u32 %v1178, 7
    %v1180 = vsub.s32 %v1177, %v1179
    %v1181 = vrot.slane %v1167, %v1180
    %v1182 = vcombine.low %v1117, %v1123
    %v1183 = vcombine.high %v1117, %v1123
    %v1185 = vunpack.c.l.s4 1983009808
    %v1186 = vunpack.c.0.s8 %v1185
    %v1187 = vlaneseq
    %v1188 = vshrl.u32 %v1187, 7
    %v1189 = vsub.s32 %v1186, %v1188
    %v1190 = vrot.slane %v1182, %v1189
    %v1192 = vunpack.c.l.s4 1983009808
    %v1193 = vunpack.c.0.s8 %v1192
    %v1194 = vlaneseq
    %v1195 = vshrl.u32 %v1194, 7
    %v1196 = vsub.s32 %v1193, %v1195
    %v1197 = vrot.slane %v1183, %v1196
    %v1198 = vcombine.low %v1120, %v1126
    %v1199 = vcombine.high %v1120, %v1126
    %v1201 = vunpack.c.l.s4 1983009808
    %v1202 = vunpack.c.0.s8 %v1201
    %v1203 = vlaneseq
    %v1204 = vshrl.u32 %v1203, 7
    %v1205 = vsub.s32 %v1202, %v1204
    %v1206 = vrot.slane %v1198, %v1205
    %v1208 = vunpack.c.l.s4 1983009808
    %v1209 = vunpack.c.0.s8 %v1208
    %v1210 = vlaneseq
    %v1211 = vshrl.u32 %v1210, 7
    %v1212 = vsub.s32 %v1209, %v1211
    %v1213 = vrot.slane %v1199, %v1212
    %v1214 = vcombine.low %v1158, %v1174
    %v1215 = vcombine.high %v1158, %v1174
    %v1217 = vunpack.c.l.s4 1934713408
    %v1218 = vunpack.c.0.s8 %v1217
    %v1219 = vlaneseq
    %v1220 = vshrl.u32 %v1219, 7
    %v1221 = vsub.s32 %v1218, %v1220
    %v1222 = vrot.slane %v1214, %v1221
    %v1224 = vunpack.c.l.s4 1934713408
    %v1225 = vunpack.c.0.s8 %v1224
    %v1226 = vlaneseq
    %v1227 = vshrl.u32 %v1226, 7
    %v1228 = vsub.s32 %v1225, %v1227
    %v1229 = vrot.slane %v1215, %v1228
    %v1230 = vcombine.low %v1165, %v1181
    %v1231 = vcombine.high %v1165, %v1181
    %v1233 = vunpack.c.l.s4 1934713408
    %v1234 = vunpack.c.0.s8 %v1233
    %v1235 = vlaneseq
    %v1236 = vshrl.u32 %v1235, 7
    %v1237 = vsub.s32 %v1234, %v1236
    %v1238 = vrot.slane %v1230, %v1237
    %v1240 = vunpack.c.l.s4 1934713408
    %v1241 = vunpack.c.0.s8 %v1240
    %v1242 = vlaneseq
    %v1243 = vshrl.u32 %v1242, 7
    %v1244 = vsub.s32 %v1241, %v1243
    %v1245 = vrot.slane %v1231, %v1244
    %v1246 = vcombine.low %v1190, %v1206
    %v1247 = vcombine.high %v1190, %v1206
    %v1249 = vunpack.c.l.s4 1934713408
    %v1250 = vunpack.c.0.s8 %v1249
    %v1251 = vlaneseq
    %v1252 = vshrl.u32 %v1251, 7
    %v1253 = vsub.s32 %v1250, %v1252
    %v1254 = vrot.slane %v1246, %v1253
    %v1256 = vunpack.c.l.s4 1934713408
    %v1257 = vunpack.c.0.s8 %v1256
    %v1258 = vlaneseq
    %v1259 = vshrl.u32 %v1258, 7
    %v1260 = vsub.s32 %v1257, %v1259
    %v1261 = vrot.slane %v1247, %v1260
    %v1262 = vcombine.low %v1197, %v1213
    %v1263 = vcombine.high %v1197, %v1213
    %v1265 = vunpack.c.l.s4 1934713408
    %v1266 = vunpack.c.0.s8 %v1265
    %v1267 = vlaneseq
    %v1268 = vshrl.u32 %v1267, 7
    %v1269 = vsub.s32 %v1266, %v1268
    %v1270 = vrot.slane %v1262, %v1269
    %v1272 = vunpack.c.l.s4 1934713408
    %v1273 = vunpack.c.0.s8 %v1272
    %v1274 = vlaneseq
    %v1275 = vshrl.u32 %v1274, 7
    %v1276 = vsub.s32 %v1273, %v1275
    %v1277 = vrot.slane %v1263, %v1276
    %v1278 = vcombine.low %v1222, %v1254
    %v1279 = vcombine.high %v1222, %v1254
    %v1280 = vcombine.low %v1229, %v1261
    %v1281 = vcombine.high %v1229, %v1261
    %v1282 = vcombine.low %v1238, %v1270
    %v1283 = vcombine.high %v1238, %v1270
    %v1284 = vcombine.low %v1245, %v1277
    %v1285 = vcombine.high %v1245, %v1277
    %v1286 = vcombine.low %v630, %v1133
    %v1287 = vcombine.high %v630, %v1133
    %v1289 = vunpack.c.l.s4 1983009808
    %v1290 = vunpack.c.0.s8 %v1289
    %v1291 = vlaneseq
    %v1292 = vshrl.u32 %v1291, 7
    %v1293 = vsub.s32 %v1290, %v1292
    %v1294 = vrot.slane %v1286, %v1293
    %v1296 = vunpack.c.l.s4 1983009808
    %v1297 = vunpack.c.0.s8 %v1296
    %v1298 = vlaneseq
    %v1299 = vshrl.u32 %v1298, 7
    %v1300 = vsub.s32 %v1297, %v1299
    %v1301 = vrot.slane %v1287, %v1300
    %v1302 = vcombine.low %v1130, %v1136
    %v1303 = vcombine.high %v1130, %v1136
    %v1305 = vunpack.c.l.s4 1983009808
    %v1306 = vunpack.c.0.s8 %v1305
    %v1307 = vlaneseq
    %v1308 = vshrl.u32 %v1307, 7
    %v1309 = vsub.s32 %v1306, %v1308
    %v1310 = vrot.slane %v1302, %v1309
    %v1312 = vunpack.c.l.s4 1983009808
    %v1313 = vunpack.c.0.s8 %v1312
    %v1314 = vlaneseq
    %v1315 = vshrl.u32 %v1314, 7
    %v1316 = vsub.s32 %v1313, %v1315
    %v1317 = vrot.slane %v1303, %v1316
    %v1318 = vcombine.low %v1139, %v1145
    %v1319 = vcombine.high %v1139, %v1145
    %v1321 = vunpack.c.l.s4 1983009808
    %v1322 = vunpack.c.0.s8 %v1321
    %v1323 = vlaneseq
    %v1324 = vshrl.u32 %v1323, 7
    %v1325 = vsub.s32 %v1322, %v1324
    %v1326 = vrot.slane %v1318, %v1325
    %v1328 = vunpack.c.l.s4 1983009808
    %v1329 = vunpack.c.0.s8 %v1328
    %v1330 = vlaneseq
    %v1331 = vshrl.u32 %v1330, 7
    %v1332 = vsub.s32 %v1329, %v1331
    %v1333 = vrot.slane %v1319, %v1332
    %v1334 = vcombine.low %v1142, %v1148
    %v1335 = vcombine.high %v1142, %v1148
    %v1337 = vunpack.c.l.s4 1983009808
    %v1338 = vunpack.c.0.s8 %v1337
    %v1339 = vlaneseq
    %v1340 = vshrl.u32 %v1339, 7
    %v1341 = vsub.s32 %v1338, %v1340
    %v1342 = vrot.slane %v1334, %v1341
    %v1344 = vunpack.c.l.s4 1983009808
    %v1345 = vunpack.c.0.s8 %v1344
    %v1346 = vlaneseq
    %v1347 = vshrl.u32 %v1346, 7
    %v1348 = vsub.s32 %v1345, %v1347
    %v1349 = vrot.slane %v1335, %v1348
    %v1350 = vcombine.low %v1294, %v1310
    %v1351 = vcombine.high %v1294, %v1310
    %v1353 = vunpack.c.l.s4 1934713408
    %v1354 = vunpack.c.0.s8 %v1353
    %v1355 = vlaneseq
    %v1356 = vshrl.u32 %v1355, 7
    %v1357 = vsub.s32 %v1354, %v1356
    %v1358 = vrot.slane %v1350, %v1357
    %v1360 = vunpack.c.l.s4 1934713408
    %v1361 = vunpack.c.0.s8 %v1360
    %v1362 = vlaneseq
    %v1363 = vshrl.u32 %v1362, 7
    %v1364 = vsub.s32 %v1361, %v1363
    %v1365 = vrot.slane %v1351, %v1364
    %v1366 = vcombine.low %v1301, %v1317
    %v1367 = vcombine.high %v1301, %v1317
    %v1369 = vunpack.c.l.s4 1934713408
    %v1370 = vunpack.c.0.s8 %v1369
    %v1371 = vlaneseq
    %v1372 = vshrl.u32 %v1371, 7
    %v1373 = vsub.s32 %v1370, %v1372
    %v1374 = vrot.slane %v1366, %v1373
    %v1376 = vunpack.c.l.s4 1934713408
    %v1377 = vunpack.c.0.s8 %v1376
    %v1378 = vlaneseq
    %v1379 = vshrl.u32 %v1378, 7
    %v1380 = vsub.s32 %v1377, %v1379
    %v1381 = vrot.slane %v1367, %v1380
    %v1382 = vcombine.low %v1326, %v1342
    %v1383 = vcombine.high %v1326, %v1342
    %v1385 = vunpack.c.l.s4 1934713408
    %v1386 = vunpack.c.0.s8 %v1385
    %v1387 = vlaneseq
    %v1388 = vshrl.u32 %v1387, 7
    %v1389 = vsub.s32 %v1386, %v1388
    %v1390 = vrot.slane %v1382, %v1389
    %v1392 = vunpack.c.l.s4 1934713408
    %v1393 = vunpack.c.0.s8 %v1392
    %v1394 = vlaneseq
    %v1395 = vshrl.u32 %v1394, 7
    %v1396 = vsub.s32 %v1393, %v1395
    %v1397 = vrot.slane %v1383, %v1396
    %v1398 = vcombine.low %v1333, %v1349
    %v1399 = vcombine.high %v1333, %v1349
    %v1401 = vunpack.c.l.s4 1934713408
    %v1402 = vunpack.c.0.s8 %v1401
    %v1403 = vlaneseq
    %v1404 = vshrl.u32 %v1403, 7
    %v1405 = vsub.s32 %v1402, %v1404
    %v1406 = vrot.slane %v1398, %v1405
    %v1408 = vunpack.c.l.s4 1934713408
    %v1409 = vunpack.c.0.s8 %v1408
    %v1410 = vlaneseq
    %v1411 = vshrl.u32 %v1410, 7
    %v1412 = vsub.s32 %v1409, %v1411
    %v1413 = vrot.slane %v1399, %v1412
    %v1414 = vcombine.low %v1358, %v1390
    %v1415 = vcombine.high %v1358, %v1390
    %v1416 = vcombine.low %v1365, %v1397
    %v1417 = vcombine.high %v1365, %v1397
    %v1418 = vcombine.low %v1374, %v1406
    %v1419 = vcombine.high %v1374, %v1406
    %v1420 = vcombine.low %v1381, %v1413
    %v1421 = vcombine.high %v1381, %v1413
    %v1422 = vld [vmem:[#allocation5] sm:$0xff]
    %1424 = vrot.lane.b32.xlu0 %v1422, 112
    %v1425 = vpop.permute.xlu0 %1424
    %1427 = vrot.lane.b32.xlu0 %v1422, 96
    %v1428 = vpop.permute.xlu0 %1427
    %1430 = vrot.lane.b32.xlu0 %v1422, 80
    %v1431 = vpop.permute.xlu0 %1430
    %1433 = vrot.lane.b32.xlu0 %v1422, 64
    %v1434 = vpop.permute.xlu0 %1433
    %1436 = vrot.lane.b32.xlu0 %v1422, 48
    %v1437 = vpop.permute.xlu0 %1436
    %1439 = vrot.lane.b32.xlu0 %v1422, 32
    %v1440 = vpop.permute.xlu0 %1439
    %1442 = vrot.lane.b32.xlu0 %v1422, 16
    %v1443 = vpop.permute.xlu0 %1442
    %v1445 = vcombine.low %v1422, %v1428
    %v1446 = vcombine.high %v1422, %v1428
    %v1448 = vunpack.c.l.s4 1983009808
    %v1449 = vunpack.c.0.s8 %v1448
    %v1450 = vlaneseq
    %v1451 = vshrl.u32 %v1450, 7
    %v1452 = vsub.s32 %v1449, %v1451
    %v1453 = vrot.slane %v1445, %v1452
    %v1455 = vunpack.c.l.s4 1983009808
    %v1456 = vunpack.c.0.s8 %v1455
    %v1457 = vlaneseq
    %v1458 = vshrl.u32 %v1457, 7
    %v1459 = vsub.s32 %v1456, %v1458
    %v1460 = vrot.slane %v1446, %v1459
    %v1461 = vcombine.low %v1425, %v1431
    %v1462 = vcombine.high %v1425, %v1431
    %v1464 = vunpack.c.l.s4 1983009808
    %v1465 = vunpack.c.0.s8 %v1464
    %v1466 = vlaneseq
    %v1467 = vshrl.u32 %v1466, 7
    %v1468 = vsub.s32 %v1465, %v1467
    %v1469 = vrot.slane %v1461, %v1468
    %v1471 = vunpack.c.l.s4 1983009808
    %v1472 = vunpack.c.0.s8 %v1471
    %v1473 = vlaneseq
    %v1474 = vshrl.u32 %v1473, 7
    %v1475 = vsub.s32 %v1472, %v1474
    %v1476 = vrot.slane %v1462, %v1475
    %v1477 = vcombine.low %v1434, %v1440
    %v1478 = vcombine.high %v1434, %v1440
    %v1480 = vunpack.c.l.s4 1983009808
    %v1481 = vunpack.c.0.s8 %v1480
    %v1482 = vlaneseq
    %v1483 = vshrl.u32 %v1482, 7
    %v1484 = vsub.s32 %v1481, %v1483
    %v1485 = vrot.slane %v1477, %v1484
    %v1487 = vunpack.c.l.s4 1983009808
    %v1488 = vunpack.c.0.s8 %v1487
    %v1489 = vlaneseq
    %v1490 = vshrl.u32 %v1489, 7
    %v1491 = vsub.s32 %v1488, %v1490
    %v1492 = vrot.slane %v1478, %v1491
    %v1493 = vcombine.low %v1437, %v1443
    %v1494 = vcombine.high %v1437, %v1443
    %v1496 = vunpack.c.l.s4 1983009808
    %v1497 = vunpack.c.0.s8 %v1496
    %v1498 = vlaneseq
    %v1499 = vshrl.u32 %v1498, 7
    %v1500 = vsub.s32 %v1497, %v1499
    %v1501 = vrot.slane %v1493, %v1500
    %v1503 = vunpack.c.l.s4 1983009808
    %v1504 = vunpack.c.0.s8 %v1503
    %v1505 = vlaneseq
    %v1506 = vshrl.u32 %v1505, 7
    %v1507 = vsub.s32 %v1504, %v1506
    %v1508 = vrot.slane %v1494, %v1507
    %v1509 = vcombine.low %v1453, %v1469
    %v1510 = vcombine.high %v1453, %v1469
    %v1512 = vunpack.c.l.s4 1934713408
    %v1513 = vunpack.c.0.s8 %v1512
    %v1514 = vlaneseq
    %v1515 = vshrl.u32 %v1514, 7
    %v1516 = vsub.s32 %v1513, %v1515
    %v1517 = vrot.slane %v1509, %v1516
    %v1519 = vunpack.c.l.s4 1934713408
    %v1520 = vunpack.c.0.s8 %v1519
    %v1521 = vlaneseq
    %v1522 = vshrl.u32 %v1521, 7
    %v1523 = vsub.s32 %v1520, %v1522
    %v1524 = vrot.slane %v1510, %v1523
    %v1525 = vcombine.low %v1460, %v1476
    %v1526 = vcombine.high %v1460, %v1476
    %v1528 = vunpack.c.l.s4 1934713408
    %v1529 = vunpack.c.0.s8 %v1528
    %v1530 = vlaneseq
    %v1531 = vshrl.u32 %v1530, 7
    %v1532 = vsub.s32 %v1529, %v1531
    %v1533 = vrot.slane %v1525, %v1532
    %v1535 = vunpack.c.l.s4 1934713408
    %v1536 = vunpack.c.0.s8 %v1535
    %v1537 = vlaneseq
    %v1538 = vshrl.u32 %v1537, 7
    %v1539 = vsub.s32 %v1536, %v1538
    %v1540 = vrot.slane %v1526, %v1539
    %v1541 = vcombine.low %v1485, %v1501
    %v1542 = vcombine.high %v1485, %v1501
    %v1544 = vunpack.c.l.s4 1934713408
    %v1545 = vunpack.c.0.s8 %v1544
    %v1546 = vlaneseq
    %v1547 = vshrl.u32 %v1546, 7
    %v1548 = vsub.s32 %v1545, %v1547
    %v1549 = vrot.slane %v1541, %v1548
    %v1551 = vunpack.c.l.s4 1934713408
    %v1552 = vunpack.c.0.s8 %v1551
    %v1553 = vlaneseq
    %v1554 = vshrl.u32 %v1553, 7
    %v1555 = vsub.s32 %v1552, %v1554
    %v1556 = vrot.slane %v1542, %v1555
    %v1557 = vcombine.low %v1492, %v1508
    %v1558 = vcombine.high %v1492, %v1508
    %v1560 = vunpack.c.l.s4 1934713408
    %v1561 = vunpack.c.0.s8 %v1560
    %v1562 = vlaneseq
    %v1563 = vshrl.u32 %v1562, 7
    %v1564 = vsub.s32 %v1561, %v1563
    %v1565 = vrot.slane %v1557, %v1564
    %v1567 = vunpack.c.l.s4 1934713408
    %v1568 = vunpack.c.0.s8 %v1567
    %v1569 = vlaneseq
    %v1570 = vshrl.u32 %v1569, 7
    %v1571 = vsub.s32 %v1568, %v1570
    %v1572 = vrot.slane %v1558, %v1571
    %v1573 = vcombine.low %v1517, %v1549
    %v1574 = vcombine.high %v1517, %v1549
    %v1575 = vcombine.low %v1524, %v1556
    %v1576 = vcombine.high %v1524, %v1556
    %v1577 = vcombine.low %v1533, %v1565
    %v1578 = vcombine.high %v1533, %v1565
    %v1579 = vcombine.low %v1540, %v1572
    %v1580 = vcombine.high %v1540, %v1572
    %vm1581 = vcmask 130048
    %v1583 = vsel %vm1581, %v782, 0
    %v1586 = vsel %vm1581, %v962, 0
    %v1589 = vsel %vm1581, %v1098, 0
    %1591 = vmatprep.subr.mxu0 0.0
    %1592 = vmatpush1.xpose.msra.mxu0 %v1586
    %1593 = vmatprep.subr.mxu0 0.0
    %1594 = vmatpush1.xpose.msra.mxu0 %v1589
    %1595 = vmatprep.subr.mxu0 0.0
    %1596 = vmatpush1.xpose.msra.mxu0 0.0
    %1597 = vmatprep.subr.mxu0 0.0
    %1598 = vmatpush1.xpose.msra.mxu0 0.0
    %1599 = vmatprep.subr.mxu0 0.0
    %1600 = vmatpush1.xpose.msra.mxu0 0.0
    %1601 = vmatprep.subr.mxu0 0.0
    %1602 = vmatpush1.xpose.msra.mxu0 0.0
    %1603 = vmatprep.subr.mxu0 0.0
    %1604 = vmatpush1.xpose.msra.mxu0 0.0
    %1605 = vmatprep.subr.mxu0 0.0
    %1606 = vmatpush1.xpose.msra.mxu0 0.0
    %1607 = vmatprep.subr.mxu0 0.0
    %1608 = vmatpush1.xpose.msra.mxu0 0.0
    %1609 = vmatprep.subr.mxu0 0.0
    %1610 = vmatpush1.xpose.msra.mxu0 0.0
    %1611 = vmatprep.subr.mxu0 0.0
    %1612 = vmatpush1.xpose.msra.mxu0 0.0
    %1613 = vmatprep.subr.mxu0 0.0
    %1614 = vmatpush1.xpose.msra.mxu0 0.0
    %1615 = vmatprep.subr.mxu0 0.0
    %1616 = vmatpush1.xpose.msra.mxu0 0.0
    %1617 = vmatprep.subr.mxu0 0.0
    %1618 = vmatpush1.xpose.msra.mxu0 0.0
    %1619 = vmatprep.subr.mxu0 0.0
    %1620 = vmatpush1.xpose.msra.mxu0 0.0
    %1621 = vmatprep.subr.mxu0 0.0
    %1622 = vmatpush1.xpose.msra.mxu0 0.0
    %1623 = vmatprep.subr.mxu0 0.0
    %1624 = vmatpush1.xpose.msra.mxu0 0.0
    %1625 = vmatprep.subr.mxu0 0.0
    %1626 = vmatpush1.xpose.msra.mxu0 0.0
    %1627 = vmatprep.subr.mxu0 0.0
    %1628 = vmatpush1.xpose.msra.mxu0 0.0
    %1629 = vmatprep.subr.mxu0 0.0
    %1630 = vmatpush1.xpose.msra.mxu0 0.0
    %1631 = vmatprep.subr.mxu0 0.0
    %1632 = vmatpush1.xpose.msra.mxu0 0.0
    %1633 = vmatprep.subr.mxu0 0.0
    %1634 = vmatpush1.xpose.msra.mxu0 0.0
    %1635 = vmatprep.subr.mxu0 0.0
    %1636 = vmatpush1.xpose.msra.mxu0 0.0
    %1637 = vmatprep.subr.mxu0 0.0
    %1638 = vmatpush1.xpose.msra.mxu0 0.0
    %1639 = vmatprep.subr.mxu0 0.0
    %1640 = vmatpush1.xpose.msra.mxu0 0.0
    %1641 = vmatprep.subr.mxu0 0.0
    %1642 = vmatpush1.xpose.msra.mxu0 0.0
    %1643 = vmatprep.subr.mxu0 0.0
    %1644 = vmatpush1.xpose.msra.mxu0 0.0
    %1645 = vmatprep.subr.mxu0 0.0
    %1646 = vmatpush1.xpose.msra.mxu0 0.0
    %1647 = vmatprep.subr.mxu0 0.0
    %1648 = vmatpush1.xpose.msra.mxu0 0.0
    %1649 = vmatprep.subr.mxu0 0.0
    %1650 = vmatpush1.xpose.msra.mxu0 0.0
    %1651 = vmatprep.subr.mxu0 0.0
    %1652 = vmatpush1.xpose.msra.mxu0 0.0
    %1653 = vmatprep.subr.mxu0 0.0
    %1654 = vmatpush1.xpose.msra.mxu0 0.0
    %1655 = vmatprep.mubr.f32.mxu0 0.0
    %1656 = vmatmul.mubr.f32.gmra.mrb[0].mxu0 %v1583
    %v1657 = vpop.f32.mrb[0].mxu0
    %v1658 = vadd.f32 0.0, %v1657
    %v1659 = vpop.f32.mrb[0].mxu0
    %1660 = vdwg.mxu0
    %v1662 = vsel %vm1581, %v783, 0
    %v1665 = vsel %vm1581, %v963, 0
    %v1668 = vsel %vm1581, %v1099, 0
    %1670 = vmatprep.subr.mxu0 0.0
    %1671 = vmatpush1.xpose.msra.mxu0 %v1665
    %1672 = vmatprep.subr.mxu0 0.0
    %1673 = vmatpush1.xpose.msra.mxu0 %v1668
    %1674 = vmatprep.subr.mxu0 0.0
    %1675 = vmatpush1.xpose.msra.mxu0 0.0
    %1676 = vmatprep.subr.mxu0 0.0
    %1677 = vmatpush1.xpose.msra.mxu0 0.0
    %1678 = vmatprep.subr.mxu0 0.0
    %1679 = vmatpush1.xpose.msra.mxu0 0.0
    %1680 = vmatprep.subr.mxu0 0.0
    %1681 = vmatpush1.xpose.msra.mxu0 0.0
    %1682 = vmatprep.subr.mxu0 0.0
    %1683 = vmatpush1.xpose.msra.mxu0 0.0
    %1684 = vmatprep.subr.mxu0 0.0
    %1685 = vmatpush1.xpose.msra.mxu0 0.0
    %1686 = vmatprep.subr.mxu0 0.0
    %1687 = vmatpush1.xpose.msra.mxu0 0.0
    %1688 = vmatprep.subr.mxu0 0.0
    %1689 = vmatpush1.xpose.msra.mxu0 0.0
    %1690 = vmatprep.subr.mxu0 0.0
    %1691 = vmatpush1.xpose.msra.mxu0 0.0
    %1692 = vmatprep.subr.mxu0 0.0
    %1693 = vmatpush1.xpose.msra.mxu0 0.0
    %1694 = vmatprep.subr.mxu0 0.0
    %1695 = vmatpush1.xpose.msra.mxu0 0.0
    %1696 = vmatprep.subr.mxu0 0.0
    %1697 = vmatpush1.xpose.msra.mxu0 0.0
    %1698 = vmatprep.subr.mxu0 0.0
    %1699 = vmatpush1.xpose.msra.mxu0 0.0
    %1700 = vmatprep.subr.mxu0 0.0
    %1701 = vmatpush1.xpose.msra.mxu0 0.0
    %1702 = vmatprep.subr.mxu0 0.0
    %1703 = vmatpush1.xpose.msra.mxu0 0.0
    %1704 = vmatprep.subr.mxu0 0.0
    %1705 = vmatpush1.xpose.msra.mxu0 0.0
    %1706 = vmatprep.subr.mxu0 0.0
    %1707 = vmatpush1.xpose.msra.mxu0 0.0
    %1708 = vmatprep.subr.mxu0 0.0
    %1709 = vmatpush1.xpose.msra.mxu0 0.0
    %1710 = vmatprep.subr.mxu0 0.0
    %1711 = vmatpush1.xpose.msra.mxu0 0.0
    %1712 = vmatprep.subr.mxu0 0.0
    %1713 = vmatpush1.xpose.msra.mxu0 0.0
    %1714 = vmatprep.subr.mxu0 0.0
    %1715 = vmatpush1.xpose.msra.mxu0 0.0
    %1716 = vmatprep.subr.mxu0 0.0
    %1717 = vmatpush1.xpose.msra.mxu0 0.0
    %1718 = vmatprep.subr.mxu0 0.0
    %1719 = vmatpush1.xpose.msra.mxu0 0.0
    %1720 = vmatprep.subr.mxu0 0.0
    %1721 = vmatpush1.xpose.msra.mxu0 0.0
    %1722 = vmatprep.subr.mxu0 0.0
    %1723 = vmatpush1.xpose.msra.mxu0 0.0
    %1724 = vmatprep.subr.mxu0 0.0
    %1725 = vmatpush1.xpose.msra.mxu0 0.0
    %1726 = vmatprep.subr.mxu0 0.0
    %1727 = vmatpush1.xpose.msra.mxu0 0.0
    %1728 = vmatprep.subr.mxu0 0.0
    %1729 = vmatpush1.xpose.msra.mxu0 0.0
    %1730 = vmatprep.subr.mxu0 0.0
    %1731 = vmatpush1.xpose.msra.mxu0 0.0
    %1732 = vmatprep.subr.mxu0 0.0
    %1733 = vmatpush1.xpose.msra.mxu0 0.0
    %1734 = vmatprep.mubr.f32.mxu0 0.0
    %1735 = vmatmul.mubr.f32.gmra.mrb[0].mxu0 %v1662
    %v1736 = vpop.f32.mrb[0].mxu0
    %v1737 = vadd.f32 0.0, %v1736
    %v1738 = vpop.f32.mrb[0].mxu0
    %1739 = vdwg.mxu0
    %v1741 = vsel %vm1581, %v784, 0
    %v1744 = vsel %vm1581, %v964, 0
    %v1747 = vsel %vm1581, %v1100, 0
    %1749 = vmatprep.subr.mxu0 0.0
    %1750 = vmatpush1.xpose.msra.mxu0 %v1744
    %1751 = vmatprep.subr.mxu0 0.0
    %1752 = vmatpush1.xpose.msra.mxu0 %v1747
    %1753 = vmatprep.subr.mxu0 0.0
    %1754 = vmatpush1.xpose.msra.mxu0 0.0
    %1755 = vmatprep.subr.mxu0 0.0
    %1756 = vmatpush1.xpose.msra.mxu0 0.0
    %1757 = vmatprep.subr.mxu0 0.0
    %1758 = vmatpush1.xpose.msra.mxu0 0.0
    %1759 = vmatprep.subr.mxu0 0.0
    %1760 = vmatpush1.xpose.msra.mxu0 0.0
    %1761 = vmatprep.subr.mxu0 0.0
    %1762 = vmatpush1.xpose.msra.mxu0 0.0
    %1763 = vmatprep.subr.mxu0 0.0
    %1764 = vmatpush1.xpose.msra.mxu0 0.0
    %1765 = vmatprep.subr.mxu0 0.0
    %1766 = vmatpush1.xpose.msra.mxu0 0.0
    %1767 = vmatprep.subr.mxu0 0.0
    %1768 = vmatpush1.xpose.msra.mxu0 0.0
    %1769 = vmatprep.subr.mxu0 0.0
    %1770 = vmatpush1.xpose.msra.mxu0 0.0
    %1771 = vmatprep.subr.mxu0 0.0
    %1772 = vmatpush1.xpose.msra.mxu0 0.0
    %1773 = vmatprep.subr.mxu0 0.0
    %1774 = vmatpush1.xpose.msra.mxu0 0.0
    %1775 = vmatprep.subr.mxu0 0.0
    %1776 = vmatpush1.xpose.msra.mxu0 0.0
    %1777 = vmatprep.subr.mxu0 0.0
    %1778 = vmatpush1.xpose.msra.mxu0 0.0
    %1779 = vmatprep.subr.mxu0 0.0
    %1780 = vmatpush1.xpose.msra.mxu0 0.0
    %1781 = vmatprep.subr.mxu0 0.0
    %1782 = vmatpush1.xpose.msra.mxu0 0.0
    %1783 = vmatprep.subr.mxu0 0.0
    %1784 = vmatpush1.xpose.msra.mxu0 0.0
    %1785 = vmatprep.subr.mxu0 0.0
    %1786 = vmatpush1.xpose.msra.mxu0 0.0
    %1787 = vmatprep.subr.mxu0 0.0
    %1788 = vmatpush1.xpose.msra.mxu0 0.0
    %1789 = vmatprep.subr.mxu0 0.0
    %1790 = vmatpush1.xpose.msra.mxu0 0.0
    %1791 = vmatprep.subr.mxu0 0.0
    %1792 = vmatpush1.xpose.msra.mxu0 0.0
    %1793 = vmatprep.subr.mxu0 0.0
    %1794 = vmatpush1.xpose.msra.mxu0 0.0
    %1795 = vmatprep.subr.mxu0 0.0
    %1796 = vmatpush1.xpose.msra.mxu0 0.0
    %1797 = vmatprep.subr.mxu0 0.0
    %1798 = vmatpush1.xpose.msra.mxu0 0.0
    %1799 = vmatprep.subr.mxu0 0.0
    %1800 = vmatpush1.xpose.msra.mxu0 0.0
    %1801 = vmatprep.subr.mxu0 0.0
    %1802 = vmatpush1.xpose.msra.mxu0 0.0
    %1803 = vmatprep.subr.mxu0 0.0
    %1804 = vmatpush1.xpose.msra.mxu0 0.0
    %1805 = vmatprep.subr.mxu0 0.0
    %1806 = vmatpush1.xpose.msra.mxu0 0.0
    %1807 = vmatprep.subr.mxu0 0.0
    %1808 = vmatpush1.xpose.msra.mxu0 0.0
    %1809 = vmatprep.subr.mxu0 0.0
    %1810 = vmatpush1.xpose.msra.mxu0 0.0
    %1811 = vmatprep.subr.mxu0 0.0
    %1812 = vmatpush1.xpose.msra.mxu0 0.0
    %1813 = vmatprep.mubr.f32.mxu0 0.0
    %1814 = vmatmul.mubr.f32.gmra.mrb[0].mxu0 %v1741
    %v1815 = vpop.f32.mrb[0].mxu0
    %v1816 = vadd.f32 0.0, %v1815
    %v1817 = vpop.f32.mrb[0].mxu0
    %1818 = vdwg.mxu0
    %v1820 = vsel %vm1581, %v785, 0
    %v1823 = vsel %vm1581, %v965, 0
    %v1826 = vsel %vm1581, %v1101, 0
    %1828 = vmatprep.subr.mxu0 0.0
    %1829 = vmatpush1.xpose.msra.mxu0 %v1823
    %1830 = vmatprep.subr.mxu0 0.0
    %1831 = vmatpush1.xpose.msra.mxu0 %v1826
    %1832 = vmatprep.subr.mxu0 0.0
    %1833 = vmatpush1.xpose.msra.mxu0 0.0
    %1834 = vmatprep.subr.mxu0 0.0
    %1835 = vmatpush1.xpose.msra.mxu0 0.0
    %1836 = vmatprep.subr.mxu0 0.0
    %1837 = vmatpush1.xpose.msra.mxu0 0.0
    %1838 = vmatprep.subr.mxu0 0.0
    %1839 = vmatpush1.xpose.msra.mxu0 0.0
    %1840 = vmatprep.subr.mxu0 0.0
    %1841 = vmatpush1.xpose.msra.mxu0 0.0
    %1842 = vmatprep.subr.mxu0 0.0
    %1843 = vmatpush1.xpose.msra.mxu0 0.0
    %1844 = vmatprep.subr.mxu0 0.0
    %1845 = vmatpush1.xpose.msra.mxu0 0.0
    %1846 = vmatprep.subr.mxu0 0.0
    %1847 = vmatpush1.xpose.msra.mxu0 0.0
    %1848 = vmatprep.subr.mxu0 0.0
    %1849 = vmatpush1.xpose.msra.mxu0 0.0
    %1850 = vmatprep.subr.mxu0 0.0
    %1851 = vmatpush1.xpose.msra.mxu0 0.0
    %1852 = vmatprep.subr.mxu0 0.0
    %1853 = vmatpush1.xpose.msra.mxu0 0.0
    %1854 = vmatprep.subr.mxu0 0.0
    %1855 = vmatpush1.xpose.msra.mxu0 0.0
    %1856 = vmatprep.subr.mxu0 0.0
    %1857 = vmatpush1.xpose.msra.mxu0 0.0
    %1858 = vmatprep.subr.mxu0 0.0
    %1859 = vmatpush1.xpose.msra.mxu0 0.0
    %1860 = vmatprep.subr.mxu0 0.0
    %1861 = vmatpush1.xpose.msra.mxu0 0.0
    %1862 = vmatprep.subr.mxu0 0.0
    %1863 = vmatpush1.xpose.msra.mxu0 0.0
    %1864 = vmatprep.subr.mxu0 0.0
    %1865 = vmatpush1.xpose.msra.mxu0 0.0
    %1866 = vmatprep.subr.mxu0 0.0
    %1867 = vmatpush1.xpose.msra.mxu0 0.0
    %1868 = vmatprep.subr.mxu0 0.0
    %1869 = vmatpush1.xpose.msra.mxu0 0.0
    %1870 = vmatprep.subr.mxu0 0.0
    %1871 = vmatpush1.xpose.msra.mxu0 0.0
    %1872 = vmatprep.subr.mxu0 0.0
    %1873 = vmatpush1.xpose.msra.mxu0 0.0
    %1874 = vmatprep.subr.mxu0 0.0
    %1875 = vmatpush1.xpose.msra.mxu0 0.0
    %1876 = vmatprep.subr.mxu0 0.0
    %1877 = vmatpush1.xpose.msra.mxu0 0.0
    %1878 = vmatprep.subr.mxu0 0.0
    %1879 = vmatpush1.xpose.msra.mxu0 0.0
    %1880 = vmatprep.subr.mxu0 0.0
    %1881 = vmatpush1.xpose.msra.mxu0 0.0
    %1882 = vmatprep.subr.mxu0 0.0
    %1883 = vmatpush1.xpose.msra.mxu0 0.0
    %1884 = vmatprep.subr.mxu0 0.0
    %1885 = vmatpush1.xpose.msra.mxu0 0.0
    %1886 = vmatprep.subr.mxu0 0.0
    %1887 = vmatpush1.xpose.msra.mxu0 0.0
    %1888 = vmatprep.subr.mxu0 0.0
    %1889 = vmatpush1.xpose.msra.mxu0 0.0
    %1890 = vmatprep.subr.mxu0 0.0
    %1891 = vmatpush1.xpose.msra.mxu0 0.0
    %1892 = vmatprep.mubr.f32.mxu0 0.0
    %1893 = vmatmul.mubr.f32.gmra.mrb[0].mxu0 %v1820
    %v1894 = vpop.f32.mrb[0].mxu0
    %v1895 = vadd.f32 0.0, %v1894
    %v1896 = vpop.f32.mrb[0].mxu0
    %1897 = vdwg.mxu0
    %v1899 = vsel %vm1581, %v786, 0
    %v1902 = vsel %vm1581, %v966, 0
    %v1905 = vsel %vm1581, %v1102, 0
    %1907 = vmatprep.subr.mxu0 0.0
    %1908 = vmatpush1.xpose.msra.mxu0 %v1902
    %1909 = vmatprep.subr.mxu0 0.0
    %1910 = vmatpush1.xpose.msra.mxu0 %v1905
    %1911 = vmatprep.subr.mxu0 0.0
    %1912 = vmatpush1.xpose.msra.mxu0 0.0
    %1913 = vmatprep.subr.mxu0 0.0
    %1914 = vmatpush1.xpose.msra.mxu0 0.0
    %1915 = vmatprep.subr.mxu0 0.0
    %1916 = vmatpush1.xpose.msra.mxu0 0.0
    %1917 = vmatprep.subr.mxu0 0.0
    %1918 = vmatpush1.xpose.msra.mxu0 0.0
    %1919 = vmatprep.subr.mxu0 0.0
    %1920 = vmatpush1.xpose.msra.mxu0 0.0
    %1921 = vmatprep.subr.mxu0 0.0
    %1922 = vmatpush1.xpose.msra.mxu0 0.0
    %1923 = vmatprep.subr.mxu0 0.0
    %1924 = vmatpush1.xpose.msra.mxu0 0.0
    %1925 = vmatprep.subr.mxu0 0.0
    %1926 = vmatpush1.xpose.msra.mxu0 0.0
    %1927 = vmatprep.subr.mxu0 0.0
    %1928 = vmatpush1.xpose.msra.mxu0 0.0
    %1929 = vmatprep.subr.mxu0 0.0
    %1930 = vmatpush1.xpose.msra.mxu0 0.0
    %1931 = vmatprep.subr.mxu0 0.0
    %1932 = vmatpush1.xpose.msra.mxu0 0.0
    %1933 = vmatprep.subr.mxu0 0.0
    %1934 = vmatpush1.xpose.msra.mxu0 0.0
    %1935 = vmatprep.subr.mxu0 0.0
    %1936 = vmatpush1.xpose.msra.mxu0 0.0
    %1937 = vmatprep.subr.mxu0 0.0
    %1938 = vmatpush1.xpose.msra.mxu0 0.0
    %1939 = vmatprep.subr.mxu0 0.0
    %1940 = vmatpush1.xpose.msra.mxu0 0.0
    %1941 = vmatprep.subr.mxu0 0.0
    %1942 = vmatpush1.xpose.msra.mxu0 0.0
    %1943 = vmatprep.subr.mxu0 0.0
    %1944 = vmatpush1.xpose.msra.mxu0 0.0
    %1945 = vmatprep.subr.mxu0 0.0
    %1946 = vmatpush1.xpose.msra.mxu0 0.0
    %1947 = vmatprep.subr.mxu0 0.0
    %1948 = vmatpush1.xpose.msra.mxu0 0.0
    %1949 = vmatprep.subr.mxu0 0.0
    %1950 = vmatpush1.xpose.msra.mxu0 0.0
    %1951 = vmatprep.subr.mxu0 0.0
    %1952 = vmatpush1.xpose.msra.mxu0 0.0
    %1953 = vmatprep.subr.mxu0 0.0
    %1954 = vmatpush1.xpose.msra.mxu0 0.0
    %1955 = vmatprep.subr.mxu0 0.0
    %1956 = vmatpush1.xpose.msra.mxu0 0.0
    %1957 = vmatprep.subr.mxu0 0.0
    %1958 = vmatpush1.xpose.msra.mxu0 0.0
    %1959 = vmatprep.subr.mxu0 0.0
    %1960 = vmatpush1.xpose.msra.mxu0 0.0
    %1961 = vmatprep.subr.mxu0 0.0
    %1962 = vmatpush1.xpose.msra.mxu0 0.0
    %1963 = vmatprep.subr.mxu0 0.0
    %1964 = vmatpush1.xpose.msra.mxu0 0.0
    %1965 = vmatprep.subr.mxu0 0.0
    %1966 = vmatpush1.xpose.msra.mxu0 0.0
    %1967 = vmatprep.subr.mxu0 0.0
    %1968 = vmatpush1.xpose.msra.mxu0 0.0
    %1969 = vmatprep.subr.mxu0 0.0
    %1970 = vmatpush1.xpose.msra.mxu0 0.0
    %1971 = vmatprep.mubr.f32.mxu0 0.0
    %1972 = vmatmul.mubr.f32.gmra.mrb[0].mxu0 %v1899
    %v1973 = vpop.f32.mrb[0].mxu0
    %v1974 = vadd.f32 0.0, %v1973
    %v1975 = vpop.f32.mrb[0].mxu0
    %1976 = vdwg.mxu0
    %v1978 = vsel %vm1581, %v787, 0
    %v1981 = vsel %vm1581, %v967, 0
    %v1984 = vsel %vm1581, %v1103, 0
    %1986 = vmatprep.subr.mxu0 0.0
    %1987 = vmatpush1.xpose.msra.mxu0 %v1981
    %1988 = vmatprep.subr.mxu0 0.0
    %1989 = vmatpush1.xpose.msra.mxu0 %v1984
    %1990 = vmatprep.subr.mxu0 0.0
    %1991 = vmatpush1.xpose.msra.mxu0 0.0
    %1992 = vmatprep.subr.mxu0 0.0
    %1993 = vmatpush1.xpose.msra.mxu0 0.0
    %1994 = vmatprep.subr.mxu0 0.0
    %1995 = vmatpush1.xpose.msra.mxu0 0.0
    %1996 = vmatprep.subr.mxu0 0.0
    %1997 = vmatpush1.xpose.msra.mxu0 0.0
    %1998 = vmatprep.subr.mxu0 0.0
    %1999 = vmatpush1.xpose.msra.mxu0 0.0
    %2000 = vmatprep.subr.mxu0 0.0
    %2001 = vmatpush1.xpose.msra.mxu0 0.0
    %2002 = vmatprep.subr.mxu0 0.0
    %2003 = vmatpush1.xpose.msra.mxu0 0.0
    %2004 = vmatprep.subr.mxu0 0.0
    %2005 = vmatpush1.xpose.msra.mxu0 0.0
    %2006 = vmatprep.subr.mxu0 0.0
    %2007 = vmatpush1.xpose.msra.mxu0 0.0
    %2008 = vmatprep.subr.mxu0 0.0
    %2009 = vmatpush1.xpose.msra.mxu0 0.0
    %2010 = vmatprep.subr.mxu0 0.0
    %2011 = vmatpush1.xpose.msra.mxu0 0.0
    %2012 = vmatprep.subr.mxu0 0.0
    %2013 = vmatpush1.xpose.msra.mxu0 0.0
    %2014 = vmatprep.subr.mxu0 0.0
    %2015 = vmatpush1.xpose.msra.mxu0 0.0
    %2016 = vmatprep.subr.mxu0 0.0
    %2017 = vmatpush1.xpose.msra.mxu0 0.0
    %2018 = vmatprep.subr.mxu0 0.0
    %2019 = vmatpush1.xpose.msra.mxu0 0.0
    %2020 = vmatprep.subr.mxu0 0.0
    %2021 = vmatpush1.xpose.msra.mxu0 0.0
    %2022 = vmatprep.subr.mxu0 0.0
    %2023 = vmatpush1.xpose.msra.mxu0 0.0
    %2024 = vmatprep.subr.mxu0 0.0
    %2025 = vmatpush1.xpose.msra.mxu0 0.0
    %2026 = vmatprep.subr.mxu0 0.0
    %2027 = vmatpush1.xpose.msra.mxu0 0.0
    %2028 = vmatprep.subr.mxu0 0.0
    %2029 = vmatpush1.xpose.msra.mxu0 0.0
    %2030 = vmatprep.subr.mxu0 0.0
    %2031 = vmatpush1.xpose.msra.mxu0 0.0
    %2032 = vmatprep.subr.mxu0 0.0
    %2033 = vmatpush1.xpose.msra.mxu0 0.0
    %2034 = vmatprep.subr.mxu0 0.0
    %2035 = vmatpush1.xpose.msra.mxu0 0.0
    %2036 = vmatprep.subr.mxu0 0.0
    %2037 = vmatpush1.xpose.msra.mxu0 0.0
    %2038 = vmatprep.subr.mxu0 0.0
    %2039 = vmatpush1.xpose.msra.mxu0 0.0
    %2040 = vmatprep.subr.mxu0 0.0
    %2041 = vmatpush1.xpose.msra.mxu0 0.0
    %2042 = vmatprep.subr.mxu0 0.0
    %2043 = vmatpush1.xpose.msra.mxu0 0.0
    %2044 = vmatprep.subr.mxu0 0.0
    %2045 = vmatpush1.xpose.msra.mxu0 0.0
    %2046 = vmatprep.subr.mxu0 0.0
    %2047 = vmatpush1.xpose.msra.mxu0 0.0
    %2048 = vmatprep.subr.mxu0 0.0
    %2049 = vmatpush1.xpose.msra.mxu0 0.0
    %2050 = vmatprep.mubr.f32.mxu0 0.0
    %2051 = vmatmul.mubr.f32.gmra.mrb[0].mxu0 %v1978
    %v2052 = vpop.f32.mrb[0].mxu0
    %v2053 = vadd.f32 0.0, %v2052
    %v2054 = vpop.f32.mrb[0].mxu0
    %2055 = vdwg.mxu0
    %v2057 = vsel %vm1581, %v788, 0
    %v2060 = vsel %vm1581, %v968, 0
    %v2063 = vsel %vm1581, %v1104, 0
    %2065 = vmatprep.subr.mxu0 0.0
    %2066 = vmatpush1.xpose.msra.mxu0 %v2060
    %2067 = vmatprep.subr.mxu0 0.0
    %2068 = vmatpush1.xpose.msra.mxu0 %v2063
    %2069 = vmatprep.subr.mxu0 0.0
    %2070 = vmatpush1.xpose.msra.mxu0 0.0
    %2071 = vmatprep.subr.mxu0 0.0
    %2072 = vmatpush1.xpose.msra.mxu0 0.0
    %2073 = vmatprep.subr.mxu0 0.0
    %2074 = vmatpush1.xpose.msra.mxu0 0.0
    %2075 = vmatprep.subr.mxu0 0.0
    %2076 = vmatpush1.xpose.msra.mxu0 0.0
    %2077 = vmatprep.subr.mxu0 0.0
    %2078 = vmatpush1.xpose.msra.mxu0 0.0
    %2079 = vmatprep.subr.mxu0 0.0
    %2080 = vmatpush1.xpose.msra.mxu0 0.0
    %2081 = vmatprep.subr.mxu0 0.0
    %2082 = vmatpush1.xpose.msra.mxu0 0.0
    %2083 = vmatprep.subr.mxu0 0.0
    %2084 = vmatpush1.xpose.msra.mxu0 0.0
    %2085 = vmatprep.subr.mxu0 0.0
    %2086 = vmatpush1.xpose.msra.mxu0 0.0
    %2087 = vmatprep.subr.mxu0 0.0
    %2088 = vmatpush1.xpose.msra.mxu0 0.0
    %2089 = vmatprep.subr.mxu0 0.0
    %2090 = vmatpush1.xpose.msra.mxu0 0.0
    %2091 = vmatprep.subr.mxu0 0.0
    %2092 = vmatpush1.xpose.msra.mxu0 0.0
    %2093 = vmatprep.subr.mxu0 0.0
    %2094 = vmatpush1.xpose.msra.mxu0 0.0
    %2095 = vmatprep.subr.mxu0 0.0
    %2096 = vmatpush1.xpose.msra.mxu0 0.0
    %2097 = vmatprep.subr.mxu0 0.0
    %2098 = vmatpush1.xpose.msra.mxu0 0.0
    %2099 = vmatprep.subr.mxu0 0.0
    %2100 = vmatpush1.xpose.msra.mxu0 0.0
    %2101 = vmatprep.subr.mxu0 0.0
    %2102 = vmatpush1.xpose.msra.mxu0 0.0
    %2103 = vmatprep.subr.mxu0 0.0
    %2104 = vmatpush1.xpose.msra.mxu0 0.0
    %2105 = vmatprep.subr.mxu0 0.0
    %2106 = vmatpush1.xpose.msra.mxu0 0.0
    %2107 = vmatprep.subr.mxu0 0.0
    %2108 = vmatpush1.xpose.msra.mxu0 0.0
    %2109 = vmatprep.subr.mxu0 0.0
    %2110 = vmatpush1.xpose.msra.mxu0 0.0
    %2111 = vmatprep.subr.mxu0 0.0
    %2112 = vmatpush1.xpose.msra.mxu0 0.0
    %2113 = vmatprep.subr.mxu0 0.0
    %2114 = vmatpush1.xpose.msra.mxu0 0.0
    %2115 = vmatprep.subr.mxu0 0.0
    %2116 = vmatpush1.xpose.msra.mxu0 0.0
    %2117 = vmatprep.subr.mxu0 0.0
    %2118 = vmatpush1.xpose.msra.mxu0 0.0
    %2119 = vmatprep.subr.mxu0 0.0
    %2120 = vmatpush1.xpose.msra.mxu0 0.0
    %2121 = vmatprep.subr.mxu0 0.0
    %2122 = vmatpush1.xpose.msra.mxu0 0.0
    %2123 = vmatprep.subr.mxu0 0.0
    %2124 = vmatpush1.xpose.msra.mxu0 0.0
    %2125 = vmatprep.subr.mxu0 0.0
    %2126 = vmatpush1.xpose.msra.mxu0 0.0
    %2127 = vmatprep.subr.mxu0 0.0
    %2128 = vmatpush1.xpose.msra.mxu0 0.0
    %2129 = vmatprep.mubr.f32.mxu0 0.0
    %2130 = vmatmul.mubr.f32.gmra.mrb[0].mxu0 %v2057
    %v2131 = vpop.f32.mrb[0].mxu0
    %v2132 = vadd.f32 0.0, %v2131
    %v2133 = vpop.f32.mrb[0].mxu0
    %2134 = vdwg.mxu0
    %v2136 = vsel %vm1581, %v789, 0
    %v2139 = vsel %vm1581, %v969, 0
    %v2142 = vsel %vm1581, %v1105, 0
    %2144 = vmatprep.subr.mxu0 0.0
    %2145 = vmatpush1.xpose.msra.mxu0 %v2139
    %2146 = vmatprep.subr.mxu0 0.0
    %2147 = vmatpush1.xpose.msra.mxu0 %v2142
    %2148 = vmatprep.subr.mxu0 0.0
    %2149 = vmatpush1.xpose.msra.mxu0 0.0
    %2150 = vmatprep.subr.mxu0 0.0
    %2151 = vmatpush1.xpose.msra.mxu0 0.0
    %2152 = vmatprep.subr.mxu0 0.0
    %2153 = vmatpush1.xpose.msra.mxu0 0.0
    %2154 = vmatprep.subr.mxu0 0.0
    %2155 = vmatpush1.xpose.msra.mxu0 0.0
    %2156 = vmatprep.subr.mxu0 0.0
    %2157 = vmatpush1.xpose.msra.mxu0 0.0
    %2158 = vmatprep.subr.mxu0 0.0
    %2159 = vmatpush1.xpose.msra.mxu0 0.0
    %2160 = vmatprep.subr.mxu0 0.0
    %2161 = vmatpush1.xpose.msra.mxu0 0.0
    %2162 = vmatprep.subr.mxu0 0.0
    %2163 = vmatpush1.xpose.msra.mxu0 0.0
    %2164 = vmatprep.subr.mxu0 0.0
    %2165 = vmatpush1.xpose.msra.mxu0 0.0
    %2166 = vmatprep.subr.mxu0 0.0
    %2167 = vmatpush1.xpose.msra.mxu0 0.0
    %2168 = vmatprep.subr.mxu0 0.0
    %2169 = vmatpush1.xpose.msra.mxu0 0.0
    %2170 = vmatprep.subr.mxu0 0.0
    %2171 = vmatpush1.xpose.msra.mxu0 0.0
    %2172 = vmatprep.subr.mxu0 0.0
    %2173 = vmatpush1.xpose.msra.mxu0 0.0
    %2174 = vmatprep.subr.mxu0 0.0
    %2175 = vmatpush1.xpose.msra.mxu0 0.0
    %2176 = vmatprep.subr.mxu0 0.0
    %2177 = vmatpush1.xpose.msra.mxu0 0.0
    %2178 = vmatprep.subr.mxu0 0.0
    %2179 = vmatpush1.xpose.msra.mxu0 0.0
    %2180 = vmatprep.subr.mxu0 0.0
    %2181 = vmatpush1.xpose.msra.mxu0 0.0
    %2182 = vmatprep.subr.mxu0 0.0
    %2183 = vmatpush1.xpose.msra.mxu0 0.0
    %2184 = vmatprep.subr.mxu0 0.0
    %2185 = vmatpush1.xpose.msra.mxu0 0.0
    %2186 = vmatprep.subr.mxu0 0.0
    %2187 = vmatpush1.xpose.msra.mxu0 0.0
    %2188 = vmatprep.subr.mxu0 0.0
    %2189 = vmatpush1.xpose.msra.mxu0 0.0
    %2190 = vmatprep.subr.mxu0 0.0
    %2191 = vmatpush1.xpose.msra.mxu0 0.0
    %2192 = vmatprep.subr.mxu0 0.0
    %2193 = vmatpush1.xpose.msra.mxu0 0.0
    %2194 = vmatprep.subr.mxu0 0.0
    %2195 = vmatpush1.xpose.msra.mxu0 0.0
    %2196 = vmatprep.subr.mxu0 0.0
    %2197 = vmatpush1.xpose.msra.mxu0 0.0
    %2198 = vmatprep.subr.mxu0 0.0
    %2199 = vmatpush1.xpose.msra.mxu0 0.0
    %2200 = vmatprep.subr.mxu0 0.0
    %2201 = vmatpush1.xpose.msra.mxu0 0.0
    %2202 = vmatprep.subr.mxu0 0.0
    %2203 = vmatpush1.xpose.msra.mxu0 0.0
    %2204 = vmatprep.subr.mxu0 0.0
    %2205 = vmatpush1.xpose.msra.mxu0 0.0
    %2206 = vmatprep.subr.mxu0 0.0
    %2207 = vmatpush1.xpose.msra.mxu0 0.0
    %2208 = vmatprep.mubr.f32.mxu0 0.0
    %2209 = vmatmul.mubr.f32.gmra.mrb[0].mxu0 %v2136
    %v2210 = vpop.f32.mrb[0].mxu0
    %v2211 = vadd.f32 0.0, %v2210
    %v2212 = vpop.f32.mrb[0].mxu0
    %2213 = vdwg.mxu0
    %v2214 = vmul.f32 %v1658, 0.25
    %v2215 = vmul.f32 %v1737, 0.25
    %v2216 = vmul.f32 %v1816, 0.25
    %v2217 = vmul.f32 %v1895, 0.25
    %v2218 = vmul.f32 %v1974, 0.25
    %v2219 = vmul.f32 %v2053, 0.25
    %v2220 = vmul.f32 %v2132, 0.25
    %v2221 = vmul.f32 %v2211, 0.25
    %v2222 = vsub.f32 %v1573, 1.0
    %v2223 = vsub.f32 %v1574, 1.0
    %v2224 = vsub.f32 %v1575, 1.0
    %v2225 = vsub.f32 %v1576, 1.0
    %v2226 = vsub.f32 %v1577, 1.0
    %v2227 = vsub.f32 %v1578, 1.0
    %v2228 = vsub.f32 %v1579, 1.0
    %v2229 = vsub.f32 %v1580, 1.0
    %v2230 = vmul.f32 %v2222, 1e+30
    %v2231 = vmul.f32 %v2223, 1e+30
    %v2232 = vmul.f32 %v2224, 1e+30
    %v2233 = vmul.f32 %v2225, 1e+30
    %v2234 = vmul.f32 %v2226, 1e+30
    %v2235 = vmul.f32 %v2227, 1e+30
    %v2236 = vmul.f32 %v2228, 1e+30
    %v2237 = vmul.f32 %v2229, 1e+30
    %v2238 = vadd.f32 %v2214, %v2230
    %v2239 = vadd.f32 %v2215, %v2231
    %v2240 = vadd.f32 %v2216, %v2232
    %v2241 = vadd.f32 %v2217, %v2233
    %v2242 = vadd.f32 %v2218, %v2234
    %v2243 = vadd.f32 %v2219, %v2235
    %v2244 = vadd.f32 %v2220, %v2236
    %v2245 = vadd.f32 %v2221, %v2237
    %v2246 = vsel %vm1581, %v2238, -inf
    %2247 = vmax.xlane.f32.xlu0 %v2246
    %v2248 = vpop.xlane.xlu0 %2247
    %v2249 = vsel %vm1581, %v2239, -inf
    %2250 = vmax.xlane.f32.xlu0 %v2249
    %v2251 = vpop.xlane.xlu0 %2250
    %v2252 = vsel %vm1581, %v2240, -inf
    %2253 = vmax.xlane.f32.xlu0 %v2252
    %v2254 = vpop.xlane.xlu0 %2253
    %v2255 = vsel %vm1581, %v2241, -inf
    %2256 = vmax.xlane.f32.xlu0 %v2255
    %v2257 = vpop.xlane.xlu0 %2256
    %v2258 = vsel %vm1581, %v2242, -inf
    %2259 = vmax.xlane.f32.xlu0 %v2258
    %v2260 = vpop.xlane.xlu0 %2259
    %v2261 = vsel %vm1581, %v2243, -inf
    %2262 = vmax.xlane.f32.xlu0 %v2261
    %v2263 = vpop.xlane.xlu0 %2262
    %v2264 = vsel %vm1581, %v2244, -inf
    %2265 = vmax.xlane.f32.xlu0 %v2264
    %v2266 = vpop.xlane.xlu0 %2265
    %v2267 = vsel %vm1581, %v2245, -inf
    %2268 = vmax.xlane.f32.xlu0 %v2267
    %v2269 = vpop.xlane.xlu0 %2268
    %v2270 = vsub.f32 %v2238, %v2248
    %v2271 = vsub.f32 %v2239, %v2251
    %v2272 = vsub.f32 %v2240, %v2254
    %v2273 = vsub.f32 %v2241, %v2257
    %v2274 = vsub.f32 %v2242, %v2260
    %v2275 = vsub.f32 %v2243, %v2263
    %v2276 = vsub.f32 %v2244, %v2266
    %v2277 = vsub.f32 %v2245, %v2269
    %v2278 = vmul.f32 %v2270, 1.442695
    %v2279 = vpow.pop %v2278
    %v2280 = vmul.f32 %v2271, 1.442695
    %v2281 = vpow.pop %v2280
    %v2282 = vmul.f32 %v2272, 1.442695
    %v2283 = vpow.pop %v2282
    %v2284 = vmul.f32 %v2273, 1.442695
    %v2285 = vpow.pop %v2284
    %v2286 = vmul.f32 %v2274, 1.442695
    %v2287 = vpow.pop %v2286
    %v2288 = vmul.f32 %v2275, 1.442695
    %v2289 = vpow.pop %v2288
    %v2290 = vmul.f32 %v2276, 1.442695
    %v2291 = vpow.pop %v2290
    %v2292 = vmul.f32 %v2277, 1.442695
    %v2293 = vpow.pop %v2292
    %v2294 = vmul.f32 %v2279, %v1573
    %v2295 = vmul.f32 %v2281, %v1574
    %v2296 = vmul.f32 %v2283, %v1575
    %v2297 = vmul.f32 %v2285, %v1576
    %v2298 = vmul.f32 %v2287, %v1577
    %v2299 = vmul.f32 %v2289, %v1578
    %v2300 = vmul.f32 %v2291, %v1579
    %v2301 = vmul.f32 %v2293, %v1580
    %v2302 = vsel %vm1581, %v2294, 0.0
    %2303 = vadd.xlane.f32.xlu0 %v2302
    %v2304 = vpop.xlane.xlu0 %2303
    %v2305 = vsel %vm1581, %v2295, 0.0
    %2306 = vadd.xlane.f32.xlu0 %v2305
    %v2307 = vpop.xlane.xlu0 %2306
    %v2308 = vsel %vm1581, %v2296, 0.0
    %2309 = vadd.xlane.f32.xlu0 %v2308
    %v2310 = vpop.xlane.xlu0 %2309
    %v2311 = vsel %vm1581, %v2297, 0.0
    %2312 = vadd.xlane.f32.xlu0 %v2311
    %v2313 = vpop.xlane.xlu0 %2312
    %v2314 = vsel %vm1581, %v2298, 0.0
    %2315 = vadd.xlane.f32.xlu0 %v2314
    %v2316 = vpop.xlane.xlu0 %2315
    %v2317 = vsel %vm1581, %v2299, 0.0
    %2318 = vadd.xlane.f32.xlu0 %v2317
    %v2319 = vpop.xlane.xlu0 %2318
    %v2320 = vsel %vm1581, %v2300, 0.0
    %2321 = vadd.xlane.f32.xlu0 %v2320
    %v2322 = vpop.xlane.xlu0 %2321
    %v2323 = vsel %vm1581, %v2301, 0.0
    %2324 = vadd.xlane.f32.xlu0 %v2323
    %v2325 = vpop.xlane.xlu0 %2324
    %vm2326 = vcmp.gt.f32.partialorder %v2304, 0.0
    %vm2327 = vcmp.gt.f32.partialorder %v2307, 0.0
    %vm2328 = vcmp.gt.f32.partialorder %v2310, 0.0
    %vm2329 = vcmp.gt.f32.partialorder %v2313, 0.0
    %vm2330 = vcmp.gt.f32.partialorder %v2316, 0.0
    %vm2331 = vcmp.gt.f32.partialorder %v2319, 0.0
    %vm2332 = vcmp.gt.f32.partialorder %v2322, 0.0
    %vm2333 = vcmp.gt.f32.partialorder %v2325, 0.0
    %v2334 = vsel %vm2326, %v2304, 1.0
    %v2335 = vsel %vm2327, %v2307, 1.0
    %v2336 = vsel %vm2328, %v2310, 1.0
    %v2337 = vsel %vm2329, %v2313, 1.0
    %v2338 = vsel %vm2330, %v2316, 1.0
    %v2339 = vsel %vm2331, %v2319, 1.0
    %v2340 = vsel %vm2332, %v2322, 1.0
    %v2341 = vsel %vm2333, %v2325, 1.0
    %v2342 = vrcp.pop %v2334
    %v2343 = vmul.f32 %v2294, %v2342
    %v2344 = vrcp.pop %v2335
    %v2345 = vmul.f32 %v2295, %v2344
    %v2346 = vrcp.pop %v2336
    %v2347 = vmul.f32 %v2296, %v2346
    %v2348 = vrcp.pop %v2337
    %v2349 = vmul.f32 %v2297, %v2348
    %v2350 = vrcp.pop %v2338
    %v2351 = vmul.f32 %v2298, %v2350
    %v2352 = vrcp.pop %v2339
    %v2353 = vmul.f32 %v2299, %v2352
    %v2354 = vrcp.pop %v2340
    %v2355 = vmul.f32 %v2300, %v2354
    %v2356 = vrcp.pop %v2341
    %v2357 = vmul.f32 %v2301, %v2356
    %v2359 = vsel %vm1581, %v2343, 0
    %2361 = vmatprep.subr.mxu0 0.0
    %2362 = vmatpush1.msra.mxu0 %v1278
    %2363 = vmatprep.subr.mxu0 0.0
    %2364 = vmatpush1.msra.mxu0 %v1414
    %2365 = vmatprep.subr.mxu0 0.0
    %2366 = vmatpush1.msra.mxu0 0.0
    %2367 = vmatprep.subr.mxu0 0.0
    %2368 = vmatpush1.msra.mxu0 0.0
    %2369 = vmatprep.subr.mxu0 0.0
    %2370 = vmatpush1.msra.mxu0 0.0
    %2371 = vmatprep.subr.mxu0 0.0
    %2372 = vmatpush1.msra.mxu0 0.0
    %2373 = vmatprep.subr.mxu0 0.0
    %2374 = vmatpush1.msra.mxu0 0.0
    %2375 = vmatprep.subr.mxu0 0.0
    %2376 = vmatpush1.msra.mxu0 0.0
    %2377 = vmatprep.subr.mxu0 0.0
    %2378 = vmatpush1.msra.mxu0 0.0
    %2379 = vmatprep.subr.mxu0 0.0
    %2380 = vmatpush1.msra.mxu0 0.0
    %2381 = vmatprep.subr.mxu0 0.0
    %2382 = vmatpush1.msra.mxu0 0.0
    %2383 = vmatprep.subr.mxu0 0.0
    %2384 = vmatpush1.msra.mxu0 0.0
    %2385 = vmatprep.subr.mxu0 0.0
    %2386 = vmatpush1.msra.mxu0 0.0
    %2387 = vmatprep.subr.mxu0 0.0
    %2388 = vmatpush1.msra.mxu0 0.0
    %2389 = vmatprep.subr.mxu0 0.0
    %2390 = vmatpush1.msra.mxu0 0.0
    %2391 = vmatprep.subr.mxu0 0.0
    %2392 = vmatpush1.msra.mxu0 0.0
    %2393 = vmatprep.subr.mxu0 0.0
    %2394 = vmatpush1.msra.mxu0 0.0
    %2395 = vmatprep.subr.mxu0 0.0
    %2396 = vmatpush1.msra.mxu0 0.0
    %2397 = vmatprep.subr.mxu0 0.0
    %2398 = vmatpush1.msra.mxu0 0.0
    %2399 = vmatprep.subr.mxu0 0.0
    %2400 = vmatpush1.msra.mxu0 0.0
    %2401 = vmatprep.subr.mxu0 0.0
    %2402 = vmatpush1.msra.mxu0 0.0
    %2403 = vmatprep.subr.mxu0 0.0
    %2404 = vmatpush1.msra.mxu0 0.0
    %2405 = vmatprep.subr.mxu0 0.0
    %2406 = vmatpush1.msra.mxu0 0.0
    %2407 = vmatprep.subr.mxu0 0.0
    %2408 = vmatpush1.msra.mxu0 0.0
    %2409 = vmatprep.subr.mxu0 0.0
    %2410 = vmatpush1.msra.mxu0 0.0
    %2411 = vmatprep.subr.mxu0 0.0
    %2412 = vmatpush1.msra.mxu0 0.0
    %2413 = vmatprep.subr.mxu0 0.0
    %2414 = vmatpush1.msra.mxu0 0.0
    %2415 = vmatprep.subr.mxu0 0.0
    %2416 = vmatpush1.msra.mxu0 0.0
    %2417 = vmatprep.subr.mxu0 0.0
    %2418 = vmatpush1.msra.mxu0 0.0
    %2419 = vmatprep.subr.mxu0 0.0
    %2420 = vmatpush1.msra.mxu0 0.0
    %2421 = vmatprep.subr.mxu0 0.0
    %2422 = vmatpush1.msra.mxu0 0.0
    %2423 = vmatprep.subr.mxu0 0.0
    %2424 = vmatpush1.msra.mxu0 0.0
    %2425 = vmatprep.mubr.f32.mxu0 0.0
    %2426 = vmatmul.mubr.f32.gmra.mrb[0].mxu0 %v2359
    %v2427 = vpop.f32.mrb[0].mxu0
    %v2428 = vadd.f32 0.0, %v2427
    %v2429 = vpop.f32.mrb[0].mxu0
    %2430 = vdwg.mxu0
    %v2432 = vsel %vm1581, %v2345, 0
    %2434 = vmatprep.subr.mxu0 0.0
    %2435 = vmatpush1.msra.mxu0 %v1279
    %2436 = vmatprep.subr.mxu0 0.0
    %2437 = vmatpush1.msra.mxu0 %v1415
    %2438 = vmatprep.subr.mxu0 0.0
    %2439 = vmatpush1.msra.mxu0 0.0
    %2440 = vmatprep.subr.mxu0 0.0
    %2441 = vmatpush1.msra.mxu0 0.0
    %2442 = vmatprep.subr.mxu0 0.0
    %2443 = vmatpush1.msra.mxu0 0.0
    %2444 = vmatprep.subr.mxu0 0.0
    %2445 = vmatpush1.msra.mxu0 0.0
    %2446 = vmatprep.subr.mxu0 0.0
    %2447 = vmatpush1.msra.mxu0 0.0
    %2448 = vmatprep.subr.mxu0 0.0
    %2449 = vmatpush1.msra.mxu0 0.0
    %2450 = vmatprep.subr.mxu0 0.0
    %2451 = vmatpush1.msra.mxu0 0.0
    %2452 = vmatprep.subr.mxu0 0.0
    %2453 = vmatpush1.msra.mxu0 0.0
    %2454 = vmatprep.subr.mxu0 0.0
    %2455 = vmatpush1.msra.mxu0 0.0
    %2456 = vmatprep.subr.mxu0 0.0
    %2457 = vmatpush1.msra.mxu0 0.0
    %2458 = vmatprep.subr.mxu0 0.0
    %2459 = vmatpush1.msra.mxu0 0.0
    %2460 = vmatprep.subr.mxu0 0.0
    %2461 = vmatpush1.msra.mxu0 0.0
    %2462 = vmatprep.subr.mxu0 0.0
    %2463 = vmatpush1.msra.mxu0 0.0
    %2464 = vmatprep.subr.mxu0 0.0
    %2465 = vmatpush1.msra.mxu0 0.0
    %2466 = vmatprep.subr.mxu0 0.0
    %2467 = vmatpush1.msra.mxu0 0.0
    %2468 = vmatprep.subr.mxu0 0.0
    %2469 = vmatpush1.msra.mxu0 0.0
    %2470 = vmatprep.subr.mxu0 0.0
    %2471 = vmatpush1.msra.mxu0 0.0
    %2472 = vmatprep.subr.mxu0 0.0
    %2473 = vmatpush1.msra.mxu0 0.0
    %2474 = vmatprep.subr.mxu0 0.0
    %2475 = vmatpush1.msra.mxu0 0.0
    %2476 = vmatprep.subr.mxu0 0.0
    %2477 = vmatpush1.msra.mxu0 0.0
    %2478 = vmatprep.subr.mxu0 0.0
    %2479 = vmatpush1.msra.mxu0 0.0
    %2480 = vmatprep.subr.mxu0 0.0
    %2481 = vmatpush1.msra.mxu0 0.0
    %2482 = vmatprep.subr.mxu0 0.0
    %2483 = vmatpush1.msra.mxu0 0.0
    %2484 = vmatprep.subr.mxu0 0.0
    %2485 = vmatpush1.msra.mxu0 0.0
    %2486 = vmatprep.subr.mxu0 0.0
    %2487 = vmatpush1.msra.mxu0 0.0
    %2488 = vmatprep.subr.mxu0 0.0
    %2489 = vmatpush1.msra.mxu0 0.0
    %2490 = vmatprep.subr.mxu0 0.0
    %2491 = vmatpush1.msra.mxu0 0.0
    %2492 = vmatprep.subr.mxu0 0.0
    %2493 = vmatpush1.msra.mxu0 0.0
    %2494 = vmatprep.subr.mxu0 0.0
    %2495 = vmatpush1.msra.mxu0 0.0
    %2496 = vmatprep.subr.mxu0 0.0
    %2497 = vmatpush1.msra.mxu0 0.0
    %2498 = vmatprep.mubr.f32.mxu0 0.0
    %2499 = vmatmul.mubr.f32.gmra.mrb[0].mxu0 %v2432
    %v2500 = vpop.f32.mrb[0].mxu0
    %v2501 = vadd.f32 0.0, %v2500
    %v2502 = vpop.f32.mrb[0].mxu0
    %2503 = vdwg.mxu0
    %v2505 = vsel %vm1581, %v2347, 0
    %2507 = vmatprep.subr.mxu0 0.0
    %2508 = vmatpush1.msra.mxu0 %v1280
    %2509 = vmatprep.subr.mxu0 0.0
    %2510 = vmatpush1.msra.mxu0 %v1416
    %2511 = vmatprep.subr.mxu0 0.0
    %2512 = vmatpush1.msra.mxu0 0.0
    %2513 = vmatprep.subr.mxu0 0.0
    %2514 = vmatpush1.msra.mxu0 0.0
    %2515 = vmatprep.subr.mxu0 0.0
    %2516 = vmatpush1.msra.mxu0 0.0
    %2517 = vmatprep.subr.mxu0 0.0
    %2518 = vmatpush1.msra.mxu0 0.0
    %2519 = vmatprep.subr.mxu0 0.0
    %2520 = vmatpush1.msra.mxu0 0.0
    %2521 = vmatprep.subr.mxu0 0.0
    %2522 = vmatpush1.msra.mxu0 0.0
    %2523 = vmatprep.subr.mxu0 0.0
    %2524 = vmatpush1.msra.mxu0 0.0
    %2525 = vmatprep.subr.mxu0 0.0
    %2526 = vmatpush1.msra.mxu0 0.0
    %2527 = vmatprep.subr.mxu0 0.0
    %2528 = vmatpush1.msra.mxu0 0.0
    %2529 = vmatprep.subr.mxu0 0.0
    %2530 = vmatpush1.msra.mxu0 0.0
    %2531 = vmatprep.subr.mxu0 0.0
    %2532 = vmatpush1.msra.mxu0 0.0
    %2533 = vmatprep.subr.mxu0 0.0
    %2534 = vmatpush1.msra.mxu0 0.0
    %2535 = vmatprep.subr.mxu0 0.0
    %2536 = vmatpush1.msra.mxu0 0.0
    %2537 = vmatprep.subr.mxu0 0.0
    %2538 = vmatpush1.msra.mxu0 0.0
    %2539 = vmatprep.subr.mxu0 0.0
    %2540 = vmatpush1.msra.mxu0 0.0
    %2541 = vmatprep.subr.mxu0 0.0
    %2542 = vmatpush1.msra.mxu0 0.0
    %2543 = vmatprep.subr.mxu0 0.0
    %2544 = vmatpush1.msra.mxu0 0.0
    %2545 = vmatprep.subr.mxu0 0.0
    %2546 = vmatpush1.msra.mxu0 0.0
    %2547 = vmatprep.subr.mxu0 0.0
    %2548 = vmatpush1.msra.mxu0 0.0
    %2549 = vmatprep.subr.mxu0 0.0
    %2550 = vmatpush1.msra.mxu0 0.0
    %2551 = vmatprep.subr.mxu0 0.0
    %2552 = vmatpush1.msra.mxu0 0.0
    %2553 = vmatprep.subr.mxu0 0.0
    %2554 = vmatpush1.msra.mxu0 0.0
    %2555 = vmatprep.subr.mxu0 0.0
    %2556 = vmatpush1.msra.mxu0 0.0
    %2557 = vmatprep.subr.mxu0 0.0
    %2558 = vmatpush1.msra.mxu0 0.0
    %2559 = vmatprep.subr.mxu0 0.0
    %2560 = vmatpush1.msra.mxu0 0.0
    %2561 = vmatprep.subr.mxu0 0.0
    %2562 = vmatpush1.msra.mxu0 0.0
    %2563 = vmatprep.subr.mxu0 0.0
    %2564 = vmatpush1.msra.mxu0 0.0
    %2565 = vmatprep.subr.mxu0 0.0
    %2566 = vmatpush1.msra.mxu0 0.0
    %2567 = vmatprep.subr.mxu0 0.0
    %2568 = vmatpush1.msra.mxu0 0.0
    %2569 = vmatprep.subr.mxu0 0.0
    %2570 = vmatpush1.msra.mxu0 0.0
    %2571 = vmatprep.mubr.f32.mxu0 0.0
    %2572 = vmatmul.mubr.f32.gmra.mrb[0].mxu0 %v2505
    %v2573 = vpop.f32.mrb[0].mxu0
    %v2574 = vadd.f32 0.0, %v2573
    %v2575 = vpop.f32.mrb[0].mxu0
    %2576 = vdwg.mxu0
    %v2578 = vsel %vm1581, %v2349, 0
    %2580 = vmatprep.subr.mxu0 0.0
    %2581 = vmatpush1.msra.mxu0 %v1281
    %2582 = vmatprep.subr.mxu0 0.0
    %2583 = vmatpush1.msra.mxu0 %v1417
    %2584 = vmatprep.subr.mxu0 0.0
    %2585 = vmatpush1.msra.mxu0 0.0
    %2586 = vmatprep.subr.mxu0 0.0
    %2587 = vmatpush1.msra.mxu0 0.0
    %2588 = vmatprep.subr.mxu0 0.0
    %2589 = vmatpush1.msra.mxu0 0.0
    %2590 = vmatprep.subr.mxu0 0.0
    %2591 = vmatpush1.msra.mxu0 0.0
    %2592 = vmatprep.subr.mxu0 0.0
    %2593 = vmatpush1.msra.mxu0 0.0
    %2594 = vmatprep.subr.mxu0 0.0
    %2595 = vmatpush1.msra.mxu0 0.0
    %2596 = vmatprep.subr.mxu0 0.0
    %2597 = vmatpush1.msra.mxu0 0.0
    %2598 = vmatprep.subr.mxu0 0.0
    %2599 = vmatpush1.msra.mxu0 0.0
    %2600 = vmatprep.subr.mxu0 0.0
    %2601 = vmatpush1.msra.mxu0 0.0
    %2602 = vmatprep.subr.mxu0 0.0
    %2603 = vmatpush1.msra.mxu0 0.0
    %2604 = vmatprep.subr.mxu0 0.0
    %2605 = vmatpush1.msra.mxu0 0.0
    %2606 = vmatprep.subr.mxu0 0.0
    %2607 = vmatpush1.msra.mxu0 0.0
    %2608 = vmatprep.subr.mxu0 0.0
    %2609 = vmatpush1.msra.mxu0 0.0
    %2610 = vmatprep.subr.mxu0 0.0
    %2611 = vmatpush1.msra.mxu0 0.0
    %2612 = vmatprep.subr.mxu0 0.0
    %2613 = vmatpush1.msra.mxu0 0.0
    %2614 = vmatprep.subr.mxu0 0.0
    %2615 = vmatpush1.msra.mxu0 0.0
    %2616 = vmatprep.subr.mxu0 0.0
    %2617 = vmatpush1.msra.mxu0 0.0
    %2618 = vmatprep.subr.mxu0 0.0
    %2619 = vmatpush1.msra.mxu0 0.0
    %2620 = vmatprep.subr.mxu0 0.0
    %2621 = vmatpush1.msra.mxu0 0.0
    %2622 = vmatprep.subr.mxu0 0.0
    %2623 = vmatpush1.msra.mxu0 0.0
    %2624 = vmatprep.subr.mxu0 0.0
    %2625 = vmatpush1.msra.mxu0 0.0
    %2626 = vmatprep.subr.mxu0 0.0
    %2627 = vmatpush1.msra.mxu0 0.0
    %2628 = vmatprep.subr.mxu0 0.0
    %2629 = vmatpush1.msra.mxu0 0.0
    %2630 = vmatprep.subr.mxu0 0.0
    %2631 = vmatpush1.msra.mxu0 0.0
    %2632 = vmatprep.subr.mxu0 0.0
    %2633 = vmatpush1.msra.mxu0 0.0
    %2634 = vmatprep.subr.mxu0 0.0
    %2635 = vmatpush1.msra.mxu0 0.0
    %2636 = vmatprep.subr.mxu0 0.0
    %2637 = vmatpush1.msra.mxu0 0.0
    %2638 = vmatprep.subr.mxu0 0.0
    %2639 = vmatpush1.msra.mxu0 0.0
    %2640 = vmatprep.subr.mxu0 0.0
    %2641 = vmatpush1.msra.mxu0 0.0
    %2642 = vmatprep.subr.mxu0 0.0
    %2643 = vmatpush1.msra.mxu0 0.0
    %2644 = vmatprep.mubr.f32.mxu0 0.0
    %2645 = vmatmul.mubr.f32.gmra.mrb[0].mxu0 %v2578
    %v2646 = vpop.f32.mrb[0].mxu0
    %v2647 = vadd.f32 0.0, %v2646
    %v2648 = vpop.f32.mrb[0].mxu0
    %2649 = vdwg.mxu0
    %v2651 = vsel %vm1581, %v2351, 0
    %2653 = vmatprep.subr.mxu0 0.0
    %2654 = vmatpush1.msra.mxu0 %v1282
    %2655 = vmatprep.subr.mxu0 0.0
    %2656 = vmatpush1.msra.mxu0 %v1418
    %2657 = vmatprep.subr.mxu0 0.0
    %2658 = vmatpush1.msra.mxu0 0.0
    %2659 = vmatprep.subr.mxu0 0.0
    %2660 = vmatpush1.msra.mxu0 0.0
    %2661 = vmatprep.subr.mxu0 0.0
    %2662 = vmatpush1.msra.mxu0 0.0
    %2663 = vmatprep.subr.mxu0 0.0
    %2664 = vmatpush1.msra.mxu0 0.0
    %2665 = vmatprep.subr.mxu0 0.0
    %2666 = vmatpush1.msra.mxu0 0.0
    %2667 = vmatprep.subr.mxu0 0.0
    %2668 = vmatpush1.msra.mxu0 0.0
    %2669 = vmatprep.subr.mxu0 0.0
    %2670 = vmatpush1.msra.mxu0 0.0
    %2671 = vmatprep.subr.mxu0 0.0
    %2672 = vmatpush1.msra.mxu0 0.0
    %2673 = vmatprep.subr.mxu0 0.0
    %2674 = vmatpush1.msra.mxu0 0.0
    %2675 = vmatprep.subr.mxu0 0.0
    %2676 = vmatpush1.msra.mxu0 0.0
    %2677 = vmatprep.subr.mxu0 0.0
    %2678 = vmatpush1.msra.mxu0 0.0
    %2679 = vmatprep.subr.mxu0 0.0
    %2680 = vmatpush1.msra.mxu0 0.0
    %2681 = vmatprep.subr.mxu0 0.0
    %2682 = vmatpush1.msra.mxu0 0.0
    %2683 = vmatprep.subr.mxu0 0.0
    %2684 = vmatpush1.msra.mxu0 0.0
    %2685 = vmatprep.subr.mxu0 0.0
    %2686 = vmatpush1.msra.mxu0 0.0
    %2687 = vmatprep.subr.mxu0 0.0
    %2688 = vmatpush1.msra.mxu0 0.0
    %2689 = vmatprep.subr.mxu0 0.0
    %2690 = vmatpush1.msra.mxu0 0.0
    %2691 = vmatprep.subr.mxu0 0.0
    %2692 = vmatpush1.msra.mxu0 0.0
    %2693 = vmatprep.subr.mxu0 0.0
    %2694 = vmatpush1.msra.mxu0 0.0
    %2695 = vmatprep.subr.mxu0 0.0
    %2696 = vmatpush1.msra.mxu0 0.0
    %2697 = vmatprep.subr.mxu0 0.0
    %2698 = vmatpush1.msra.mxu0 0.0
    %2699 = vmatprep.subr.mxu0 0.0
    %2700 = vmatpush1.msra.mxu0 0.0
    %2701 = vmatprep.subr.mxu0 0.0
    %2702 = vmatpush1.msra.mxu0 0.0
    %2703 = vmatprep.subr.mxu0 0.0
    %2704 = vmatpush1.msra.mxu0 0.0
    %2705 = vmatprep.subr.mxu0 0.0
    %2706 = vmatpush1.msra.mxu0 0.0
    %2707 = vmatprep.subr.mxu0 0.0
    %2708 = vmatpush1.msra.mxu0 0.0
    %2709 = vmatprep.subr.mxu0 0.0
    %2710 = vmatpush1.msra.mxu0 0.0
    %2711 = vmatprep.subr.mxu0 0.0
    %2712 = vmatpush1.msra.mxu0 0.0
    %2713 = vmatprep.subr.mxu0 0.0
    %2714 = vmatpush1.msra.mxu0 0.0
    %2715 = vmatprep.subr.mxu0 0.0
    %2716 = vmatpush1.msra.mxu0 0.0
    %2717 = vmatprep.mubr.f32.mxu0 0.0
    %2718 = vmatmul.mubr.f32.gmra.mrb[0].mxu0 %v2651
    %v2719 = vpop.f32.mrb[0].mxu0
    %v2720 = vadd.f32 0.0, %v2719
    %v2721 = vpop.f32.mrb[0].mxu0
    %2722 = vdwg.mxu0
    %v2724 = vsel %vm1581, %v2353, 0
    %2726 = vmatprep.subr.mxu0 0.0
    %2727 = vmatpush1.msra.mxu0 %v1283
    %2728 = vmatprep.subr.mxu0 0.0
    %2729 = vmatpush1.msra.mxu0 %v1419
    %2730 = vmatprep.subr.mxu0 0.0
    %2731 = vmatpush1.msra.mxu0 0.0
    %2732 = vmatprep.subr.mxu0 0.0
    %2733 = vmatpush1.msra.mxu0 0.0
    %2734 = vmatprep.subr.mxu0 0.0
    %2735 = vmatpush1.msra.mxu0 0.0
    %2736 = vmatprep.subr.mxu0 0.0
    %2737 = vmatpush1.msra.mxu0 0.0
    %2738 = vmatprep.subr.mxu0 0.0
    %2739 = vmatpush1.msra.mxu0 0.0
    %2740 = vmatprep.subr.mxu0 0.0
    %2741 = vmatpush1.msra.mxu0 0.0
    %2742 = vmatprep.subr.mxu0 0.0
    %2743 = vmatpush1.msra.mxu0 0.0
    %2744 = vmatprep.subr.mxu0 0.0
    %2745 = vmatpush1.msra.mxu0 0.0
    %2746 = vmatprep.subr.mxu0 0.0
    %2747 = vmatpush1.msra.mxu0 0.0
    %2748 = vmatprep.subr.mxu0 0.0
    %2749 = vmatpush1.msra.mxu0 0.0
    %2750 = vmatprep.subr.mxu0 0.0
    %2751 = vmatpush1.msra.mxu0 0.0
    %2752 = vmatprep.subr.mxu0 0.0
    %2753 = vmatpush1.msra.mxu0 0.0
    %2754 = vmatprep.subr.mxu0 0.0
    %2755 = vmatpush1.msra.mxu0 0.0
    %2756 = vmatprep.subr.mxu0 0.0
    %2757 = vmatpush1.msra.mxu0 0.0
    %2758 = vmatprep.subr.mxu0 0.0
    %2759 = vmatpush1.msra.mxu0 0.0
    %2760 = vmatprep.subr.mxu0 0.0
    %2761 = vmatpush1.msra.mxu0 0.0
    %2762 = vmatprep.subr.mxu0 0.0
    %2763 = vmatpush1.msra.mxu0 0.0
    %2764 = vmatprep.subr.mxu0 0.0
    %2765 = vmatpush1.msra.mxu0 0.0
    %2766 = vmatprep.subr.mxu0 0.0
    %2767 = vmatpush1.msra.mxu0 0.0
    %2768 = vmatprep.subr.mxu0 0.0
    %2769 = vmatpush1.msra.mxu0 0.0
    %2770 = vmatprep.subr.mxu0 0.0
    %2771 = vmatpush1.msra.mxu0 0.0
    %2772 = vmatprep.subr.mxu0 0.0
    %2773 = vmatpush1.msra.mxu0 0.0
    %2774 = vmatprep.subr.mxu0 0.0
    %2775 = vmatpush1.msra.mxu0 0.0
    %2776 = vmatprep.subr.mxu0 0.0
    %2777 = vmatpush1.msra.mxu0 0.0
    %2778 = vmatprep.subr.mxu0 0.0
    %2779 = vmatpush1.msra.mxu0 0.0
    %2780 = vmatprep.subr.mxu0 0.0
    %2781 = vmatpush1.msra.mxu0 0.0
    %2782 = vmatprep.subr.mxu0 0.0
    %2783 = vmatpush1.msra.mxu0 0.0
    %2784 = vmatprep.subr.mxu0 0.0
    %2785 = vmatpush1.msra.mxu0 0.0
    %2786 = vmatprep.subr.mxu0 0.0
    %2787 = vmatpush1.msra.mxu0 0.0
    %2788 = vmatprep.subr.mxu0 0.0
    %2789 = vmatpush1.msra.mxu0 0.0
    %2790 = vmatprep.mubr.f32.mxu0 0.0
    %2791 = vmatmul.mubr.f32.gmra.mrb[0].mxu0 %v2724
    %v2792 = vpop.f32.mrb[0].mxu0
    %v2793 = vadd.f32 0.0, %v2792
    %v2794 = vpop.f32.mrb[0].mxu0
    %2795 = vdwg.mxu0
    %v2797 = vsel %vm1581, %v2355, 0
    %2799 = vmatprep.subr.mxu0 0.0
    %2800 = vmatpush1.msra.mxu0 %v1284
    %2801 = vmatprep.subr.mxu0 0.0
    %2802 = vmatpush1.msra.mxu0 %v1420
    %2803 = vmatprep.subr.mxu0 0.0
    %2804 = vmatpush1.msra.mxu0 0.0
    %2805 = vmatprep.subr.mxu0 0.0
    %2806 = vmatpush1.msra.mxu0 0.0
    %2807 = vmatprep.subr.mxu0 0.0
    %2808 = vmatpush1.msra.mxu0 0.0
    %2809 = vmatprep.subr.mxu0 0.0
    %2810 = vmatpush1.msra.mxu0 0.0
    %2811 = vmatprep.subr.mxu0 0.0
    %2812 = vmatpush1.msra.mxu0 0.0
    %2813 = vmatprep.subr.mxu0 0.0
    %2814 = vmatpush1.msra.mxu0 0.0
    %2815 = vmatprep.subr.mxu0 0.0
    %2816 = vmatpush1.msra.mxu0 0.0
    %2817 = vmatprep.subr.mxu0 0.0
    %2818 = vmatpush1.msra.mxu0 0.0
    %2819 = vmatprep.subr.mxu0 0.0
    %2820 = vmatpush1.msra.mxu0 0.0
    %2821 = vmatprep.subr.mxu0 0.0
    %2822 = vmatpush1.msra.mxu0 0.0
    %2823 = vmatprep.subr.mxu0 0.0
    %2824 = vmatpush1.msra.mxu0 0.0
    %2825 = vmatprep.subr.mxu0 0.0
    %2826 = vmatpush1.msra.mxu0 0.0
    %2827 = vmatprep.subr.mxu0 0.0
    %2828 = vmatpush1.msra.mxu0 0.0
    %2829 = vmatprep.subr.mxu0 0.0
    %2830 = vmatpush1.msra.mxu0 0.0
    %2831 = vmatprep.subr.mxu0 0.0
    %2832 = vmatpush1.msra.mxu0 0.0
    %2833 = vmatprep.subr.mxu0 0.0
    %2834 = vmatpush1.msra.mxu0 0.0
    %2835 = vmatprep.subr.mxu0 0.0
    %2836 = vmatpush1.msra.mxu0 0.0
    %2837 = vmatprep.subr.mxu0 0.0
    %2838 = vmatpush1.msra.mxu0 0.0
    %2839 = vmatprep.subr.mxu0 0.0
    %2840 = vmatpush1.msra.mxu0 0.0
    %2841 = vmatprep.subr.mxu0 0.0
    %2842 = vmatpush1.msra.mxu0 0.0
    %2843 = vmatprep.subr.mxu0 0.0
    %2844 = vmatpush1.msra.mxu0 0.0
    %2845 = vmatprep.subr.mxu0 0.0
    %2846 = vmatpush1.msra.mxu0 0.0
    %2847 = vmatprep.subr.mxu0 0.0
    %2848 = vmatpush1.msra.mxu0 0.0
    %2849 = vmatprep.subr.mxu0 0.0
    %2850 = vmatpush1.msra.mxu0 0.0
    %2851 = vmatprep.subr.mxu0 0.0
    %2852 = vmatpush1.msra.mxu0 0.0
    %2853 = vmatprep.subr.mxu0 0.0
    %2854 = vmatpush1.msra.mxu0 0.0
    %2855 = vmatprep.subr.mxu0 0.0
    %2856 = vmatpush1.msra.mxu0 0.0
    %2857 = vmatprep.subr.mxu0 0.0
    %2858 = vmatpush1.msra.mxu0 0.0
    %2859 = vmatprep.subr.mxu0 0.0
    %2860 = vmatpush1.msra.mxu0 0.0
    %2861 = vmatprep.subr.mxu0 0.0
    %2862 = vmatpush1.msra.mxu0 0.0
    %2863 = vmatprep.mubr.f32.mxu0 0.0
    %2864 = vmatmul.mubr.f32.gmra.mrb[0].mxu0 %v2797
    %v2865 = vpop.f32.mrb[0].mxu0
    %v2866 = vadd.f32 0.0, %v2865
    %v2867 = vpop.f32.mrb[0].mxu0
    %2868 = vdwg.mxu0
    %v2870 = vsel %vm1581, %v2357, 0
    %2872 = vmatprep.subr.mxu0 0.0
    %2873 = vmatpush1.msra.mxu0 %v1285
    %2874 = vmatprep.subr.mxu0 0.0
    %2875 = vmatpush1.msra.mxu0 %v1421
    %2876 = vmatprep.subr.mxu0 0.0
    %2877 = vmatpush1.msra.mxu0 0.0
    %2878 = vmatprep.subr.mxu0 0.0
    %2879 = vmatpush1.msra.mxu0 0.0
    %2880 = vmatprep.subr.mxu0 0.0
    %2881 = vmatpush1.msra.mxu0 0.0
    %2882 = vmatprep.subr.mxu0 0.0
    %2883 = vmatpush1.msra.mxu0 0.0
    %2884 = vmatprep.subr.mxu0 0.0
    %2885 = vmatpush1.msra.mxu0 0.0
    %2886 = vmatprep.subr.mxu0 0.0
    %2887 = vmatpush1.msra.mxu0 0.0
    %2888 = vmatprep.subr.mxu0 0.0
    %2889 = vmatpush1.msra.mxu0 0.0
    %2890 = vmatprep.subr.mxu0 0.0
    %2891 = vmatpush1.msra.mxu0 0.0
    %2892 = vmatprep.subr.mxu0 0.0
    %2893 = vmatpush1.msra.mxu0 0.0
    %2894 = vmatprep.subr.mxu0 0.0
    %2895 = vmatpush1.msra.mxu0 0.0
    %2896 = vmatprep.subr.mxu0 0.0
    %2897 = vmatpush1.msra.mxu0 0.0
    %2898 = vmatprep.subr.mxu0 0.0
    %2899 = vmatpush1.msra.mxu0 0.0
    %2900 = vmatprep.subr.mxu0 0.0
    %2901 = vmatpush1.msra.mxu0 0.0
    %2902 = vmatprep.subr.mxu0 0.0
    %2903 = vmatpush1.msra.mxu0 0.0
    %2904 = vmatprep.subr.mxu0 0.0
    %2905 = vmatpush1.msra.mxu0 0.0
    %2906 = vmatprep.subr.mxu0 0.0
    %2907 = vmatpush1.msra.mxu0 0.0
    %2908 = vmatprep.subr.mxu0 0.0
    %2909 = vmatpush1.msra.mxu0 0.0
    %2910 = vmatprep.subr.mxu0 0.0
    %2911 = vmatpush1.msra.mxu0 0.0
    %2912 = vmatprep.subr.mxu0 0.0
    %2913 = vmatpush1.msra.mxu0 0.0
    %2914 = vmatprep.subr.mxu0 0.0
    %2915 = vmatpush1.msra.mxu0 0.0
    %2916 = vmatprep.subr.mxu0 0.0
    %2917 = vmatpush1.msra.mxu0 0.0
    %2918 = vmatprep.subr.mxu0 0.0
    %2919 = vmatpush1.msra.mxu0 0.0
    %2920 = vmatprep.subr.mxu0 0.0
    %2921 = vmatpush1.msra.mxu0 0.0
    %2922 = vmatprep.subr.mxu0 0.0
    %2923 = vmatpush1.msra.mxu0 0.0
    %2924 = vmatprep.subr.mxu0 0.0
    %2925 = vmatpush1.msra.mxu0 0.0
    %2926 = vmatprep.subr.mxu0 0.0
    %2927 = vmatpush1.msra.mxu0 0.0
    %2928 = vmatprep.subr.mxu0 0.0
    %2929 = vmatpush1.msra.mxu0 0.0
    %2930 = vmatprep.subr.mxu0 0.0
    %2931 = vmatpush1.msra.mxu0 0.0
    %2932 = vmatprep.subr.mxu0 0.0
    %2933 = vmatpush1.msra.mxu0 0.0
    %2934 = vmatprep.subr.mxu0 0.0
    %2935 = vmatpush1.msra.mxu0 0.0
    %2936 = vmatprep.mubr.f32.mxu0 0.0
    %2937 = vmatmul.mubr.f32.gmra.mrb[0].mxu0 %v2870
    %v2938 = vpop.f32.mrb[0].mxu0
    %v2939 = vadd.f32 0.0, %v2938
    %v2940 = vpop.f32.mrb[0].mxu0
    %2941 = vdwg.mxu0
    %v2942 = vcombine.low %v2428, %v2574
    %v2943 = vcombine.high %v2428, %v2574
    %v2945 = vunpack.c.l.s4 1983009808
    %v2946 = vunpack.c.0.s8 %v2945
    %v2947 = vlaneseq
    %v2948 = vshrl.u32 %v2947, 7
    %v2949 = vsub.s32 %v2946, %v2948
    %v2950 = vrot.slane %v2942, %v2949
    %v2952 = vunpack.c.l.s4 1983009808
    %v2953 = vunpack.c.0.s8 %v2952
    %v2954 = vlaneseq
    %v2955 = vshrl.u32 %v2954, 7
    %v2956 = vsub.s32 %v2953, %v2955
    %v2957 = vrot.slane %v2943, %v2956
    %v2958 = vcombine.low %v2501, %v2647
    %v2959 = vcombine.high %v2501, %v2647
    %v2961 = vunpack.c.l.s4 1983009808
    %v2962 = vunpack.c.0.s8 %v2961
    %v2963 = vlaneseq
    %v2964 = vshrl.u32 %v2963, 7
    %v2965 = vsub.s32 %v2962, %v2964
    %v2966 = vrot.slane %v2958, %v2965
    %v2968 = vunpack.c.l.s4 1983009808
    %v2969 = vunpack.c.0.s8 %v2968
    %v2970 = vlaneseq
    %v2971 = vshrl.u32 %v2970, 7
    %v2972 = vsub.s32 %v2969, %v2971
    %v2973 = vrot.slane %v2959, %v2972
    %v2974 = vcombine.low %v2720, %v2866
    %v2975 = vcombine.high %v2720, %v2866
    %v2977 = vunpack.c.l.s4 1983009808
    %v2978 = vunpack.c.0.s8 %v2977
    %v2979 = vlaneseq
    %v2980 = vshrl.u32 %v2979, 7
    %v2981 = vsub.s32 %v2978, %v2980
    %v2982 = vrot.slane %v2974, %v2981
    %v2984 = vunpack.c.l.s4 1983009808
    %v2985 = vunpack.c.0.s8 %v2984
    %v2986 = vlaneseq
    %v2987 = vshrl.u32 %v2986, 7
    %v2988 = vsub.s32 %v2985, %v2987
    %v2989 = vrot.slane %v2975, %v2988
    %v2990 = vcombine.low %v2793, %v2939
    %v2991 = vcombine.high %v2793, %v2939
    %v2993 = vunpack.c.l.s4 1983009808
    %v2994 = vunpack.c.0.s8 %v2993
    %v2995 = vlaneseq
    %v2996 = vshrl.u32 %v2995, 7
    %v2997 = vsub.s32 %v2994, %v2996
    %v2998 = vrot.slane %v2990, %v2997
    %v3000 = vunpack.c.l.s4 1983009808
    %v3001 = vunpack.c.0.s8 %v3000
    %v3002 = vlaneseq
    %v3003 = vshrl.u32 %v3002, 7
    %v3004 = vsub.s32 %v3001, %v3003
    %v3005 = vrot.slane %v2991, %v3004
    %v3006 = vcombine.low %v2950, %v2966
    %v3007 = vcombine.high %v2950, %v2966
    %v3009 = vunpack.c.l.s4 1934713408
    %v3010 = vunpack.c.0.s8 %v3009
    %v3011 = vlaneseq
    %v3012 = vshrl.u32 %v3011, 7
    %v3013 = vsub.s32 %v3010, %v3012
    %v3014 = vrot.slane %v3006, %v3013
    %v3016 = vunpack.c.l.s4 1934713408
    %v3017 = vunpack.c.0.s8 %v3016
    %v3018 = vlaneseq
    %v3019 = vshrl.u32 %v3018, 7
    %v3020 = vsub.s32 %v3017, %v3019
    %v3021 = vrot.slane %v3007, %v3020
    %v3022 = vcombine.low %v2957, %v2973
    %v3023 = vcombine.high %v2957, %v2973
    %v3025 = vunpack.c.l.s4 1934713408
    %v3026 = vunpack.c.0.s8 %v3025
    %v3027 = vlaneseq
    %v3028 = vshrl.u32 %v3027, 7
    %v3029 = vsub.s32 %v3026, %v3028
    %v3030 = vrot.slane %v3022, %v3029
    %v3032 = vunpack.c.l.s4 1934713408
    %v3033 = vunpack.c.0.s8 %v3032
    %v3034 = vlaneseq
    %v3035 = vshrl.u32 %v3034, 7
    %v3036 = vsub.s32 %v3033, %v3035
    %v3037 = vrot.slane %v3023, %v3036
    %v3038 = vcombine.low %v2982, %v2998
    %v3039 = vcombine.high %v2982, %v2998
    %v3041 = vunpack.c.l.s4 1934713408
    %v3042 = vunpack.c.0.s8 %v3041
    %v3043 = vlaneseq
    %v3044 = vshrl.u32 %v3043, 7
    %v3045 = vsub.s32 %v3042, %v3044
    %v3046 = vrot.slane %v3038, %v3045
    %v3048 = vunpack.c.l.s4 1934713408
    %v3049 = vunpack.c.0.s8 %v3048
    %v3050 = vlaneseq
    %v3051 = vshrl.u32 %v3050, 7
    %v3052 = vsub.s32 %v3049, %v3051
    %v3053 = vrot.slane %v3039, %v3052
    %v3054 = vcombine.low %v2989, %v3005
    %v3055 = vcombine.high %v2989, %v3005
    %v3057 = vunpack.c.l.s4 1934713408
    %v3058 = vunpack.c.0.s8 %v3057
    %v3059 = vlaneseq
    %v3060 = vshrl.u32 %v3059, 7
    %v3061 = vsub.s32 %v3058, %v3060
    %v3062 = vrot.slane %v3054, %v3061
    %v3064 = vunpack.c.l.s4 1934713408
    %v3065 = vunpack.c.0.s8 %v3064
    %v3066 = vlaneseq
    %v3067 = vshrl.u32 %v3066, 7
    %v3068 = vsub.s32 %v3065, %v3067
    %v3069 = vrot.slane %v3055, %v3068
    %v3070 = vcombine.low %v3014, %v3046
    %v3071 = vcombine.high %v3014, %v3046
    %v3072 = vcombine.low %v3021, %v3053
    %v3073 = vcombine.high %v3021, %v3053
    %v3074 = vcombine.low %v3030, %v3062
    %v3075 = vcombine.high %v3030, %v3062
    %v3076 = vcombine.low %v3037, %v3069
    %v3077 = vcombine.high %v3037, %v3069
    %3079 = vrot.lane.b32.xlu0 %v3071, 16
    %v3080 = vpop.permute.xlu0 %3079
    %3083 = vrot.lane.b32.xlu0 %v3072, 32
    %v3084 = vpop.permute.xlu0 %3083
    %3087 = vrot.lane.b32.xlu0 %v3073, 48
    %v3088 = vpop.permute.xlu0 %3087
    %3091 = vrot.lane.b32.xlu0 %v3074, 64
    %v3092 = vpop.permute.xlu0 %3091
    %3095 = vrot.lane.b32.xlu0 %v3075, 80
    %v3096 = vpop.permute.xlu0 %3095
    %3099 = vrot.lane.b32.xlu0 %v3076, 96
    %v3100 = vpop.permute.xlu0 %3099
    %3103 = vrot.lane.b32.xlu0 %v3077, 112
    %v3104 = vpop.permute.xlu0 %3103
    %v3106 = vsel %vm1581, %v3070, %v3080
    %vm3107 = vcmask 261120
    %v3108 = vsel %vm3107, %v3106, %v3084
    %vm3109 = vcmask 392192
    %v3110 = vsel %vm3109, %v3108, %v3088
    %vm3111 = vcmask 523264
    %v3112 = vsel %vm3111, %v3110, %v3092
    %vm3113 = vcmask 654336
    %v3114 = vsel %vm3113, %v3112, %v3096
    %vm3115 = vcmask 785408
    %v3116 = vsel %vm3115, %v3114, %v3100
    %vm3117 = vcmask 916480
    %v3118 = vsel %vm3117, %v3116, %v3104
    %v3119 = vld [vmem:[#allocation14] sm:$0xff]
    %v3120 = vld [vmem:[#allocation14 + $0x8] sm:$0xff]
    %v3121 = vld [vmem:[#allocation14 + $0x10] sm:$0xff]
    %v3122 = vld [vmem:[#allocation14 + $0x18] sm:$0xff]
    %v3123 = vld [vmem:[#allocation14 + $0x20] sm:$0xff]
    %v3124 = vld [vmem:[#allocation14 + $0x28] sm:$0xff]
    %v3125 = vld [vmem:[#allocation14 + $0x30] sm:$0xff]
    %v3126 = vld [vmem:[#allocation14 + $0x38] sm:$0xff]
    %v3127 = vld [vmem:[#allocation14 + $0x40] sm:$0xff]
    %v3128 = vld [vmem:[#allocation14 + $0x48] sm:$0xff]
    %v3129 = vld [vmem:[#allocation14 + $0x50] sm:$0xff]
    %v3130 = vld [vmem:[#allocation14 + $0x58] sm:$0xff]
    %v3131 = vld [vmem:[#allocation14 + $0x60] sm:$0xff]
    %v3132 = vld [vmem:[#allocation14 + $0x68] sm:$0xff]
    %v3133 = vld [vmem:[#allocation14 + $0x70] sm:$0xff]
    %v3134 = vld [vmem:[#allocation14 + $0x78] sm:$0xff]
    %v3135 = vld [vmem:[%s9] sm:$0x1]
    %v3137 = vlaneseq
    %v3138 = vshrl.u32 %v3137, 7
    %v3139 = vsub.s32 0, %v3138
    %v3140 = vrot.slane %v3135, %v3139
    %3142 = vmatprep.subr.mxu0 0.0
    %3143 = vmatpush1.msra.mxu0 %v3119
    %3144 = vmatprep.subr.mxu0 0.0
    %3145 = vmatpush1.msra.mxu0 %v3120
    %3146 = vmatprep.subr.mxu0 0.0
    %3147 = vmatpush1.msra.mxu0 %v3121
    %3148 = vmatprep.subr.mxu0 0.0
    %3149 = vmatpush1.msra.mxu0 %v3122
    %3150 = vmatprep.subr.mxu0 0.0
    %3151 = vmatpush1.msra.mxu0 %v3123
    %3152 = vmatprep.subr.mxu0 0.0
    %3153 = vmatpush1.msra.mxu0 %v3124
    %3154 = vmatprep.subr.mxu0 0.0
    %3155 = vmatpush1.msra.mxu0 %v3125
    %3156 = vmatprep.subr.mxu0 0.0
    %3157 = vmatpush1.msra.mxu0 %v3126
    %3158 = vmatprep.subr.mxu0 0.0
    %3159 = vmatpush1.msra.mxu0 %v3127
    %3160 = vmatprep.subr.mxu0 0.0
    %3161 = vmatpush1.msra.mxu0 %v3128
    %3162 = vmatprep.subr.mxu0 0.0
    %3163 = vmatpush1.msra.mxu0 %v3129
    %3164 = vmatprep.subr.mxu0 0.0
    %3165 = vmatpush1.msra.mxu0 %v3130
    %3166 = vmatprep.subr.mxu0 0.0
    %3167 = vmatpush1.msra.mxu0 %v3131
    %3168 = vmatprep.subr.mxu0 0.0
    %3169 = vmatpush1.msra.mxu0 %v3132
    %3170 = vmatprep.subr.mxu0 0.0
    %3171 = vmatpush1.msra.mxu0 %v3133
    %3172 = vmatprep.subr.mxu0 0.0
    %3173 = vmatpush1.msra.mxu0 %v3134
    %3174 = vmatprep.subr.mxu0 0.0
    %3175 = vmatpush1.msra.mxu0 0.0
    %3176 = vmatprep.subr.mxu0 0.0
    %3177 = vmatpush1.msra.mxu0 0.0
    %3178 = vmatprep.subr.mxu0 0.0
    %3179 = vmatpush1.msra.mxu0 0.0
    %3180 = vmatprep.subr.mxu0 0.0
    %3181 = vmatpush1.msra.mxu0 0.0
    %3182 = vmatprep.subr.mxu0 0.0
    %3183 = vmatpush1.msra.mxu0 0.0
    %3184 = vmatprep.subr.mxu0 0.0
    %3185 = vmatpush1.msra.mxu0 0.0
    %3186 = vmatprep.subr.mxu0 0.0
    %3187 = vmatpush1.msra.mxu0 0.0
    %3188 = vmatprep.subr.mxu0 0.0
    %3189 = vmatpush1.msra.mxu0 0.0
    %3190 = vmatprep.subr.mxu0 0.0
    %3191 = vmatpush1.msra.mxu0 0.0
    %3192 = vmatprep.subr.mxu0 0.0
    %3193 = vmatpush1.msra.mxu0 0.0
    %3194 = vmatprep.subr.mxu0 0.0
    %3195 = vmatpush1.msra.mxu0 0.0
    %3196 = vmatprep.subr.mxu0 0.0
    %3197 = vmatpush1.msra.mxu0 0.0
    %3198 = vmatprep.subr.mxu0 0.0
    %3199 = vmatpush1.msra.mxu0 0.0
    %3200 = vmatprep.subr.mxu0 0.0
    %3201 = vmatpush1.msra.mxu0 0.0
    %3202 = vmatprep.subr.mxu0 0.0
    %3203 = vmatpush1.msra.mxu0 0.0
    %3204 = vmatprep.subr.mxu0 0.0
    %3205 = vmatpush1.msra.mxu0 0.0
    %3206 = vmatprep.mubr.f32.mxu0 0.0
    %3207 = vmatmul.mubr.f32.gmra.mrb[0].mxu0 %v3118
    %v3208 = vpop.f32.mrb[0].mxu0
    %v3209 = vadd.f32 %v3140, %v3208
    %v3210 = vpop.f32.mrb[0].mxu0
    %3211 = vdwg.mxu0
    %v3212 = vld [vmem:[#allocation7] sm:$0xff]
    %v3213 = vmul.f32 %v3209, %v3212
    %v3214 = vmax.f32 %v3213, 0.0
    %v3215 = vld [vmem:[#allocation16] sm:$0xff]
    %v3216 = vld [vmem:[#allocation16 + $0x8] sm:$0xff]
    %v3217 = vld [vmem:[#allocation16 + $0x10] sm:$0xff]
    %v3218 = vld [vmem:[#allocation16 + $0x18] sm:$0xff]
    %v3219 = vld [vmem:[#allocation16 + $0x20] sm:$0xff]
    %v3220 = vld [vmem:[#allocation16 + $0x28] sm:$0xff]
    %v3221 = vld [vmem:[#allocation16 + $0x30] sm:$0xff]
    %v3222 = vld [vmem:[#allocation16 + $0x38] sm:$0xff]
    %v3223 = vld [vmem:[#allocation16 + $0x40] sm:$0xff]
    %v3224 = vld [vmem:[#allocation16 + $0x48] sm:$0xff]
    %v3225 = vld [vmem:[#allocation16 + $0x50] sm:$0xff]
    %v3226 = vld [vmem:[#allocation16 + $0x58] sm:$0xff]
    %v3227 = vld [vmem:[#allocation16 + $0x60] sm:$0xff]
    %v3228 = vld [vmem:[#allocation16 + $0x68] sm:$0xff]
    %v3229 = vld [vmem:[#allocation16 + $0x70] sm:$0xff]
    %v3230 = vld [vmem:[#allocation16 + $0x78] sm:$0xff]
    %v3231 = vld [vmem:[%s11] sm:$0x1]
    %v3233 = vlaneseq
    %v3234 = vshrl.u32 %v3233, 7
    %v3235 = vsub.s32 0, %v3234
    %v3236 = vrot.slane %v3231, %v3235
    %3238 = vmatprep.subr.mxu0 0.0
    %3239 = vmatpush1.msra.mxu0 %v3215
    %3240 = vmatprep.subr.mxu0 0.0
    %3241 = vmatpush1.msra.mxu0 %v3216
    %3242 = vmatprep.subr.mxu0 0.0
    %3243 = vmatpush1.msra.mxu0 %v3217
    %3244 = vmatprep.subr.mxu0 0.0
    %3245 = vmatpush1.msra.mxu0 %v3218
    %3246 = vmatprep.subr.mxu0 0.0
    %3247 = vmatpush1.msra.mxu0 %v3219
    %3248 = vmatprep.subr.mxu0 0.0
    %3249 = vmatpush1.msra.mxu0 %v3220
    %3250 = vmatprep.subr.mxu0 0.0
    %3251 = vmatpush1.msra.mxu0 %v3221
    %3252 = vmatprep.subr.mxu0 0.0
    %3253 = vmatpush1.msra.mxu0 %v3222
    %3254 = vmatprep.subr.mxu0 0.0
    %3255 = vmatpush1.msra.mxu0 %v3223
    %3256 = vmatprep.subr.mxu0 0.0
    %3257 = vmatpush1.msra.mxu0 %v3224
    %3258 = vmatprep.subr.mxu0 0.0
    %3259 = vmatpush1.msra.mxu0 %v3225
    %3260 = vmatprep.subr.mxu0 0.0
    %3261 = vmatpush1.msra.mxu0 %v3226
    %3262 = vmatprep.subr.mxu0 0.0
    %3263 = vmatpush1.msra.mxu0 %v3227
    %3264 = vmatprep.subr.mxu0 0.0
    %3265 = vmatpush1.msra.mxu0 %v3228
    %3266 = vmatprep.subr.mxu0 0.0
    %3267 = vmatpush1.msra.mxu0 %v3229
    %3268 = vmatprep.subr.mxu0 0.0
    %3269 = vmatpush1.msra.mxu0 %v3230
    %3270 = vmatprep.subr.mxu0 0.0
    %3271 = vmatpush1.msra.mxu0 0.0
    %3272 = vmatprep.subr.mxu0 0.0
    %3273 = vmatpush1.msra.mxu0 0.0
    %3274 = vmatprep.subr.mxu0 0.0
    %3275 = vmatpush1.msra.mxu0 0.0
    %3276 = vmatprep.subr.mxu0 0.0
    %3277 = vmatpush1.msra.mxu0 0.0
    %3278 = vmatprep.subr.mxu0 0.0
    %3279 = vmatpush1.msra.mxu0 0.0
    %3280 = vmatprep.subr.mxu0 0.0
    %3281 = vmatpush1.msra.mxu0 0.0
    %3282 = vmatprep.subr.mxu0 0.0
    %3283 = vmatpush1.msra.mxu0 0.0
    %3284 = vmatprep.subr.mxu0 0.0
    %3285 = vmatpush1.msra.mxu0 0.0
    %3286 = vmatprep.subr.mxu0 0.0
    %3287 = vmatpush1.msra.mxu0 0.0
    %3288 = vmatprep.subr.mxu0 0.0
    %3289 = vmatpush1.msra.mxu0 0.0
    %3290 = vmatprep.subr.mxu0 0.0
    %3291 = vmatpush1.msra.mxu0 0.0
    %3292 = vmatprep.subr.mxu0 0.0
    %3293 = vmatpush1.msra.mxu0 0.0
    %3294 = vmatprep.subr.mxu0 0.0
    %3295 = vmatpush1.msra.mxu0 0.0
    %3296 = vmatprep.subr.mxu0 0.0
    %3297 = vmatpush1.msra.mxu0 0.0
    %3298 = vmatprep.subr.mxu0 0.0
    %3299 = vmatpush1.msra.mxu0 0.0
    %3300 = vmatprep.subr.mxu0 0.0
    %3301 = vmatpush1.msra.mxu0 0.0
    %3302 = vmatprep.mubr.f32.mxu0 0.0
    %3303 = vmatmul.mubr.f32.gmra.mrb[0].mxu0 %v3214
    %v3304 = vpop.f32.mrb[0].mxu0
    %v3305 = vadd.f32 %v3236, %v3304
    %v3306 = vpop.f32.mrb[0].mxu0
    %3307 = vdwg.mxu0
    %v3308 = vmax.f32 %v3305, 0.0
    %3309 = vst [vmem:[#allocation17] sm:$0xff] %v3308
    // Predicated region
    $region86: #{tpu_custom_call.1} parent=1 // pred_check
      _
    $region87: #{tpu_custom_call.1} parent=1 // pred_check_branch
      %3311 = sbr.rel (0) target = $region89
    $region88: #{tpu_custom_call.1} parent=1 // pred_region
      %s3313 = ssub.s32 128, 128
      %3314 = vsyncadd [#allocation4], %s3313
      %s3316 = sshll.u32 [#allocation17], 4
      %s3317 = int_to_ptr.vmem [resolvable:$true] %s3316
      %3319 = dma.vmem_to_hbm [thread:$0]  %s3317, 128, %s12, [#allocation4]
    $region89: #{tpu_custom_call.1} parent=1 // pred_fallthru
      _
    // Predicated region
    $region90: #{tpu_custom_call.1} parent=1 // pred_check
      _
    $region91: #{tpu_custom_call.1} parent=1 // pred_check_branch
      %3321 = sbr.rel (0) target = $region93
    $region92: #{tpu_custom_call.1} parent=1 // pred_region
      %3322 = dma.done [#allocation4], 128
    $region93: #{tpu_custom_call.1} parent=1 // pred_fallthru
      _
    %3323 = vsyncpa [#allocation3], 1
    %3324 = vsyncpa [#allocation6], 1
    %3325 = vsyncpa [#allocation9], 1
    %3326 = vsyncpa [#allocation12], 1
    %3327 = vsyncpa [#allocation15], 1
    %3328 = vsyncpa [#allocation4], 1

</llo_original>
